<compile_context>
chip_gen: v7x
topology: tpu7x:2x2x1
jax: 0.10.0
libtpu: 0.0.40
codegen_flags: <defaults>
</compile_context>

<pallas_src>
import functools

import jax
import jax.numpy as jnp
from jax.experimental import pallas as pl
from jax.experimental.pallas import tpu as pltpu

NUM_CLASSES = 5      # CFG.num_classes
BN_EPS = 1e-5

# Tiny-DenseNet hyper-params (structure-faithful, scaled for small test shapes)
IN_CH = 3
NUM_INIT = 8
GROWTH = 4
BN_SIZE = 2
N_LAYERS = 2

CP = 128             # channel pad (lane width) for every activation / weight slab
CLS_PAD = 128        # padded classifier output width (sliced back to NUM_CLASSES)
K_STEM = 128         # stem im2col reduction width (9 * IN_CH = 27 real, zero padded)

assert CP == CLS_PAD  # head_vecs stacks CP-wide and CLS_PAD-wide rows together


# ------------------------------ fused kernel -------------------------------

def _fused_forward_kernel(cols_ref, stem_w_ref, stem_shift_ref, layer_vecs_ref,
                          w1_ref, w2_ref, head_vecs_ref, cls_w_ref, o_ref,
                          feats_ref, ypad_ref, *, h, w):
    """Whole CustomDenseNet forward for one image (one grid step).

    cols_ref      (1, h*w, K_STEM) bf16   stem im2col columns (27 real K, zero padded)
    stem_w_ref    (K_STEM, CP)     bf16   stem conv weight, BN scale folded into columns
    stem_shift_ref(1, CP)          f32    stem BN shift
    layer_vecs_ref(L, 3, CP)       f32    per layer [bn1 scale, bn1 shift, bn2 shift]
    w1_ref        (L, CP, CP)      bf16   1x1 conv weights (BN2 scale folded)
    w2_ref        (L, 9*CP, CP)    bf16   3x3 conv weights, tap-major, columns placed at
                                          the layer's channel offset (in-slab concat)
    head_vecs_ref (3, CP)          f32    [final BN scale, final BN shift, cls bias]
    cls_w_ref     (CP, CLS_PAD)    bf16   classifier weight (transposed, padded)
    o_ref         (1, 1, CLS_PAD)  f32    padded logits
    feats_ref     (hw, CP)         f32    VMEM scratch: running feature slab
    ypad_ref      (ho+2, wo+2, CP) f32    VMEM scratch: zero-halo buffer for 3x3 conv
    """
    ho, wo = h // 2, w // 2
    hw = ho * wo

    # ---- stem: conv3x3 (one K=128 dot) + BN shift + ReLU + 2x2 max-pool -----------
    acc = jnp.dot(cols_ref[0], stem_w_ref[...],
                  preferred_element_type=jnp.float32)               # (h*w, CP) f32
    y = jnp.maximum(acc + stem_shift_ref[...], 0.0)
    y = y.reshape(ho, 2, wo, 2, CP)
    y = jnp.max(y, axis=3)
    y = jnp.max(y, axis=1)                                          # (ho, wo, CP)
    feats_ref[...] = y.reshape(hw, CP)

    # Zero the padded conv buffer once per image; the halo stays zero, the interior is
    # fully overwritten every layer.
    ypad_ref[...] = jnp.zeros_like(ypad_ref)

    # ---- dense block: each layer fully in VMEM ------------------------------------
    for l in range(N_LAYERS):
        vecs = layer_vecs_ref[l]                                    # (3, CP)
        # BN1 + ReLU prologue -> 1x1 conv (BN2 scale folded) -> +shift -> ReLU
        x = jnp.maximum(feats_ref[...] * vecs[0:1, :] + vecs[1:2, :], 0.0)
        y1 = jnp.dot(x.astype(jnp.bfloat16), w1_ref[l],
                     preferred_element_type=jnp.float32)
        y1 = jnp.maximum(y1 + vecs[2:3, :], 0.0)                    # (hw, CP)

        # write interior of the zero-halo buffer, then 3x3 conv by per-tap MXU dots
        ypad_ref[1:1 + ho, 1:1 + wo, :] = y1.reshape(ho, wo, CP)
        acc = jnp.zeros((hw, CP), jnp.float32)
        for i in range(3):
            for j in range(3):
                patch = ypad_ref[i:i + ho, j:j + wo, :].reshape(hw, CP)
                tap = w2_ref[l, (i * 3 + j) * CP:(i * 3 + j + 1) * CP, :]
                acc = acc + jnp.dot(patch.astype(jnp.bfloat16), tap,
                                    preferred_element_type=jnp.float32)
        # in-slab DenseNet concat: this layer's output columns already sit at its
        # channel offset, so a plain add appends the new channels.
        feats_ref[...] = feats_ref[...] + acc

    # ---- head: final BN + ReLU -> GAP -> Linear(in_features, 5) -------------------
    hv = head_vecs_ref[...]                                         # (3, CP)
    yf = jnp.maximum(feats_ref[...] * hv[0:1, :] + hv[1:2, :], 0.0)
    pooled = jnp.sum(yf, axis=0, keepdims=True) * (1.0 / hw)        # GAP first (linear head)
    logits = jnp.dot(pooled.astype(jnp.bfloat16), cls_w_ref[...],
                     preferred_element_type=jnp.float32) + hv[2:3, :]
    o_ref[0] = logits


def _fused_call(cols, fp, n, h, w):
    ho, wo = h // 2, w // 2
    kernel = functools.partial(_fused_forward_kernel, h=h, w=w)
    return pl.pallas_call(
        kernel,
        out_shape=jax.ShapeDtypeStruct((n, 1, CLS_PAD), jnp.float32),
        grid=(n,),
        in_specs=[
            pl.BlockSpec((1, h * w, K_STEM), lambda b: (b, 0, 0)),
            pl.BlockSpec((K_STEM, CP), lambda b: (0, 0)),
            pl.BlockSpec((1, CP), lambda b: (0, 0)),
            pl.BlockSpec((N_LAYERS, 3, CP), lambda b: (0, 0, 0)),
            pl.BlockSpec((N_LAYERS, CP, CP), lambda b: (0, 0, 0)),
            pl.BlockSpec((N_LAYERS, 9 * CP, CP), lambda b: (0, 0, 0)),
            pl.BlockSpec((3, CP), lambda b: (0, 0)),
            pl.BlockSpec((CP, CLS_PAD), lambda b: (0, 0)),
        ],
        out_specs=pl.BlockSpec((1, 1, CLS_PAD), lambda b: (b, 0, 0)),
        scratch_shapes=[
            pltpu.VMEM((ho * wo, CP), jnp.float32),          # feats slab
            pltpu.VMEM((ho + 2, wo + 2, CP), jnp.float32),   # zero-halo conv buffer
        ],
        compiler_params=pltpu.CompilerParams(
            dimension_semantics=("parallel",),               # batch -> megacore / v7x TCs
            vmem_limit_bytes=32 * 1024 * 1024,
        ),
    )(cols, fp['stem_w'], fp['stem_shift'], fp['layer_vecs'],
      fp['w1_all'], fp['w2_all'], fp['head_vecs'], fp['cls_w'])


# ------------------------------- parameters --------------------------------

def init_params(key):
    keys = iter(jax.random.split(key, 64))

    def nrm(shape, scale=0.1):
        return (scale * jax.random.normal(next(keys), shape)).astype(jnp.float32)

    p = {
        'stem_conv': nrm((NUM_INIT, IN_CH, 3, 3)),
        'stem_bn_g': 1.0 + nrm((NUM_INIT,)),
        'stem_bn_b': nrm((NUM_INIT,)),
        'layers': [],
    }
    ch = NUM_INIT
    for _ in range(N_LAYERS):
        inter = BN_SIZE * GROWTH
        p['layers'].append({
            'bn1_g': 1.0 + nrm((ch,)), 'bn1_b': nrm((ch,)),
            'conv1': nrm((inter, ch, 1, 1)),
            'bn2_g': 1.0 + nrm((inter,)), 'bn2_b': nrm((inter,)),
            'conv2': nrm((GROWTH, inter, 3, 3)),
        })
        ch += GROWTH
    p['final_bn_g'] = 1.0 + nrm((ch,))
    p['final_bn_b'] = nrm((ch,))
    p['cls_w'] = nrm((NUM_CLASSES, ch))   # self.model.classifier = nn.Linear(in_features, 5)
    p['cls_b'] = nrm((NUM_CLASSES,))
    return p


def _pad_vec(v, width):
    out = jnp.zeros((width,), jnp.float32)
    return out.at[:v.shape[0]].set(v.astype(jnp.float32))


def _fold_stem_weight(w_oihw, post_scale):
    """(Cout,Cin,3,3) -> (K_STEM, CP) bf16, rows ordered (kh, kw, cin) to match the
    wrapper im2col, BN scale folded into the columns."""
    co, ci, kh, kw = w_oihw.shape
    wt = jnp.transpose(w_oihw, (2, 3, 1, 0)).astype(jnp.float32)     # (kh, kw, ci, co)
    wt = wt * post_scale.reshape(1, 1, 1, co).astype(jnp.float32)
    wt = wt.reshape(kh * kw * ci, co)                                # (27, co)
    out = jnp.zeros((K_STEM, CP), jnp.float32)
    out = out.at[:kh * kw * ci, :co].set(wt)
    return out.astype(jnp.bfloat16)


def _fold_conv_weight(w_oihw, post_scale=None, out_offset=0):
    """(Cout,Cin,kh,kw) -> tap-major (kh*kw*CP, CP) bf16, per-tap input channels padded
    to CP, optional BN scale folded into the columns, output columns placed at
    `out_offset` (in-slab DenseNet channel growth)."""
    co, ci, kh, kw = w_oihw.shape
    wt = jnp.transpose(w_oihw, (2, 3, 1, 0)).astype(jnp.float32)     # (kh, kw, ci, co)
    if post_scale is not None:
        wt = wt * post_scale.reshape(1, 1, 1, co).astype(jnp.float32)
    wp = jnp.zeros((kh, kw, CP, CP), jnp.float32)
    wp = wp.at[:, :, :ci, out_offset:out_offset + co].set(wt)
    return wp.reshape(kh * kw * CP, CP).astype(jnp.bfloat16)


def fold_params(p):
    """One-time fuse/pad of parameters into kernel-ready slabs (done outside jit)."""
    inv = 1.0 / jnp.sqrt(1.0 + BN_EPS)   # eval-mode BN: running_mean=0, running_var=1
    fp = {
        'stem_w': _fold_stem_weight(p['stem_conv'], p['stem_bn_g'] * inv),
        'stem_shift': _pad_vec(p['stem_bn_b'], CP).reshape(1, CP),
    }
    layer_vecs, w1_all, w2_all = [], [], []
    ch = NUM_INIT
    for lp in p['layers']:
        layer_vecs.append(jnp.stack([
            _pad_vec(lp['bn1_g'] * inv, CP),     # BN1 scale
            _pad_vec(lp['bn1_b'], CP),           # BN1 shift
            _pad_vec(lp['bn2_b'], CP),           # BN2 shift (scale folded into w1)
        ]))
        w1_all.append(_fold_conv_weight(lp['conv1'], post_scale=lp['bn2_g'] * inv))
        w2_all.append(_fold_conv_weight(lp['conv2'], out_offset=ch))
        ch += lp['conv2'].shape[0]
    fp['layer_vecs'] = jnp.stack(layer_vecs)      # (L, 3, CP)
    fp['w1_all'] = jnp.stack(w1_all)              # (L, CP, CP) bf16
    fp['w2_all'] = jnp.stack(w2_all)              # (L, 9*CP, CP) bf16
    fp['head_vecs'] = jnp.stack([
        _pad_vec(p['final_bn_g'] * inv, CP),
        _pad_vec(p['final_bn_b'], CP),
        _pad_vec(p['cls_b'], CLS_PAD),
    ])                                            # (3, CP)
    wc = jnp.zeros((CP, CLS_PAD), jnp.float32)
    wc = wc.at[:ch, :NUM_CLASSES].set(jnp.transpose(p['cls_w']).astype(jnp.float32))
    fp['cls_w'] = wc.astype(jnp.bfloat16)
    return fp


# -------------------------------- forward ----------------------------------

def custom_densenet_forward(fp, x_nchw):
    n, _, h, w = x_nchw.shape
    # Stem im2col in the wrapper: only the 27 real reduction elements are built in HBM
    # (padded to K=128, stored bf16) — no 128-channel image pad, no per-tap zero dots.
    x = jnp.transpose(x_nchw, (0, 2, 3, 1)).astype(jnp.float32)          # NCHW -> NHWC
    xp = jnp.pad(x, ((0, 0), (1, 1), (1, 1), (0, 0)))                     # spatial pad only
    taps = [xp[:, i:i + h, j:j + w, :] for i in range(3) for j in range(3)]
    cols = jnp.concatenate(taps, axis=-1).reshape(n, h * w, 9 * IN_CH)    # (n, h*w, 27)
    cols = jnp.pad(cols, ((0, 0), (0, 0), (0, K_STEM - 9 * IN_CH)))
    cols = cols.astype(jnp.bfloat16)

    logits = _fused_call(cols, fp, n, h, w)                               # (n, 1, CLS_PAD)
    return logits[:, 0, :NUM_CLASSES]


if __name__ == "__main__":
    key = jax.random.PRNGKey(0)
    k_x, k_p = jax.random.split(key)
    x = jax.random.normal(k_x, (2, IN_CH, 16, 16), dtype=jnp.float32)     # NCHW, like PyTorch
    params = init_params(k_p)
    folded = fold_params(params)

    logits = jax.jit(custom_densenet_forward)(folded, x)
    logits = jax.block_until_ready(logits)
    assert logits.shape == (2, NUM_CLASSES)
    assert logits.dtype == jnp.float32
    print("KERNEL_OK")
</pallas_src>

<mosaic_0001>
module attributes {stable_mosaic.version = 11 : i64} {
  func.func @_fused_forward_kernel(%arg0: i32, %arg1: memref<1x256x128xbf16, #tpu.memory_space<vmem>>, %arg2: memref<128x128xbf16, #tpu.memory_space<vmem>>, %arg3: memref<1x128xf32, #tpu.memory_space<vmem>>, %arg4: memref<2x3x128xf32, #tpu.memory_space<vmem>>, %arg5: memref<2x128x128xbf16, #tpu.memory_space<vmem>>, %arg6: memref<2x1152x128xbf16, #tpu.memory_space<vmem>>, %arg7: memref<3x128xf32, #tpu.memory_space<vmem>>, %arg8: memref<128x128xbf16, #tpu.memory_space<vmem>>, %arg9: memref<1x1x128xf32, #tpu.memory_space<vmem>>, %arg10: memref<64x128xf32, #tpu.memory_space<vmem>>, %arg11: memref<10x10x128xf32, #tpu.memory_space<vmem>>) attributes {dimension_semantics = [#tpu.dimension_semantics<parallel>], iteration_bounds = array<i64: 2>, scalar_prefetch = 0 : i64, scratch_operands = 2 : i64, tpu.core_type = #tpu.core_type<tc>, window_params = [{transform_indices = @transform_0, window_bounds = array<i64: 1, 256, 128>}, {pipeline_mode = #tpu.pipeline_mode<synchronous>, transform_indices = @transform_1, window_bounds = array<i64: 128, 128>}, {pipeline_mode = #tpu.pipeline_mode<synchronous>, transform_indices = @transform_2, window_bounds = array<i64: 1, 128>}, {pipeline_mode = #tpu.pipeline_mode<synchronous>, transform_indices = @transform_3, window_bounds = array<i64: 2, 3, 128>}, {pipeline_mode = #tpu.pipeline_mode<synchronous>, transform_indices = @transform_4, window_bounds = array<i64: 2, 128, 128>}, {pipeline_mode = #tpu.pipeline_mode<synchronous>, transform_indices = @transform_5, window_bounds = array<i64: 2, 1152, 128>}, {pipeline_mode = #tpu.pipeline_mode<synchronous>, transform_indices = @transform_6, window_bounds = array<i64: 3, 128>}, {pipeline_mode = #tpu.pipeline_mode<synchronous>, transform_indices = @transform_7, window_bounds = array<i64: 128, 128>}, {transform_indices = @transform_8, window_bounds = array<i64: 1, 1, 128>}]} {
    %c0 = arith.constant 0 : index
    %c0_0 = arith.constant 0 : index
    %c0_1 = arith.constant 0 : index
    %0 = vector.load %arg1[%c0, %c0_0, %c0_1] : memref<1x256x128xbf16, #tpu.memory_space<vmem>>, vector<1x256x128xbf16>
    %1 = vector.shape_cast %0 : vector<1x256x128xbf16> to vector<256x128xbf16>
    %c0_2 = arith.constant 0 : index
    %c0_3 = arith.constant 0 : index
    %2 = vector.load %arg2[%c0_2, %c0_3] : memref<128x128xbf16, #tpu.memory_space<vmem>>, vector<128x128xbf16>
    %cst = arith.constant dense<0.000000e+00> : vector<256x128xf32>
    %3 = tpu.matmul %1, %2, %cst {dimension_numbers = #tpu.dot_dimension_numbers<[1], [0], [0], [1], [0, 0, 1, 1], [], []>} : vector<256x128xbf16>, vector<128x128xbf16>, vector<256x128xf32> -> vector<256x128xf32>
    %c0_4 = arith.constant 0 : index
    %c0_5 = arith.constant 0 : index
    %4 = vector.load %arg3[%c0_4, %c0_5] : memref<1x128xf32, #tpu.memory_space<vmem>>, vector<1x128xf32>
    %5 = vector.broadcast %4 : vector<1x128xf32> to vector<256x128xf32>
    %6 = arith.addf %3, %5 : vector<256x128xf32>
    %cst_6 = arith.constant 0.000000e+00 : f32
    %7 = vector.broadcast %cst_6 : f32 to vector<256x128xf32>
    %8 = arith.maximumf %6, %7 : vector<256x128xf32>
    %9 = vector.shape_cast %8 : vector<256x128xf32> to vector<8x2x8x2x128xf32>
    %cst_7 = arith.constant dense<0xFF800000> : vector<8x2x8x128xf32>
    %10 = vector.multi_reduction <maximumf>, %9, %cst_7 [3] : vector<8x2x8x2x128xf32> to vector<8x2x8x128xf32>
    %cst_8 = arith.constant dense<0xFF800000> : vector<8x8x128xf32>
    %11 = vector.multi_reduction <maximumf>, %10, %cst_8 [1] : vector<8x2x8x128xf32> to vector<8x8x128xf32>
    %12 = vector.shape_cast %11 : vector<8x8x128xf32> to vector<64x128xf32>
    %c0_9 = arith.constant 0 : index
    %c0_10 = arith.constant 0 : index
    %13 = vector.load %arg10[%c0_9, %c0_10] : memref<64x128xf32, #tpu.memory_space<vmem>>, vector<64x128xf32>
    tpu.vector_store %arg10[%c0_9, %c0_10], %12 {strides = array<i32>} : memref<64x128xf32, #tpu.memory_space<vmem>>, vector<64x128xf32>,
    %cst_11 = arith.constant 0.000000e+00 : f32
    %14 = vector.broadcast %cst_11 : f32 to vector<10x10x128xf32>
    %c0_12 = arith.constant 0 : index
    %c0_13 = arith.constant 0 : index
    %c0_14 = arith.constant 0 : index
    %15 = vector.load %arg11[%c0_12, %c0_13, %c0_14] : memref<10x10x128xf32, #tpu.memory_space<vmem>>, vector<10x10x128xf32>
    tpu.vector_store %arg11[%c0_12, %c0_13, %c0_14], %14 {strides = array<i32>} : memref<10x10x128xf32, #tpu.memory_space<vmem>>, vector<10x10x128xf32>,
    %c0_15 = arith.constant 0 : index
    %c0_16 = arith.constant 0 : index
    %c0_17 = arith.constant 0 : index
    %16 = vector.load %arg4[%c0_15, %c0_16, %c0_17] : memref<2x3x128xf32, #tpu.memory_space<vmem>>, vector<1x3x128xf32>
    %17 = vector.shape_cast %16 : vector<1x3x128xf32> to vector<3x128xf32>
    %c0_18 = arith.constant 0 : index
    %c0_19 = arith.constant 0 : index
    %18 = vector.load %arg10[%c0_18, %c0_19] : memref<64x128xf32, #tpu.memory_space<vmem>>, vector<64x128xf32>
    %19 = vector.extract_strided_slice %17 {offsets = [0, 0], sizes = [1, 128], strides = [1, 1]} : vector<3x128xf32> to vector<1x128xf32>
    %20 = vector.broadcast %19 : vector<1x128xf32> to vector<64x128xf32>
    %21 = arith.mulf %18, %20 : vector<64x128xf32>
    %22 = vector.extract_strided_slice %17 {offsets = [1, 0], sizes = [1, 128], strides = [1, 1]} : vector<3x128xf32> to vector<1x128xf32>
    %23 = vector.broadcast %22 : vector<1x128xf32> to vector<64x128xf32>
    %24 = arith.addf %21, %23 : vector<64x128xf32>
    %cst_20 = arith.constant 0.000000e+00 : f32
    %25 = vector.broadcast %cst_20 : f32 to vector<64x128xf32>
    %26 = arith.maximumf %24, %25 : vector<64x128xf32>
    %27 = arith.truncf %26 : vector<64x128xf32> to vector<64x128xbf16>
    %c0_21 = arith.constant 0 : index
    %c0_22 = arith.constant 0 : index
    %c0_23 = arith.constant 0 : index
    %28 = vector.load %arg5[%c0_21, %c0_22, %c0_23] : memref<2x128x128xbf16, #tpu.memory_space<vmem>>, vector<1x128x128xbf16>
    %29 = vector.shape_cast %28 : vector<1x128x128xbf16> to vector<128x128xbf16>
    %cst_24 = arith.constant dense<0.000000e+00> : vector<64x128xf32>
    %30 = tpu.matmul %27, %29, %cst_24 {dimension_numbers = #tpu.dot_dimension_numbers<[1], [0], [0], [1], [0, 0, 1, 1], [], []>} : vector<64x128xbf16>, vector<128x128xbf16>, vector<64x128xf32> -> vector<64x128xf32>
    %31 = vector.extract_strided_slice %17 {offsets = [2, 0], sizes = [1, 128], strides = [1, 1]} : vector<3x128xf32> to vector<1x128xf32>
    %32 = vector.broadcast %31 : vector<1x128xf32> to vector<64x128xf32>
    %33 = arith.addf %30, %32 : vector<64x128xf32>
    %cst_25 = arith.constant 0.000000e+00 : f32
    %34 = vector.broadcast %cst_25 : f32 to vector<64x128xf32>
    %35 = arith.maximumf %33, %34 : vector<64x128xf32>
    %36 = vector.shape_cast %35 : vector<64x128xf32> to vector<8x8x128xf32>
    %c1 = arith.constant 1 : index
    %c1_26 = arith.constant 1 : index
    %c0_27 = arith.constant 0 : index
    %37 = vector.load %arg11[%c1, %c1_26, %c0_27] : memref<10x10x128xf32, #tpu.memory_space<vmem>>, vector<8x8x128xf32>
    tpu.vector_store %arg11[%c1, %c1_26, %c0_27], %36 {strides = array<i32>} : memref<10x10x128xf32, #tpu.memory_space<vmem>>, vector<8x8x128xf32>,
    %cst_28 = arith.constant 0.000000e+00 : f32
    %38 = vector.broadcast %cst_28 : f32 to vector<64x128xf32>
    %c0_29 = arith.constant 0 : index
    %c0_30 = arith.constant 0 : index
    %c0_31 = arith.constant 0 : index
    %39 = vector.load %arg11[%c0_29, %c0_30, %c0_31] : memref<10x10x128xf32, #tpu.memory_space<vmem>>, vector<8x8x128xf32>
    %40 = vector.shape_cast %39 : vector<8x8x128xf32> to vector<64x128xf32>
    %c0_32 = arith.constant 0 : index
    %c0_33 = arith.constant 0 : index
    %c0_34 = arith.constant 0 : index
    %41 = vector.load %arg6[%c0_32, %c0_33, %c0_34] : memref<2x1152x128xbf16, #tpu.memory_space<vmem>>, vector<1x128x128xbf16>
    %42 = vector.shape_cast %41 : vector<1x128x128xbf16> to vector<128x128xbf16>
    %43 = arith.truncf %40 : vector<64x128xf32> to vector<64x128xbf16>
    %cst_35 = arith.constant dense<0.000000e+00> : vector<64x128xf32>
    %44 = tpu.matmul %43, %42, %cst_35 {dimension_numbers = #tpu.dot_dimension_numbers<[1], [0], [0], [1], [0, 0, 1, 1], [], []>} : vector<64x128xbf16>, vector<128x128xbf16>, vector<64x128xf32> -> vector<64x128xf32>
    %45 = arith.addf %38, %44 : vector<64x128xf32>
    %c0_36 = arith.constant 0 : index
    %c1_37 = arith.constant 1 : index
    %c0_38 = arith.constant 0 : index
    %46 = vector.load %arg11[%c0_36, %c1_37, %c0_38] : memref<10x10x128xf32, #tpu.memory_space<vmem>>, vector<8x8x128xf32>
    %47 = vector.shape_cast %46 : vector<8x8x128xf32> to vector<64x128xf32>
    %c0_39 = arith.constant 0 : index
    %c128 = arith.constant 128 : index
    %c0_40 = arith.constant 0 : index
    %48 = vector.load %arg6[%c0_39, %c128, %c0_40] : memref<2x1152x128xbf16, #tpu.memory_space<vmem>>, vector<1x128x128xbf16>
    %49 = vector.shape_cast %48 : vector<1x128x128xbf16> to vector<128x128xbf16>
    %50 = arith.truncf %47 : vector<64x128xf32> to vector<64x128xbf16>
    %cst_41 = arith.constant dense<0.000000e+00> : vector<64x128xf32>
    %51 = tpu.matmul %50, %49, %cst_41 {dimension_numbers = #tpu.dot_dimension_numbers<[1], [0], [0], [1], [0, 0, 1, 1], [], []>} : vector<64x128xbf16>, vector<128x128xbf16>, vector<64x128xf32> -> vector<64x128xf32>
    %52 = arith.addf %45, %51 : vector<64x128xf32>
    %c0_42 = arith.constant 0 : index
    %c2 = arith.constant 2 : index
    %c0_43 = arith.constant 0 : index
    %53 = vector.load %arg11[%c0_42, %c2, %c0_43] : memref<10x10x128xf32, #tpu.memory_space<vmem>>, vector<8x8x128xf32>
    %54 = vector.shape_cast %53 : vector<8x8x128xf32> to vector<64x128xf32>
    %c0_44 = arith.constant 0 : index
    %c256 = arith.constant 256 : index
    %c0_45 = arith.constant 0 : index
    %55 = vector.load %arg6[%c0_44, %c256, %c0_45] : memref<2x1152x128xbf16, #tpu.memory_space<vmem>>, vector<1x128x128xbf16>
    %56 = vector.shape_cast %55 : vector<1x128x128xbf16> to vector<128x128xbf16>
    %57 = arith.truncf %54 : vector<64x128xf32> to vector<64x128xbf16>
    %cst_46 = arith.constant dense<0.000000e+00> : vector<64x128xf32>
    %58 = tpu.matmul %57, %56, %cst_46 {dimension_numbers = #tpu.dot_dimension_numbers<[1], [0], [0], [1], [0, 0, 1, 1], [], []>} : vector<64x128xbf16>, vector<128x128xbf16>, vector<64x128xf32> -> vector<64x128xf32>
    %59 = arith.addf %52, %58 : vector<64x128xf32>
    %c1_47 = arith.constant 1 : index
    %c0_48 = arith.constant 0 : index
    %c0_49 = arith.constant 0 : index
    %60 = vector.load %arg11[%c1_47, %c0_48, %c0_49] : memref<10x10x128xf32, #tpu.memory_space<vmem>>, vector<8x8x128xf32>
    %61 = vector.shape_cast %60 : vector<8x8x128xf32> to vector<64x128xf32>
    %c0_50 = arith.constant 0 : index
    %c384 = arith.constant 384 : index
    %c0_51 = arith.constant 0 : index
    %62 = vector.load %arg6[%c0_50, %c384, %c0_51] : memref<2x1152x128xbf16, #tpu.memory_space<vmem>>, vector<1x128x128xbf16>
    %63 = vector.shape_cast %62 : vector<1x128x128xbf16> to vector<128x128xbf16>
    %64 = arith.truncf %61 : vector<64x128xf32> to vector<64x128xbf16>
    %cst_52 = arith.constant dense<0.000000e+00> : vector<64x128xf32>
    %65 = tpu.matmul %64, %63, %cst_52 {dimension_numbers = #tpu.dot_dimension_numbers<[1], [0], [0], [1], [0, 0, 1, 1], [], []>} : vector<64x128xbf16>, vector<128x128xbf16>, vector<64x128xf32> -> vector<64x128xf32>
    %66 = arith.addf %59, %65 : vector<64x128xf32>
    %c1_53 = arith.constant 1 : index
    %c1_54 = arith.constant 1 : index
    %c0_55 = arith.constant 0 : index
    %67 = vector.load %arg11[%c1_53, %c1_54, %c0_55] : memref<10x10x128xf32, #tpu.memory_space<vmem>>, vector<8x8x128xf32>
    %68 = vector.shape_cast %67 : vector<8x8x128xf32> to vector<64x128xf32>
    %c0_56 = arith.constant 0 : index
    %c512 = arith.constant 512 : index
    %c0_57 = arith.constant 0 : index
    %69 = vector.load %arg6[%c0_56, %c512, %c0_57] : memref<2x1152x128xbf16, #tpu.memory_space<vmem>>, vector<1x128x128xbf16>
    %70 = vector.shape_cast %69 : vector<1x128x128xbf16> to vector<128x128xbf16>
    %71 = arith.truncf %68 : vector<64x128xf32> to vector<64x128xbf16>
    %cst_58 = arith.constant dense<0.000000e+00> : vector<64x128xf32>
    %72 = tpu.matmul %71, %70, %cst_58 {dimension_numbers = #tpu.dot_dimension_numbers<[1], [0], [0], [1], [0, 0, 1, 1], [], []>} : vector<64x128xbf16>, vector<128x128xbf16>, vector<64x128xf32> -> vector<64x128xf32>
    %73 = arith.addf %66, %72 : vector<64x128xf32>
    %c1_59 = arith.constant 1 : index
    %c2_60 = arith.constant 2 : index
    %c0_61 = arith.constant 0 : index
    %74 = vector.load %arg11[%c1_59, %c2_60, %c0_61] : memref<10x10x128xf32, #tpu.memory_space<vmem>>, vector<8x8x128xf32>
    %75 = vector.shape_cast %74 : vector<8x8x128xf32> to vector<64x128xf32>
    %c0_62 = arith.constant 0 : index
    %c640 = arith.constant 640 : index
    %c0_63 = arith.constant 0 : index
    %76 = vector.load %arg6[%c0_62, %c640, %c0_63] : memref<2x1152x128xbf16, #tpu.memory_space<vmem>>, vector<1x128x128xbf16>
    %77 = vector.shape_cast %76 : vector<1x128x128xbf16> to vector<128x128xbf16>
    %78 = arith.truncf %75 : vector<64x128xf32> to vector<64x128xbf16>
    %cst_64 = arith.constant dense<0.000000e+00> : vector<64x128xf32>
    %79 = tpu.matmul %78, %77, %cst_64 {dimension_numbers = #tpu.dot_dimension_numbers<[1], [0], [0], [1], [0, 0, 1, 1], [], []>} : vector<64x128xbf16>, vector<128x128xbf16>, vector<64x128xf32> -> vector<64x128xf32>
    %80 = arith.addf %73, %79 : vector<64x128xf32>
    %c2_65 = arith.constant 2 : index
    %c0_66 = arith.constant 0 : index
    %c0_67 = arith.constant 0 : index
    %81 = vector.load %arg11[%c2_65, %c0_66, %c0_67] : memref<10x10x128xf32, #tpu.memory_space<vmem>>, vector<8x8x128xf32>
    %82 = vector.shape_cast %81 : vector<8x8x128xf32> to vector<64x128xf32>
    %c0_68 = arith.constant 0 : index
    %c768 = arith.constant 768 : index
    %c0_69 = arith.constant 0 : index
    %83 = vector.load %arg6[%c0_68, %c768, %c0_69] : memref<2x1152x128xbf16, #tpu.memory_space<vmem>>, vector<1x128x128xbf16>
    %84 = vector.shape_cast %83 : vector<1x128x128xbf16> to vector<128x128xbf16>
    %85 = arith.truncf %82 : vector<64x128xf32> to vector<64x128xbf16>
    %cst_70 = arith.constant dense<0.000000e+00> : vector<64x128xf32>
    %86 = tpu.matmul %85, %84, %cst_70 {dimension_numbers = #tpu.dot_dimension_numbers<[1], [0], [0], [1], [0, 0, 1, 1], [], []>} : vector<64x128xbf16>, vector<128x128xbf16>, vector<64x128xf32> -> vector<64x128xf32>
    %87 = arith.addf %80, %86 : vector<64x128xf32>
    %c2_71 = arith.constant 2 : index
    %c1_72 = arith.constant 1 : index
    %c0_73 = arith.constant 0 : index
    %88 = vector.load %arg11[%c2_71, %c1_72, %c0_73] : memref<10x10x128xf32, #tpu.memory_space<vmem>>, vector<8x8x128xf32>
    %89 = vector.shape_cast %88 : vector<8x8x128xf32> to vector<64x128xf32>
    %c0_74 = arith.constant 0 : index
    %c896 = arith.constant 896 : index
    %c0_75 = arith.constant 0 : index
    %90 = vector.load %arg6[%c0_74, %c896, %c0_75] : memref<2x1152x128xbf16, #tpu.memory_space<vmem>>, vector<1x128x128xbf16>
    %91 = vector.shape_cast %90 : vector<1x128x128xbf16> to vector<128x128xbf16>
    %92 = arith.truncf %89 : vector<64x128xf32> to vector<64x128xbf16>
    %cst_76 = arith.constant dense<0.000000e+00> : vector<64x128xf32>
    %93 = tpu.matmul %92, %91, %cst_76 {dimension_numbers = #tpu.dot_dimension_numbers<[1], [0], [0], [1], [0, 0, 1, 1], [], []>} : vector<64x128xbf16>, vector<128x128xbf16>, vector<64x128xf32> -> vector<64x128xf32>
    %94 = arith.addf %87, %93 : vector<64x128xf32>
    %c2_77 = arith.constant 2 : index
    %c2_78 = arith.constant 2 : index
    %c0_79 = arith.constant 0 : index
    %95 = vector.load %arg11[%c2_77, %c2_78, %c0_79] : memref<10x10x128xf32, #tpu.memory_space<vmem>>, vector<8x8x128xf32>
    %96 = vector.shape_cast %95 : vector<8x8x128xf32> to vector<64x128xf32>
    %c0_80 = arith.constant 0 : index
    %c1024 = arith.constant 1024 : index
    %c0_81 = arith.constant 0 : index
    %97 = vector.load %arg6[%c0_80, %c1024, %c0_81] : memref<2x1152x128xbf16, #tpu.memory_space<vmem>>, vector<1x128x128xbf16>
    %98 = vector.shape_cast %97 : vector<1x128x128xbf16> to vector<128x128xbf16>
    %99 = arith.truncf %96 : vector<64x128xf32> to vector<64x128xbf16>
    %cst_82 = arith.constant dense<0.000000e+00> : vector<64x128xf32>
    %100 = tpu.matmul %99, %98, %cst_82 {dimension_numbers = #tpu.dot_dimension_numbers<[1], [0], [0], [1], [0, 0, 1, 1], [], []>} : vector<64x128xbf16>, vector<128x128xbf16>, vector<64x128xf32> -> vector<64x128xf32>
    %101 = arith.addf %94, %100 : vector<64x128xf32>
    %c0_83 = arith.constant 0 : index
    %c0_84 = arith.constant 0 : index
    %102 = vector.load %arg10[%c0_83, %c0_84] : memref<64x128xf32, #tpu.memory_space<vmem>>, vector<64x128xf32>
    %103 = arith.addf %102, %101 : vector<64x128xf32>
    %c0_85 = arith.constant 0 : index
    %c0_86 = arith.constant 0 : index
    %104 = vector.load %arg10[%c0_85, %c0_86] : memref<64x128xf32, #tpu.memory_space<vmem>>, vector<64x128xf32>
    tpu.vector_store %arg10[%c0_85, %c0_86], %103 {strides = array<i32>} : memref<64x128xf32, #tpu.memory_space<vmem>>, vector<64x128xf32>,
    %c1_87 = arith.constant 1 : index
    %c0_88 = arith.constant 0 : index
    %c0_89 = arith.constant 0 : index
    %105 = vector.load %arg4[%c1_87, %c0_88, %c0_89] : memref<2x3x128xf32, #tpu.memory_space<vmem>>, vector<1x3x128xf32>
    %106 = vector.shape_cast %105 : vector<1x3x128xf32> to vector<3x128xf32>
    %c0_90 = arith.constant 0 : index
    %c0_91 = arith.constant 0 : index
    %107 = vector.load %arg10[%c0_90, %c0_91] : memref<64x128xf32, #tpu.memory_space<vmem>>, vector<64x128xf32>
    %108 = vector.extract_strided_slice %106 {offsets = [0, 0], sizes = [1, 128], strides = [1, 1]} : vector<3x128xf32> to vector<1x128xf32>
    %109 = vector.broadcast %108 : vector<1x128xf32> to vector<64x128xf32>
    %110 = arith.mulf %107, %109 : vector<64x128xf32>
    %111 = vector.extract_strided_slice %106 {offsets = [1, 0], sizes = [1, 128], strides = [1, 1]} : vector<3x128xf32> to vector<1x128xf32>
    %112 = vector.broadcast %111 : vector<1x128xf32> to vector<64x128xf32>
    %113 = arith.addf %110, %112 : vector<64x128xf32>
    %cst_92 = arith.constant 0.000000e+00 : f32
    %114 = vector.broadcast %cst_92 : f32 to vector<64x128xf32>
    %115 = arith.maximumf %113, %114 : vector<64x128xf32>
    %116 = arith.truncf %115 : vector<64x128xf32> to vector<64x128xbf16>
    %c1_93 = arith.constant 1 : index
    %c0_94 = arith.constant 0 : index
    %c0_95 = arith.constant 0 : index
    %117 = vector.load %arg5[%c1_93, %c0_94, %c0_95] : memref<2x128x128xbf16, #tpu.memory_space<vmem>>, vector<1x128x128xbf16>
    %118 = vector.shape_cast %117 : vector<1x128x128xbf16> to vector<128x128xbf16>
    %cst_96 = arith.constant dense<0.000000e+00> : vector<64x128xf32>
    %119 = tpu.matmul %116, %118, %cst_96 {dimension_numbers = #tpu.dot_dimension_numbers<[1], [0], [0], [1], [0, 0, 1, 1], [], []>} : vector<64x128xbf16>, vector<128x128xbf16>, vector<64x128xf32> -> vector<64x128xf32>
    %120 = vector.extract_strided_slice %106 {offsets = [2, 0], sizes = [1, 128], strides = [1, 1]} : vector<3x128xf32> to vector<1x128xf32>
    %121 = vector.broadcast %120 : vector<1x128xf32> to vector<64x128xf32>
    %122 = arith.addf %119, %121 : vector<64x128xf32>
    %cst_97 = arith.constant 0.000000e+00 : f32
    %123 = vector.broadcast %cst_97 : f32 to vector<64x128xf32>
    %124 = arith.maximumf %122, %123 : vector<64x128xf32>
    %125 = vector.shape_cast %124 : vector<64x128xf32> to vector<8x8x128xf32>
    %c1_98 = arith.constant 1 : index
    %c1_99 = arith.constant 1 : index
    %c0_100 = arith.constant 0 : index
    %126 = vector.load %arg11[%c1_98, %c1_99, %c0_100] : memref<10x10x128xf32, #tpu.memory_space<vmem>>, vector<8x8x128xf32>
    tpu.vector_store %arg11[%c1_98, %c1_99, %c0_100], %125 {strides = array<i32>} : memref<10x10x128xf32, #tpu.memory_space<vmem>>, vector<8x8x128xf32>,
    %cst_101 = arith.constant 0.000000e+00 : f32
    %127 = vector.broadcast %cst_101 : f32 to vector<64x128xf32>
    %c0_102 = arith.constant 0 : index
    %c0_103 = arith.constant 0 : index
    %c0_104 = arith.constant 0 : index
    %128 = vector.load %arg11[%c0_102, %c0_103, %c0_104] : memref<10x10x128xf32, #tpu.memory_space<vmem>>, vector<8x8x128xf32>
    %129 = vector.shape_cast %128 : vector<8x8x128xf32> to vector<64x128xf32>
    %c1_105 = arith.constant 1 : index
    %c0_106 = arith.constant 0 : index
    %c0_107 = arith.constant 0 : index
    %130 = vector.load %arg6[%c1_105, %c0_106, %c0_107] : memref<2x1152x128xbf16, #tpu.memory_space<vmem>>, vector<1x128x128xbf16>
    %131 = vector.shape_cast %130 : vector<1x128x128xbf16> to vector<128x128xbf16>
    %132 = arith.truncf %129 : vector<64x128xf32> to vector<64x128xbf16>
    %cst_108 = arith.constant dense<0.000000e+00> : vector<64x128xf32>
    %133 = tpu.matmul %132, %131, %cst_108 {dimension_numbers = #tpu.dot_dimension_numbers<[1], [0], [0], [1], [0, 0, 1, 1], [], []>} : vector<64x128xbf16>, vector<128x128xbf16>, vector<64x128xf32> -> vector<64x128xf32>
    %134 = arith.addf %127, %133 : vector<64x128xf32>
    %c0_109 = arith.constant 0 : index
    %c1_110 = arith.constant 1 : index
    %c0_111 = arith.constant 0 : index
    %135 = vector.load %arg11[%c0_109, %c1_110, %c0_111] : memref<10x10x128xf32, #tpu.memory_space<vmem>>, vector<8x8x128xf32>
    %136 = vector.shape_cast %135 : vector<8x8x128xf32> to vector<64x128xf32>
    %c1_112 = arith.constant 1 : index
    %c128_113 = arith.constant 128 : index
    %c0_114 = arith.constant 0 : index
    %137 = vector.load %arg6[%c1_112, %c128_113, %c0_114] : memref<2x1152x128xbf16, #tpu.memory_space<vmem>>, vector<1x128x128xbf16>
    %138 = vector.shape_cast %137 : vector<1x128x128xbf16> to vector<128x128xbf16>
    %139 = arith.truncf %136 : vector<64x128xf32> to vector<64x128xbf16>
    %cst_115 = arith.constant dense<0.000000e+00> : vector<64x128xf32>
    %140 = tpu.matmul %139, %138, %cst_115 {dimension_numbers = #tpu.dot_dimension_numbers<[1], [0], [0], [1], [0, 0, 1, 1], [], []>} : vector<64x128xbf16>, vector<128x128xbf16>, vector<64x128xf32> -> vector<64x128xf32>
    %141 = arith.addf %134, %140 : vector<64x128xf32>
    %c0_116 = arith.constant 0 : index
    %c2_117 = arith.constant 2 : index
    %c0_118 = arith.constant 0 : index
    %142 = vector.load %arg11[%c0_116, %c2_117, %c0_118] : memref<10x10x128xf32, #tpu.memory_space<vmem>>, vector<8x8x128xf32>
    %143 = vector.shape_cast %142 : vector<8x8x128xf32> to vector<64x128xf32>
    %c1_119 = arith.constant 1 : index
    %c256_120 = arith.constant 256 : index
    %c0_121 = arith.constant 0 : index
    %144 = vector.load %arg6[%c1_119, %c256_120, %c0_121] : memref<2x1152x128xbf16, #tpu.memory_space<vmem>>, vector<1x128x128xbf16>
    %145 = vector.shape_cast %144 : vector<1x128x128xbf16> to vector<128x128xbf16>
    %146 = arith.truncf %143 : vector<64x128xf32> to vector<64x128xbf16>
    %cst_122 = arith.constant dense<0.000000e+00> : vector<64x128xf32>
    %147 = tpu.matmul %146, %145, %cst_122 {dimension_numbers = #tpu.dot_dimension_numbers<[1], [0], [0], [1], [0, 0, 1, 1], [], []>} : vector<64x128xbf16>, vector<128x128xbf16>, vector<64x128xf32> -> vector<64x128xf32>
    %148 = arith.addf %141, %147 : vector<64x128xf32>
    %c1_123 = arith.constant 1 : index
    %c0_124 = arith.constant 0 : index
    %c0_125 = arith.constant 0 : index
    %149 = vector.load %arg11[%c1_123, %c0_124, %c0_125] : memref<10x10x128xf32, #tpu.memory_space<vmem>>, vector<8x8x128xf32>
    %150 = vector.shape_cast %149 : vector<8x8x128xf32> to vector<64x128xf32>
    %c1_126 = arith.constant 1 : index
    %c384_127 = arith.constant 384 : index
    %c0_128 = arith.constant 0 : index
    %151 = vector.load %arg6[%c1_126, %c384_127, %c0_128] : memref<2x1152x128xbf16, #tpu.memory_space<vmem>>, vector<1x128x128xbf16>
    %152 = vector.shape_cast %151 : vector<1x128x128xbf16> to vector<128x128xbf16>
    %153 = arith.truncf %150 : vector<64x128xf32> to vector<64x128xbf16>
    %cst_129 = arith.constant dense<0.000000e+00> : vector<64x128xf32>
    %154 = tpu.matmul %153, %152, %cst_129 {dimension_numbers = #tpu.dot_dimension_numbers<[1], [0], [0], [1], [0, 0, 1, 1], [], []>} : vector<64x128xbf16>, vector<128x128xbf16>, vector<64x128xf32> -> vector<64x128xf32>
    %155 = arith.addf %148, %154 : vector<64x128xf32>
    %c1_130 = arith.constant 1 : index
    %c1_131 = arith.constant 1 : index
    %c0_132 = arith.constant 0 : index
    %156 = vector.load %arg11[%c1_130, %c1_131, %c0_132] : memref<10x10x128xf32, #tpu.memory_space<vmem>>, vector<8x8x128xf32>
    %157 = vector.shape_cast %156 : vector<8x8x128xf32> to vector<64x128xf32>
    %c1_133 = arith.constant 1 : index
    %c512_134 = arith.constant 512 : index
    %c0_135 = arith.constant 0 : index
    %158 = vector.load %arg6[%c1_133, %c512_134, %c0_135] : memref<2x1152x128xbf16, #tpu.memory_space<vmem>>, vector<1x128x128xbf16>
    %159 = vector.shape_cast %158 : vector<1x128x128xbf16> to vector<128x128xbf16>
    %160 = arith.truncf %157 : vector<64x128xf32> to vector<64x128xbf16>
    %cst_136 = arith.constant dense<0.000000e+00> : vector<64x128xf32>
    %161 = tpu.matmul %160, %159, %cst_136 {dimension_numbers = #tpu.dot_dimension_numbers<[1], [0], [0], [1], [0, 0, 1, 1], [], []>} : vector<64x128xbf16>, vector<128x128xbf16>, vector<64x128xf32> -> vector<64x128xf32>
    %162 = arith.addf %155, %161 : vector<64x128xf32>
    %c1_137 = arith.constant 1 : index
    %c2_138 = arith.constant 2 : index
    %c0_139 = arith.constant 0 : index
    %163 = vector.load %arg11[%c1_137, %c2_138, %c0_139] : memref<10x10x128xf32, #tpu.memory_space<vmem>>, vector<8x8x128xf32>
    %164 = vector.shape_cast %163 : vector<8x8x128xf32> to vector<64x128xf32>
    %c1_140 = arith.constant 1 : index
    %c640_141 = arith.constant 640 : index
    %c0_142 = arith.constant 0 : index
    %165 = vector.load %arg6[%c1_140, %c640_141, %c0_142] : memref<2x1152x128xbf16, #tpu.memory_space<vmem>>, vector<1x128x128xbf16>
    %166 = vector.shape_cast %165 : vector<1x128x128xbf16> to vector<128x128xbf16>
    %167 = arith.truncf %164 : vector<64x128xf32> to vector<64x128xbf16>
    %cst_143 = arith.constant dense<0.000000e+00> : vector<64x128xf32>
    %168 = tpu.matmul %167, %166, %cst_143 {dimension_numbers = #tpu.dot_dimension_numbers<[1], [0], [0], [1], [0, 0, 1, 1], [], []>} : vector<64x128xbf16>, vector<128x128xbf16>, vector<64x128xf32> -> vector<64x128xf32>
    %169 = arith.addf %162, %168 : vector<64x128xf32>
    %c2_144 = arith.constant 2 : index
    %c0_145 = arith.constant 0 : index
    %c0_146 = arith.constant 0 : index
    %170 = vector.load %arg11[%c2_144, %c0_145, %c0_146] : memref<10x10x128xf32, #tpu.memory_space<vmem>>, vector<8x8x128xf32>
    %171 = vector.shape_cast %170 : vector<8x8x128xf32> to vector<64x128xf32>
    %c1_147 = arith.constant 1 : index
    %c768_148 = arith.constant 768 : index
    %c0_149 = arith.constant 0 : index
    %172 = vector.load %arg6[%c1_147, %c768_148, %c0_149] : memref<2x1152x128xbf16, #tpu.memory_space<vmem>>, vector<1x128x128xbf16>
    %173 = vector.shape_cast %172 : vector<1x128x128xbf16> to vector<128x128xbf16>
    %174 = arith.truncf %171 : vector<64x128xf32> to vector<64x128xbf16>
    %cst_150 = arith.constant dense<0.000000e+00> : vector<64x128xf32>
    %175 = tpu.matmul %174, %173, %cst_150 {dimension_numbers = #tpu.dot_dimension_numbers<[1], [0], [0], [1], [0, 0, 1, 1], [], []>} : vector<64x128xbf16>, vector<128x128xbf16>, vector<64x128xf32> -> vector<64x128xf32>
    %176 = arith.addf %169, %175 : vector<64x128xf32>
    %c2_151 = arith.constant 2 : index
    %c1_152 = arith.constant 1 : index
    %c0_153 = arith.constant 0 : index
    %177 = vector.load %arg11[%c2_151, %c1_152, %c0_153] : memref<10x10x128xf32, #tpu.memory_space<vmem>>, vector<8x8x128xf32>
    %178 = vector.shape_cast %177 : vector<8x8x128xf32> to vector<64x128xf32>
    %c1_154 = arith.constant 1 : index
    %c896_155 = arith.constant 896 : index
    %c0_156 = arith.constant 0 : index
    %179 = vector.load %arg6[%c1_154, %c896_155, %c0_156] : memref<2x1152x128xbf16, #tpu.memory_space<vmem>>, vector<1x128x128xbf16>
    %180 = vector.shape_cast %179 : vector<1x128x128xbf16> to vector<128x128xbf16>
    %181 = arith.truncf %178 : vector<64x128xf32> to vector<64x128xbf16>
    %cst_157 = arith.constant dense<0.000000e+00> : vector<64x128xf32>
    %182 = tpu.matmul %181, %180, %cst_157 {dimension_numbers = #tpu.dot_dimension_numbers<[1], [0], [0], [1], [0, 0, 1, 1], [], []>} : vector<64x128xbf16>, vector<128x128xbf16>, vector<64x128xf32> -> vector<64x128xf32>
    %183 = arith.addf %176, %182 : vector<64x128xf32>
    %c2_158 = arith.constant 2 : index
    %c2_159 = arith.constant 2 : index
    %c0_160 = arith.constant 0 : index
    %184 = vector.load %arg11[%c2_158, %c2_159, %c0_160] : memref<10x10x128xf32, #tpu.memory_space<vmem>>, vector<8x8x128xf32>
    %185 = vector.shape_cast %184 : vector<8x8x128xf32> to vector<64x128xf32>
    %c1_161 = arith.constant 1 : index
    %c1024_162 = arith.constant 1024 : index
    %c0_163 = arith.constant 0 : index
    %186 = vector.load %arg6[%c1_161, %c1024_162, %c0_163] : memref<2x1152x128xbf16, #tpu.memory_space<vmem>>, vector<1x128x128xbf16>
    %187 = vector.shape_cast %186 : vector<1x128x128xbf16> to vector<128x128xbf16>
    %188 = arith.truncf %185 : vector<64x128xf32> to vector<64x128xbf16>
    %cst_164 = arith.constant dense<0.000000e+00> : vector<64x128xf32>
    %189 = tpu.matmul %188, %187, %cst_164 {dimension_numbers = #tpu.dot_dimension_numbers<[1], [0], [0], [1], [0, 0, 1, 1], [], []>} : vector<64x128xbf16>, vector<128x128xbf16>, vector<64x128xf32> -> vector<64x128xf32>
    %190 = arith.addf %183, %189 : vector<64x128xf32>
    %c0_165 = arith.constant 0 : index
    %c0_166 = arith.constant 0 : index
    %191 = vector.load %arg10[%c0_165, %c0_166] : memref<64x128xf32, #tpu.memory_space<vmem>>, vector<64x128xf32>
    %192 = arith.addf %191, %190 : vector<64x128xf32>
    %c0_167 = arith.constant 0 : index
    %c0_168 = arith.constant 0 : index
    %193 = vector.load %arg10[%c0_167, %c0_168] : memref<64x128xf32, #tpu.memory_space<vmem>>, vector<64x128xf32>
    tpu.vector_store %arg10[%c0_167, %c0_168], %192 {strides = array<i32>} : memref<64x128xf32, #tpu.memory_space<vmem>>, vector<64x128xf32>,
    %c0_169 = arith.constant 0 : index
    %c0_170 = arith.constant 0 : index
    %194 = vector.load %arg7[%c0_169, %c0_170] : memref<3x128xf32, #tpu.memory_space<vmem>>, vector<3x128xf32>
    %c0_171 = arith.constant 0 : index
    %c0_172 = arith.constant 0 : index
    %195 = vector.load %arg10[%c0_171, %c0_172] : memref<64x128xf32, #tpu.memory_space<vmem>>, vector<64x128xf32>
    %196 = vector.extract_strided_slice %194 {offsets = [0, 0], sizes = [1, 128], strides = [1, 1]} : vector<3x128xf32> to vector<1x128xf32>
    %197 = vector.broadcast %196 : vector<1x128xf32> to vector<64x128xf32>
    %198 = arith.mulf %195, %197 : vector<64x128xf32>
    %199 = vector.extract_strided_slice %194 {offsets = [1, 0], sizes = [1, 128], strides = [1, 1]} : vector<3x128xf32> to vector<1x128xf32>
    %200 = vector.broadcast %199 : vector<1x128xf32> to vector<64x128xf32>
    %201 = arith.addf %198, %200 : vector<64x128xf32>
    %cst_173 = arith.constant 0.000000e+00 : f32
    %202 = vector.broadcast %cst_173 : f32 to vector<64x128xf32>
    %203 = arith.maximumf %201, %202 : vector<64x128xf32>
    %cst_174 = arith.constant dense<0.000000e+00> : vector<128xf32>
    %204 = vector.multi_reduction <add>, %203, %cst_174 [0] : vector<64x128xf32> to vector<128xf32>
    %205 = vector.shape_cast %204 : vector<128xf32> to vector<1x128xf32>
    %cst_175 = arith.constant 1.562500e-02 : f32
    %206 = vector.broadcast %cst_175 : f32 to vector<1x128xf32>
    %207 = arith.mulf %205, %206 : vector<1x128xf32>
    %208 = arith.truncf %207 : vector<1x128xf32> to vector<1x128xbf16>
    %c0_176 = arith.constant 0 : index
    %c0_177 = arith.constant 0 : index
    %209 = vector.load %arg8[%c0_176, %c0_177] : memref<128x128xbf16, #tpu.memory_space<vmem>>, vector<128x128xbf16>
    %cst_178 = arith.constant dense<0.000000e+00> : vector<1x128xf32>
    %210 = tpu.matmul %208, %209, %cst_178 {dimension_numbers = #tpu.dot_dimension_numbers<[1], [0], [0], [1], [0, 0, 1, 1], [], []>} : vector<1x128xbf16>, vector<128x128xbf16>, vector<1x128xf32> -> vector<1x128xf32>
    %211 = vector.extract_strided_slice %194 {offsets = [2, 0], sizes = [1, 128], strides = [1, 1]} : vector<3x128xf32> to vector<1x128xf32>
    %212 = arith.addf %210, %211 : vector<1x128xf32>
    %c0_179 = arith.constant 0 : index
    %c0_180 = arith.constant 0 : index
    %c0_181 = arith.constant 0 : index
    %213 = vector.load %arg9[%c0_179, %c0_180, %c0_181] : memref<1x1x128xf32, #tpu.memory_space<vmem>>, vector<1x1x128xf32>
    %214 = vector.shape_cast %213 : vector<1x1x128xf32> to vector<1x128xf32>
    %215 = vector.shape_cast %212 : vector<1x128xf32> to vector<1x1x128xf32>
    tpu.vector_store %arg9[%c0_179, %c0_180, %c0_181], %215 {strides = array<i32>} : memref<1x1x128xf32, #tpu.memory_space<vmem>>, vector<1x1x128xf32>,
    return
  }
  func.func @transform_0(%arg0: i32) -> (i32, i32, i32) {
    %c0_i32 = arith.constant 0 : i32
    %c0_i32_0 = arith.constant 0 : i32
    %c0_i32_1 = arith.constant 0 : i32
    return %arg0, %c0_i32, %c0_i32_0 : i32, i32, i32
  }
  func.func @transform_1(%arg0: i32) -> (i32, i32) {
    %c0_i32 = arith.constant 0 : i32
    %c0_i32_0 = arith.constant 0 : i32
    %c0_i32_1 = arith.constant 0 : i32
    return %c0_i32, %c0_i32_0 : i32, i32
  }
  func.func @transform_2(%arg0: i32) -> (i32, i32) {
    %c0_i32 = arith.constant 0 : i32
    %c0_i32_0 = arith.constant 0 : i32
    %c0_i32_1 = arith.constant 0 : i32
    return %c0_i32, %c0_i32_0 : i32, i32
  }
  func.func @transform_3(%arg0: i32) -> (i32, i32, i32) {
    %c0_i32 = arith.constant 0 : i32
    %c0_i32_0 = arith.constant 0 : i32
    %c0_i32_1 = arith.constant 0 : i32
    %c0_i32_2 = arith.constant 0 : i32
    return %c0_i32, %c0_i32_0, %c0_i32_1 : i32, i32, i32
  }
  func.func @transform_4(%arg0: i32) -> (i32, i32, i32) {
    %c0_i32 = arith.constant 0 : i32
    %c0_i32_0 = arith.constant 0 : i32
    %c0_i32_1 = arith.constant 0 : i32
    %c0_i32_2 = arith.constant 0 : i32
    return %c0_i32, %c0_i32_0, %c0_i32_1 : i32, i32, i32
  }
  func.func @transform_5(%arg0: i32) -> (i32, i32, i32) {
    %c0_i32 = arith.constant 0 : i32
    %c0_i32_0 = arith.constant 0 : i32
    %c0_i32_1 = arith.constant 0 : i32
    %c0_i32_2 = arith.constant 0 : i32
    return %c0_i32, %c0_i32_0, %c0_i32_1 : i32, i32, i32
  }
  func.func @transform_6(%arg0: i32) -> (i32, i32) {
    %c0_i32 = arith.constant 0 : i32
    %c0_i32_0 = arith.constant 0 : i32
    %c0_i32_1 = arith.constant 0 : i32
    return %c0_i32, %c0_i32_0 : i32, i32
  }
  func.func @transform_7(%arg0: i32) -> (i32, i32) {
    %c0_i32 = arith.constant 0 : i32
    %c0_i32_0 = arith.constant 0 : i32
    %c0_i32_1 = arith.constant 0 : i32
    return %c0_i32, %c0_i32_0 : i32, i32
  }
  func.func @transform_8(%arg0: i32) -> (i32, i32, i32) {
    %c0_i32 = arith.constant 0 : i32
    %c0_i32_0 = arith.constant 0 : i32
    %c0_i32_1 = arith.constant 0 : i32
    return %arg0, %c0_i32, %c0_i32_0 : i32, i32, i32
  }
}

</mosaic_0001>

<llo_original>
// kernel: custom_densenet_forward.1
$region0: #{custom_densenet_forward.1}
  #allocation0 [shape = 'u32[]', space=smem, size = 0x4, offset = 0x4, fixed_abs, tag = 'smem constant byte address 0x4 - core index']
  #allocation1 [shape = 'u32[144,128]{1,0:T(1,128)}', space=vmem, size = 0x12000, scoped, tag = 'internal scratch']
  #allocation2 [shape = 'f32[64,128]{1,0:T(8,128)}', space=vmem, size = 0x8000, scoped, tag = 'scratch operand']
  #allocation3 [shape = 'f32[10,10,128]{2,1,0:T(8,128)}', space=vmem, size = 0x14000, scoped, tag = 'scratch operand']
  %s0 = inlined_call_operand.vmem [shape: bf16[2,256,128], index: 0, kind: input, shape index: {}]
  %s1 = inlined_call_operand.vmem [shape: bf16[128,128], index: 1, kind: input, shape index: {}]
  %s2 = inlined_call_operand.vmem [shape: f32[1,128], index: 2, kind: input, shape index: {}]
  %s3 = inlined_call_operand.vmem [shape: f32[2,3,128], index: 3, kind: input, shape index: {}]
  %s4 = inlined_call_operand.vmem [shape: bf16[2,128,128], index: 4, kind: input, shape index: {}]
  %s5 = inlined_call_operand.vmem [shape: bf16[2,1152,128], index: 5, kind: input, shape index: {}]
  %s6 = inlined_call_operand.vmem [shape: f32[3,128], index: 6, kind: input, shape index: {}]
  %s7 = inlined_call_operand.vmem [shape: bf16[128,128], index: 7, kind: input, shape index: {}]
  %s8 = inlined_call_operand.hbm [shape: f32[2,1,128], index: 8, kind: output, shape index: {}]
  %s9 = sld [smem:[#allocation0]]
  $region65: #{custom_densenet_forward.1} parent=0
    _
  %s11 = ssub.s32 1, %s9
  %s12 = scalar_select 0, %s11, %s9
  $region1: #{custom_densenet_forward.1} parent=0
    #allocation4 [shape = 'u8[1024]{0}', space=vmem, size = 0x400, scoped, tag = 'output window, operand 0']
    #allocation5 [shape = 's32[2]{0}', space=sflag, size = 0x8, scoped, tag = 'scoped memory for custom_densenet_forward.1']
    %13 = vsyncpa [#allocation5], 0
    %s14 = scalar_lea.sflag [#allocation5], 1
    %15 = vsyncpa %s14, 0
    loop: start=0, step=1, limit=4
    $region2: #{custom_densenet_forward.1} parent=1 // loop_pre_header
      _
    $region3: #{custom_densenet_forward.1} parent=1 // loop_header
      %s17 = sphi 0, %s21
      %p18 = scmp.ge.s32.totalorder %s17, 4
      %s27 = sphi 0, %s29
      %s30 = sphi 0, %s27
      %s31 = sphi 0, %s30
      %s47 = sphi 0, %s31
      %s51 = sphi 0, %s51
      %s53 = sphi 0, %s51
      %s54 = sphi 0, %s53
      %s68 = sphi 0, %s54
      %s72 = sphi 0, %s72
      %s74 = sphi 0, %s72
      %s75 = sphi 0, %s74
      %s89 = sphi 0, %s75
      %s93 = sphi 0, %s93
      %s95 = sphi 0, %s93
      %s96 = sphi 0, %s95
      %s110 = sphi 0, %s96
      %s114 = sphi 0, %s114
      %s116 = sphi 0, %s114
      %s117 = sphi 0, %s116
      %s131 = sphi 0, %s117
      %s135 = sphi 0, %s135
      %s137 = sphi 0, %s135
      %s138 = sphi 0, %s137
      %s152 = sphi 0, %s138
      %s156 = sphi 0, %s156
      %s158 = sphi 0, %s156
      %s159 = sphi 0, %s158
      %s173 = sphi 0, %s159
      %s177 = sphi 0, %s177
      %s179 = sphi 0, %s177
      %s180 = sphi 0, %s179
      %s194 = sphi 0, %s180
      %s200 = sphi 0, %s202
      %s203 = sphi 0, %s200
      %s204 = sphi 0, %s203
      %s220 = sphi 0, %s204
    $region4: #{custom_densenet_forward.1} parent=1 // loop_header_branch
      %20 = sbr.rel (%p18) target = $region8
    $region5: #{custom_densenet_forward.1} parent=1 // loop_body
      %s22 = ssub.s32 %s17, 1
      %s23 = ssub.s32 %s17, 2
      %s24 = sadd.s32 %s17, 1
      %s25 = ssub.s32 %s17, %s24
      %p26 = scmp.eq.s32.totalorder %s25, 0
      %s28 = sadd.s32 %s27, 1
      %s29 = scalar_select %p26, %s27, %s28
      %p32 = pneg %p26
      %p33 = scmp.eq.s32.totalorder %s17, 1
      %p34 = por %p32, %p33
      %p35 = scmp.ne.s32.totalorder %s27, %s30
      %p36 = scmp.eq.s32.totalorder %s17, 0
      %p37 = por %p35, %p36
      %p38 = scmp.ne.s32.totalorder %s27, %s30
      %p39 = scmp.eq.s32.totalorder %s22, 1
      %p40 = por %p38, %p39
      %p41 = scmp.ne.s32.totalorder %s30, %s31
      %p42 = scmp.eq.s32.totalorder %s22, 0
      %p43 = por %p41, %p42
      %p44 = scmp.ne.s32.totalorder %s30, %s31
      %p45 = scmp.eq.s32.totalorder %s23, 1
      %p46 = por %p44, %p45
      %p48 = scmp.ne.s32.totalorder %s31, %s47
      %p49 = scmp.eq.s32.totalorder %s23, 0
      %p50 = por %p48, %p49
      %s52 = sadd.s32 %s51, 1
      %p55 = scmp.eq.s32.totalorder %s17, 1
      %p56 = scmp.ne.s32.totalorder %s51, %s53
      %p57 = scmp.eq.s32.totalorder %s17, 0
      %p58 = por %p56, %p57
      %p59 = scmp.ne.s32.totalorder %s51, %s53
      %p60 = scmp.eq.s32.totalorder %s22, 1
      %p61 = por %p59, %p60
      %p62 = scmp.ne.s32.totalorder %s53, %s54
      %p63 = scmp.eq.s32.totalorder %s22, 0
      %p64 = por %p62, %p63
      %p65 = scmp.ne.s32.totalorder %s53, %s54
      %p66 = scmp.eq.s32.totalorder %s23, 1
      %p67 = por %p65, %p66
      %p69 = scmp.ne.s32.totalorder %s54, %s68
      %p70 = scmp.eq.s32.totalorder %s23, 0
      %p71 = por %p69, %p70
      %s73 = sadd.s32 %s72, 1
      %p76 = scmp.eq.s32.totalorder %s17, 1
      %p77 = scmp.ne.s32.totalorder %s72, %s74
      %p78 = scmp.eq.s32.totalorder %s17, 0
      %p79 = por %p77, %p78
      %p80 = scmp.ne.s32.totalorder %s72, %s74
      %p81 = scmp.eq.s32.totalorder %s22, 1
      %p82 = por %p80, %p81
      %p83 = scmp.ne.s32.totalorder %s74, %s75
      %p84 = scmp.eq.s32.totalorder %s22, 0
      %p85 = por %p83, %p84
      %p86 = scmp.ne.s32.totalorder %s74, %s75
      %p87 = scmp.eq.s32.totalorder %s23, 1
      %p88 = por %p86, %p87
      %p90 = scmp.ne.s32.totalorder %s75, %s89
      %p91 = scmp.eq.s32.totalorder %s23, 0
      %p92 = por %p90, %p91
      %s94 = sadd.s32 %s93, 1
      %p97 = scmp.eq.s32.totalorder %s17, 1
      %p98 = scmp.ne.s32.totalorder %s93, %s95
      %p99 = scmp.eq.s32.totalorder %s17, 0
      %p100 = por %p98, %p99
      %p101 = scmp.ne.s32.totalorder %s93, %s95
      %p102 = scmp.eq.s32.totalorder %s22, 1
      %p103 = por %p101, %p102
      %p104 = scmp.ne.s32.totalorder %s95, %s96
      %p105 = scmp.eq.s32.totalorder %s22, 0
      %p106 = por %p104, %p105
      %p107 = scmp.ne.s32.totalorder %s95, %s96
      %p108 = scmp.eq.s32.totalorder %s23, 1
      %p109 = por %p107, %p108
      %p111 = scmp.ne.s32.totalorder %s96, %s110
      %p112 = scmp.eq.s32.totalorder %s23, 0
      %p113 = por %p111, %p112
      %s115 = sadd.s32 %s114, 1
      %p118 = scmp.eq.s32.totalorder %s17, 1
      %p119 = scmp.ne.s32.totalorder %s114, %s116
      %p120 = scmp.eq.s32.totalorder %s17, 0
      %p121 = por %p119, %p120
      %p122 = scmp.ne.s32.totalorder %s114, %s116
      %p123 = scmp.eq.s32.totalorder %s22, 1
      %p124 = por %p122, %p123
      %p125 = scmp.ne.s32.totalorder %s116, %s117
      %p126 = scmp.eq.s32.totalorder %s22, 0
      %p127 = por %p125, %p126
      %p128 = scmp.ne.s32.totalorder %s116, %s117
      %p129 = scmp.eq.s32.totalorder %s23, 1
      %p130 = por %p128, %p129
      %p132 = scmp.ne.s32.totalorder %s117, %s131
      %p133 = scmp.eq.s32.totalorder %s23, 0
      %p134 = por %p132, %p133
      %s136 = sadd.s32 %s135, 1
      %p139 = scmp.eq.s32.totalorder %s17, 1
      %p140 = scmp.ne.s32.totalorder %s135, %s137
      %p141 = scmp.eq.s32.totalorder %s17, 0
      %p142 = por %p140, %p141
      %p143 = scmp.ne.s32.totalorder %s135, %s137
      %p144 = scmp.eq.s32.totalorder %s22, 1
      %p145 = por %p143, %p144
      %p146 = scmp.ne.s32.totalorder %s137, %s138
      %p147 = scmp.eq.s32.totalorder %s22, 0
      %p148 = por %p146, %p147
      %p149 = scmp.ne.s32.totalorder %s137, %s138
      %p150 = scmp.eq.s32.totalorder %s23, 1
      %p151 = por %p149, %p150
      %p153 = scmp.ne.s32.totalorder %s138, %s152
      %p154 = scmp.eq.s32.totalorder %s23, 0
      %p155 = por %p153, %p154
      %s157 = sadd.s32 %s156, 1
      %p160 = scmp.eq.s32.totalorder %s17, 1
      %p161 = scmp.ne.s32.totalorder %s156, %s158
      %p162 = scmp.eq.s32.totalorder %s17, 0
      %p163 = por %p161, %p162
      %p164 = scmp.ne.s32.totalorder %s156, %s158
      %p165 = scmp.eq.s32.totalorder %s22, 1
      %p166 = por %p164, %p165
      %p167 = scmp.ne.s32.totalorder %s158, %s159
      %p168 = scmp.eq.s32.totalorder %s22, 0
      %p169 = por %p167, %p168
      %p170 = scmp.ne.s32.totalorder %s158, %s159
      %p171 = scmp.eq.s32.totalorder %s23, 1
      %p172 = por %p170, %p171
      %p174 = scmp.ne.s32.totalorder %s159, %s173
      %p175 = scmp.eq.s32.totalorder %s23, 0
      %p176 = por %p174, %p175
      %s178 = sadd.s32 %s177, 1
      %p181 = scmp.eq.s32.totalorder %s17, 1
      %p182 = scmp.ne.s32.totalorder %s177, %s179
      %p183 = scmp.eq.s32.totalorder %s17, 0
      %p184 = por %p182, %p183
      %p185 = scmp.ne.s32.totalorder %s177, %s179
      %p186 = scmp.eq.s32.totalorder %s22, 1
      %p187 = por %p185, %p186
      %p188 = scmp.ne.s32.totalorder %s179, %s180
      %p189 = scmp.eq.s32.totalorder %s22, 0
      %p190 = por %p188, %p189
      %p191 = scmp.ne.s32.totalorder %s179, %s180
      %p192 = scmp.eq.s32.totalorder %s23, 1
      %p193 = por %p191, %p192
      %p195 = scmp.ne.s32.totalorder %s180, %s194
      %p196 = scmp.eq.s32.totalorder %s23, 0
      %p197 = por %p195, %p196
      %s198 = ssub.s32 %s17, %s24
      %p199 = scmp.eq.s32.totalorder %s198, 0
      %s201 = sadd.s32 %s200, 1
      %s202 = scalar_select %p199, %s200, %s201
      %p205 = pneg %p199
      %p206 = scmp.eq.s32.totalorder %s17, 1
      %p207 = por %p205, %p206
      %p208 = scmp.ne.s32.totalorder %s200, %s203
      %p209 = scmp.eq.s32.totalorder %s17, 0
      %p210 = por %p208, %p209
      %p211 = scmp.ne.s32.totalorder %s200, %s203
      %p212 = scmp.eq.s32.totalorder %s22, 1
      %p213 = por %p211, %p212
      %p214 = scmp.ne.s32.totalorder %s203, %s204
      %p215 = scmp.eq.s32.totalorder %s22, 0
      %p216 = por %p214, %p215
      %p217 = scmp.ne.s32.totalorder %s203, %s204
      %p218 = scmp.eq.s32.totalorder %s23, 1
      %p219 = por %p217, %p218
      %p221 = scmp.ne.s32.totalorder %s204, %s220
      %p222 = scmp.eq.s32.totalorder %s23, 0
      %p223 = por %p221, %p222
      %p224 = scmp.le.s32.totalorder 1, %s17
      %p225 = scmp.lt.s32.totalorder %s17, 3
      %p226 = pnand %p224, %p225
      %p227 = pneg %p226
      // Predicated region
      $region9: #{custom_densenet_forward.1} parent=5 // pred_check
        _
      $region10: #{custom_densenet_forward.1} parent=5 // pred_check_branch
        %229 = sbr.rel (%p226) target = $region12
      $region11: #{custom_densenet_forward.1} parent=5 // pred_region
        %s230 = ssub.s32 %s17, 1
        // Predicated region
        $region13: #{custom_densenet_forward.1} parent=11 // pred_check
          %p231 = pneg %p64
        $region14: #{custom_densenet_forward.1} parent=11 // pred_check_branch
          %233 = sbr.rel (%p231) target = $region16
        $region15: #{custom_densenet_forward.1} parent=11 // pred_region
          _
        $region16: #{custom_densenet_forward.1} parent=11 // pred_fallthru
          _
        // Predicated region
        $region17: #{custom_densenet_forward.1} parent=11 // pred_check
          %p234 = pneg %p85
        $region18: #{custom_densenet_forward.1} parent=11 // pred_check_branch
          %236 = sbr.rel (%p234) target = $region20
        $region19: #{custom_densenet_forward.1} parent=11 // pred_region
          _
        $region20: #{custom_densenet_forward.1} parent=11 // pred_fallthru
          _
        // Predicated region
        $region21: #{custom_densenet_forward.1} parent=11 // pred_check
          %p237 = pneg %p106
        $region22: #{custom_densenet_forward.1} parent=11 // pred_check_branch
          %239 = sbr.rel (%p237) target = $region24
        $region23: #{custom_densenet_forward.1} parent=11 // pred_region
          _
        $region24: #{custom_densenet_forward.1} parent=11 // pred_fallthru
          _
        // Predicated region
        $region25: #{custom_densenet_forward.1} parent=11 // pred_check
          %p240 = pneg %p127
        $region26: #{custom_densenet_forward.1} parent=11 // pred_check_branch
          %242 = sbr.rel (%p240) target = $region28
        $region27: #{custom_densenet_forward.1} parent=11 // pred_region
          _
        $region28: #{custom_densenet_forward.1} parent=11 // pred_fallthru
          _
        // Predicated region
        $region29: #{custom_densenet_forward.1} parent=11 // pred_check
          %p243 = pneg %p148
        $region30: #{custom_densenet_forward.1} parent=11 // pred_check_branch
          %245 = sbr.rel (%p243) target = $region32
        $region31: #{custom_densenet_forward.1} parent=11 // pred_region
          _
        $region32: #{custom_densenet_forward.1} parent=11 // pred_fallthru
          _
        // Predicated region
        $region33: #{custom_densenet_forward.1} parent=11 // pred_check
          %p246 = pneg %p169
        $region34: #{custom_densenet_forward.1} parent=11 // pred_check_branch
          %248 = sbr.rel (%p246) target = $region36
        $region35: #{custom_densenet_forward.1} parent=11 // pred_region
          _
        $region36: #{custom_densenet_forward.1} parent=11 // pred_fallthru
          _
        // Predicated region
        $region37: #{custom_densenet_forward.1} parent=11 // pred_check
          %p249 = pneg %p190
        $region38: #{custom_densenet_forward.1} parent=11 // pred_check_branch
          %251 = sbr.rel (%p249) target = $region40
        $region39: #{custom_densenet_forward.1} parent=11 // pred_region
          _
        $region40: #{custom_densenet_forward.1} parent=11 // pred_fallthru
          _
      $region12: #{custom_densenet_forward.1} parent=5 // pred_fallthru
        _
      %p252 = scmp.lt.s32.totalorder %s17, 2
      // Predicated region
      $region41: #{custom_densenet_forward.1} parent=5 // pred_check
        %p253 = pneg %p252
      $region42: #{custom_densenet_forward.1} parent=5 // pred_check_branch
        %255 = sbr.rel (%p253) target = $region44
      $region43: #{custom_densenet_forward.1} parent=5 // pred_region
        // Predicated region
        $region45: #{custom_densenet_forward.1} parent=43 // pred_check
          %p256 = pneg %p37
        $region46: #{custom_densenet_forward.1} parent=43 // pred_check_branch
          %258 = sbr.rel (%p256) target = $region48
        $region47: #{custom_densenet_forward.1} parent=43 // pred_region
          %p259 = scmp.lt.s32.totalorder %s17, 1
          %s260 = scalar_select %p259, %s17, 1
          %s261 = smul.addr %s260, 32
          %s262 = smul.addr %s261, 4
          %s263 = scalar_lea.vmem %s0, %s262
        $region48: #{custom_densenet_forward.1} parent=43 // pred_fallthru
          _
      $region44: #{custom_densenet_forward.1} parent=5 // pred_fallthru
        _
      %p264 = scmp.le.s32.totalorder 1, %s17
      %p265 = scmp.lt.s32.totalorder %s17, 3
      %p266 = pnand %p264, %p265
      %p267 = pneg %p266
      // Predicated region
      $region49: #{custom_densenet_forward.1} parent=5 // pred_check
        _
      $region50: #{custom_densenet_forward.1} parent=5 // pred_check_branch
        %269 = sbr.rel (%p266) target = $region52
      $region51: #{custom_densenet_forward.1} parent=5 // pred_region
        %s270 = ssub.s32 %s17, 1
        %p271 = scmp.lt.s32.totalorder %s22, 1
        %s272 = scalar_select %p271, %s22, 1
        %s273 = smul.addr %s272, 32
        %s274 = smul.addr %s273, 4
        %s275 = scalar_lea.vmem %s0, %s274
        %p276 = pneg %p43
        %p277 = pneg %p40
        %p278 = pneg %p64
        %p279 = pneg %p61
        %p280 = pneg %p85
        %p281 = pneg %p82
        %p282 = pneg %p106
        %p283 = pneg %p103
        %p284 = pneg %p127
        %p285 = pneg %p124
        %p286 = pneg %p148
        %p287 = pneg %p145
        %p288 = pneg %p169
        %p289 = pneg %p166
        %p290 = pneg %p190
        %p291 = pneg %p187
        %p292 = pneg %p216
        %p293 = pneg %p213
        %s294 = sand.u32 %s203, 1
        %s295 = scalar_lea.sflag [#allocation5], %s294
        %s296 = sand.u32 %s203, 1
        %s297 = scalar_lea.vmem [#allocation4], %s296
        %p298 = scmp.lt.s32.totalorder %s22, 1
        %s299 = scalar_select %p298, %s22, 1
        %s300 = smul.addr %s299, 32
        %s301 = smul.addr %s300, 4
        %s302 = scalar_lea.vmem %s0, %s301
        %v304 = vld [vmem:[%s302] sm:$0xf]
        %v305 = vld [vmem:[%s302 + $0x4] sm:$0xf]
        %v306 = vld [vmem:[%s302 + $0x8] sm:$0xf]
        %v307 = vld [vmem:[%s302 + $0xc] sm:$0xf]
        %v308 = vld [vmem:[%s302 + $0x10] sm:$0xf]
        %v309 = vld [vmem:[%s302 + $0x14] sm:$0xf]
        %v310 = vld [vmem:[%s302 + $0x18] sm:$0xf]
        %v311 = vld [vmem:[%s302 + $0x1c] sm:$0xf]
        %v312 = vld [vmem:[%s302 + $0x20] sm:$0xf]
        %v313 = vld [vmem:[%s302 + $0x24] sm:$0xf]
        %v314 = vld [vmem:[%s302 + $0x28] sm:$0xf]
        %v315 = vld [vmem:[%s302 + $0x2c] sm:$0xf]
        %v316 = vld [vmem:[%s302 + $0x30] sm:$0xf]
        %v317 = vld [vmem:[%s302 + $0x34] sm:$0xf]
        %v318 = vld [vmem:[%s302 + $0x38] sm:$0xf]
        %v319 = vld [vmem:[%s302 + $0x3c] sm:$0xf]
        %v320 = vld [vmem:[%s302 + $0x40] sm:$0xf]
        %v321 = vld [vmem:[%s302 + $0x44] sm:$0xf]
        %v322 = vld [vmem:[%s302 + $0x48] sm:$0xf]
        %v323 = vld [vmem:[%s302 + $0x4c] sm:$0xf]
        %v324 = vld [vmem:[%s302 + $0x50] sm:$0xf]
        %v325 = vld [vmem:[%s302 + $0x54] sm:$0xf]
        %v326 = vld [vmem:[%s302 + $0x58] sm:$0xf]
        %v327 = vld [vmem:[%s302 + $0x5c] sm:$0xf]
        %v328 = vld [vmem:[%s302 + $0x60] sm:$0xf]
        %v329 = vld [vmem:[%s302 + $0x64] sm:$0xf]
        %v330 = vld [vmem:[%s302 + $0x68] sm:$0xf]
        %v331 = vld [vmem:[%s302 + $0x6c] sm:$0xf]
        %v332 = vld [vmem:[%s302 + $0x70] sm:$0xf]
        %v333 = vld [vmem:[%s302 + $0x74] sm:$0xf]
        %v334 = vld [vmem:[%s302 + $0x78] sm:$0xf]
        %v335 = vld [vmem:[%s302 + $0x7c] sm:$0xf]
        %v336 = vld [vmem:[%s1] sm:$0xf]
        %v337 = vld [vmem:[%s1 + $0x4] sm:$0xf]
        %v338 = vld [vmem:[%s1 + $0x8] sm:$0xf]
        %v339 = vld [vmem:[%s1 + $0xc] sm:$0xf]
        %v340 = vld [vmem:[%s1 + $0x10] sm:$0xf]
        %v341 = vld [vmem:[%s1 + $0x14] sm:$0xf]
        %v342 = vld [vmem:[%s1 + $0x18] sm:$0xf]
        %v343 = vld [vmem:[%s1 + $0x1c] sm:$0xf]
        %v344 = vld [vmem:[%s1 + $0x20] sm:$0xf]
        %v345 = vld [vmem:[%s1 + $0x24] sm:$0xf]
        %v346 = vld [vmem:[%s1 + $0x28] sm:$0xf]
        %v347 = vld [vmem:[%s1 + $0x2c] sm:$0xf]
        %v348 = vld [vmem:[%s1 + $0x30] sm:$0xf]
        %v349 = vld [vmem:[%s1 + $0x34] sm:$0xf]
        %v350 = vld [vmem:[%s1 + $0x38] sm:$0xf]
        %v351 = vld [vmem:[%s1 + $0x3c] sm:$0xf]
        %v352 = vld [vmem:[%s2] sm:$0x1]
        %v354 = vlaneseq
        %v355 = vshrl.u32 %v354, 7
        %v356 = vsub.s32 0, %v355
        %v357 = vrot.slane %v352, %v356
        %v391 = vunpack.c.l.b16 %v304
        %v392 = vunpack.c.l.b16 %v305
        %v393 = vunpack.c.l.b16 %v306
        %v394 = vunpack.c.l.b16 %v307
        %v395 = vunpack.c.l.b16 %v308
        %v396 = vunpack.c.l.b16 %v309
        %v397 = vunpack.c.l.b16 %v310
        %v398 = vunpack.c.l.b16 %v311
        %v399 = vunpack.c.l.b16 %v312
        %v400 = vunpack.c.l.b16 %v313
        %v401 = vunpack.c.l.b16 %v314
        %v402 = vunpack.c.l.b16 %v315
        %v403 = vunpack.c.l.b16 %v316
        %v404 = vunpack.c.l.b16 %v317
        %v405 = vunpack.c.l.b16 %v318
        %v406 = vunpack.c.l.b16 %v319
        %v407 = vunpack.c.l.b16 %v320
        %v408 = vunpack.c.l.b16 %v321
        %v409 = vunpack.c.l.b16 %v322
        %v410 = vunpack.c.l.b16 %v323
        %v411 = vunpack.c.l.b16 %v324
        %v412 = vunpack.c.l.b16 %v325
        %v413 = vunpack.c.l.b16 %v326
        %v414 = vunpack.c.l.b16 %v327
        %v415 = vunpack.c.l.b16 %v328
        %v416 = vunpack.c.l.b16 %v329
        %v417 = vunpack.c.l.b16 %v330
        %v418 = vunpack.c.l.b16 %v331
        %v419 = vunpack.c.l.b16 %v332
        %v420 = vunpack.c.l.b16 %v333
        %v421 = vunpack.c.l.b16 %v334
        %v422 = vunpack.c.l.b16 %v335
        %v423 = vpack.c.b16 %v392, %v391
        %v424 = vpack.c.b16 %v394, %v393
        %v425 = vpack.c.b16 %v396, %v395
        %v426 = vpack.c.b16 %v398, %v397
        %v427 = vpack.c.b16 %v400, %v399
        %v428 = vpack.c.b16 %v402, %v401
        %v429 = vpack.c.b16 %v404, %v403
        %v430 = vpack.c.b16 %v406, %v405
        %v431 = vpack.c.b16 %v408, %v407
        %v432 = vpack.c.b16 %v410, %v409
        %v433 = vpack.c.b16 %v412, %v411
        %v434 = vpack.c.b16 %v414, %v413
        %v435 = vpack.c.b16 %v416, %v415
        %v436 = vpack.c.b16 %v418, %v417
        %v437 = vpack.c.b16 %v420, %v419
        %v438 = vpack.c.b16 %v422, %v421
        %v471 = vunpack.c.l.b16 %v336
        %v472 = vunpack.c.l.b16 %v337
        %v473 = vunpack.c.l.b16 %v338
        %v474 = vunpack.c.l.b16 %v339
        %v475 = vunpack.c.l.b16 %v340
        %v476 = vunpack.c.l.b16 %v341
        %v477 = vunpack.c.l.b16 %v342
        %v478 = vunpack.c.l.b16 %v343
        %v479 = vunpack.c.l.b16 %v344
        %v480 = vunpack.c.l.b16 %v345
        %v481 = vunpack.c.l.b16 %v346
        %v482 = vunpack.c.l.b16 %v347
        %v483 = vunpack.c.l.b16 %v348
        %v484 = vunpack.c.l.b16 %v349
        %v485 = vunpack.c.l.b16 %v350
        %v486 = vunpack.c.l.b16 %v351
        %v487 = vpack.c.b16 %v472, %v471
        %v488 = vpack.c.b16 %v474, %v473
        %v489 = vpack.c.b16 %v476, %v475
        %v490 = vpack.c.b16 %v478, %v477
        %v491 = vpack.c.b16 %v480, %v479
        %v492 = vpack.c.b16 %v482, %v481
        %v493 = vpack.c.b16 %v484, %v483
        %v494 = vpack.c.b16 %v486, %v485
        %503 = vmatprep.subr.bf16.mxu0 0
        %504 = vmatpush1.bf16.msra.mxu0 %v487
        %505 = vmatprep.subr.bf16.mxu0 0
        %506 = vmatpush1.bf16.msra.mxu0 %v488
        %507 = vmatprep.subr.bf16.mxu0 0
        %508 = vmatpush1.bf16.msra.mxu0 %v489
        %509 = vmatprep.subr.bf16.mxu0 0
        %510 = vmatpush1.bf16.msra.mxu0 %v490
        %511 = vmatprep.subr.bf16.mxu0 0
        %512 = vmatpush1.bf16.msra.mxu0 %v491
        %513 = vmatprep.subr.bf16.mxu0 0
        %514 = vmatpush1.bf16.msra.mxu0 %v492
        %515 = vmatprep.subr.bf16.mxu0 0
        %516 = vmatpush1.bf16.msra.mxu0 %v493
        %517 = vmatprep.subr.bf16.mxu0 0
        %518 = vmatpush1.bf16.msra.mxu0 %v494
        %519 = vmatprep.subr.bf16.mxu0 0
        %520 = vmatpush1.bf16.msra.mxu0 0
        %521 = vmatprep.subr.bf16.mxu0 0
        %522 = vmatpush1.bf16.msra.mxu0 0
        %523 = vmatprep.subr.bf16.mxu0 0
        %524 = vmatpush1.bf16.msra.mxu0 0
        %525 = vmatprep.subr.bf16.mxu0 0
        %526 = vmatpush1.bf16.msra.mxu0 0
        %527 = vmatprep.subr.bf16.mxu0 0
        %528 = vmatpush1.bf16.msra.mxu0 0
        %529 = vmatprep.subr.bf16.mxu0 0
        %530 = vmatpush1.bf16.msra.mxu0 0
        %531 = vmatprep.subr.bf16.mxu0 0
        %532 = vmatpush1.bf16.msra.mxu0 0
        %533 = vmatprep.subr.bf16.mxu0 0
        %534 = vmatpush1.bf16.msra.mxu0 0
        %535 = vmatprep.mubr.bf16.mxu0 0
        %536 = vmatmul.mubr.bf16.gmra.mrb[0].mxu0 %v423
        %v537 = vpop.f32.mrb[0].mxu0
        %v538 = vadd.f32 %v357, %v537
        %v539 = vpop.f32.mrb[0].mxu0
        %v540 = vpop.f32.mrb[0].mxu0
        %v541 = vadd.f32 %v357, %v540
        %v542 = vpop.f32.mrb[0].mxu0
        %543 = vmatprep.mubr.bf16.mxu0 0
        %544 = vmatmul.mubr.bf16.gmra.mrb[0].mxu0 %v424
        %v545 = vpop.f32.mrb[0].mxu0
        %v546 = vadd.f32 %v357, %v545
        %v547 = vpop.f32.mrb[0].mxu0
        %v548 = vpop.f32.mrb[0].mxu0
        %v549 = vadd.f32 %v357, %v548
        %v550 = vpop.f32.mrb[0].mxu0
        %551 = vmatprep.mubr.bf16.mxu0 0
        %552 = vmatmul.mubr.bf16.gmra.mrb[0].mxu0 %v425
        %v553 = vpop.f32.mrb[0].mxu0
        %v554 = vadd.f32 %v357, %v553
        %v555 = vpop.f32.mrb[0].mxu0
        %v556 = vpop.f32.mrb[0].mxu0
        %v557 = vadd.f32 %v357, %v556
        %v558 = vpop.f32.mrb[0].mxu0
        %559 = vmatprep.mubr.bf16.mxu0 0
        %560 = vmatmul.mubr.bf16.gmra.mrb[0].mxu0 %v426
        %v561 = vpop.f32.mrb[0].mxu0
        %v562 = vadd.f32 %v357, %v561
        %v563 = vpop.f32.mrb[0].mxu0
        %v564 = vpop.f32.mrb[0].mxu0
        %v565 = vadd.f32 %v357, %v564
        %v566 = vpop.f32.mrb[0].mxu0
        %567 = vmatprep.mubr.bf16.mxu0 0
        %568 = vmatmul.mubr.bf16.gmra.mrb[0].mxu0 %v427
        %v569 = vpop.f32.mrb[0].mxu0
        %v570 = vadd.f32 %v357, %v569
        %v571 = vpop.f32.mrb[0].mxu0
        %v572 = vpop.f32.mrb[0].mxu0
        %v573 = vadd.f32 %v357, %v572
        %v574 = vpop.f32.mrb[0].mxu0
        %575 = vmatprep.mubr.bf16.mxu0 0
        %576 = vmatmul.mubr.bf16.gmra.mrb[0].mxu0 %v428
        %v577 = vpop.f32.mrb[0].mxu0
        %v578 = vadd.f32 %v357, %v577
        %v579 = vpop.f32.mrb[0].mxu0
        %v580 = vpop.f32.mrb[0].mxu0
        %v581 = vadd.f32 %v357, %v580
        %v582 = vpop.f32.mrb[0].mxu0
        %583 = vmatprep.mubr.bf16.mxu0 0
        %584 = vmatmul.mubr.bf16.gmra.mrb[0].mxu0 %v429
        %v585 = vpop.f32.mrb[0].mxu0
        %v586 = vadd.f32 %v357, %v585
        %v587 = vpop.f32.mrb[0].mxu0
        %v588 = vpop.f32.mrb[0].mxu0
        %v589 = vadd.f32 %v357, %v588
        %v590 = vpop.f32.mrb[0].mxu0
        %591 = vmatprep.mubr.bf16.mxu0 0
        %592 = vmatmul.mubr.bf16.gmra.mrb[0].mxu0 %v430
        %v593 = vpop.f32.mrb[0].mxu0
        %v594 = vadd.f32 %v357, %v593
        %v595 = vpop.f32.mrb[0].mxu0
        %v596 = vpop.f32.mrb[0].mxu0
        %v597 = vadd.f32 %v357, %v596
        %v598 = vpop.f32.mrb[0].mxu0
        %599 = vmatprep.mubr.bf16.mxu0 0
        %600 = vmatmul.mubr.bf16.gmra.mrb[0].mxu0 %v431
        %v601 = vpop.f32.mrb[0].mxu0
        %v602 = vadd.f32 %v357, %v601
        %v603 = vpop.f32.mrb[0].mxu0
        %v604 = vpop.f32.mrb[0].mxu0
        %v605 = vadd.f32 %v357, %v604
        %v606 = vpop.f32.mrb[0].mxu0
        %607 = vmatprep.mubr.bf16.mxu0 0
        %608 = vmatmul.mubr.bf16.gmra.mrb[0].mxu0 %v432
        %v609 = vpop.f32.mrb[0].mxu0
        %v610 = vadd.f32 %v357, %v609
        %v611 = vpop.f32.mrb[0].mxu0
        %v612 = vpop.f32.mrb[0].mxu0
        %v613 = vadd.f32 %v357, %v612
        %v614 = vpop.f32.mrb[0].mxu0
        %615 = vmatprep.mubr.bf16.mxu0 0
        %616 = vmatmul.mubr.bf16.gmra.mrb[0].mxu0 %v433
        %v617 = vpop.f32.mrb[0].mxu0
        %v618 = vadd.f32 %v357, %v617
        %v619 = vpop.f32.mrb[0].mxu0
        %v620 = vpop.f32.mrb[0].mxu0
        %v621 = vadd.f32 %v357, %v620
        %v622 = vpop.f32.mrb[0].mxu0
        %623 = vmatprep.mubr.bf16.mxu0 0
        %624 = vmatmul.mubr.bf16.gmra.mrb[0].mxu0 %v434
        %v625 = vpop.f32.mrb[0].mxu0
        %v626 = vadd.f32 %v357, %v625
        %v627 = vpop.f32.mrb[0].mxu0
        %v628 = vpop.f32.mrb[0].mxu0
        %v629 = vadd.f32 %v357, %v628
        %v630 = vpop.f32.mrb[0].mxu0
        %631 = vmatprep.mubr.bf16.mxu0 0
        %632 = vmatmul.mubr.bf16.gmra.mrb[0].mxu0 %v435
        %v633 = vpop.f32.mrb[0].mxu0
        %v634 = vadd.f32 %v357, %v633
        %v635 = vpop.f32.mrb[0].mxu0
        %v636 = vpop.f32.mrb[0].mxu0
        %v637 = vadd.f32 %v357, %v636
        %v638 = vpop.f32.mrb[0].mxu0
        %639 = vmatprep.mubr.bf16.mxu0 0
        %640 = vmatmul.mubr.bf16.gmra.mrb[0].mxu0 %v436
        %v641 = vpop.f32.mrb[0].mxu0
        %v642 = vadd.f32 %v357, %v641
        %v643 = vpop.f32.mrb[0].mxu0
        %v644 = vpop.f32.mrb[0].mxu0
        %v645 = vadd.f32 %v357, %v644
        %v646 = vpop.f32.mrb[0].mxu0
        %647 = vmatprep.mubr.bf16.mxu0 0
        %648 = vmatmul.mubr.bf16.gmra.mrb[0].mxu0 %v437
        %v649 = vpop.f32.mrb[0].mxu0
        %v650 = vadd.f32 %v357, %v649
        %v651 = vpop.f32.mrb[0].mxu0
        %v652 = vpop.f32.mrb[0].mxu0
        %v653 = vadd.f32 %v357, %v652
        %v654 = vpop.f32.mrb[0].mxu0
        %655 = vmatprep.mubr.bf16.mxu0 0
        %656 = vmatmul.mubr.bf16.gmra.mrb[0].mxu0 %v438
        %v657 = vpop.f32.mrb[0].mxu0
        %v658 = vadd.f32 %v357, %v657
        %v659 = vpop.f32.mrb[0].mxu0
        %v660 = vpop.f32.mrb[0].mxu0
        %v661 = vadd.f32 %v357, %v660
        %v662 = vpop.f32.mrb[0].mxu0
        %663 = vdwg.mxu0
        %v664 = vmax.f32 %v538, 0.0
        %v665 = vmax.f32 %v541, 0.0
        %v666 = vmax.f32 %v546, 0.0
        %v667 = vmax.f32 %v549, 0.0
        %v668 = vmax.f32 %v554, 0.0
        %v669 = vmax.f32 %v557, 0.0
        %v670 = vmax.f32 %v562, 0.0
        %v671 = vmax.f32 %v565, 0.0
        %v672 = vmax.f32 %v570, 0.0
        %v673 = vmax.f32 %v573, 0.0
        %v674 = vmax.f32 %v578, 0.0
        %v675 = vmax.f32 %v581, 0.0
        %v676 = vmax.f32 %v586, 0.0
        %v677 = vmax.f32 %v589, 0.0
        %v678 = vmax.f32 %v594, 0.0
        %v679 = vmax.f32 %v597, 0.0
        %v680 = vmax.f32 %v602, 0.0
        %v681 = vmax.f32 %v605, 0.0
        %v682 = vmax.f32 %v610, 0.0
        %v683 = vmax.f32 %v613, 0.0
        %v684 = vmax.f32 %v618, 0.0
        %v685 = vmax.f32 %v621, 0.0
        %v686 = vmax.f32 %v626, 0.0
        %v687 = vmax.f32 %v629, 0.0
        %v688 = vmax.f32 %v634, 0.0
        %v689 = vmax.f32 %v637, 0.0
        %v690 = vmax.f32 %v642, 0.0
        %v691 = vmax.f32 %v645, 0.0
        %v692 = vmax.f32 %v650, 0.0
        %v693 = vmax.f32 %v653, 0.0
        %v694 = vmax.f32 %v658, 0.0
        %v695 = vmax.f32 %v661, 0.0
        %v728 = vcombine.high %v664, %v664
        %v730 = vunpack.c.l.s4 1983009808
        %v731 = vunpack.c.0.s8 %v730
        %v732 = vlaneseq
        %v733 = vshrl.u32 %v732, 7
        %v734 = vsub.s32 %v731, %v733
        %v735 = vrot.slane %v664, %v734
        %v737 = vunpack.c.l.s4 1983009808
        %v738 = vunpack.c.0.s8 %v737
        %v739 = vlaneseq
        %v740 = vshrl.u32 %v739, 7
        %v741 = vsub.s32 %v738, %v740
        %v742 = vrot.slane %v728, %v741
        %v743 = vcombine.high %v735, %v735
        %v744 = vcombine.high %v742, %v742
        %v745 = vcombine.high %v665, %v665
        %v747 = vunpack.c.l.s4 1983009808
        %v748 = vunpack.c.0.s8 %v747
        %v749 = vlaneseq
        %v750 = vshrl.u32 %v749, 7
        %v751 = vsub.s32 %v748, %v750
        %v752 = vrot.slane %v665, %v751
        %v754 = vunpack.c.l.s4 1983009808
        %v755 = vunpack.c.0.s8 %v754
        %v756 = vlaneseq
        %v757 = vshrl.u32 %v756, 7
        %v758 = vsub.s32 %v755, %v757
        %v759 = vrot.slane %v745, %v758
        %v760 = vcombine.high %v752, %v752
        %v761 = vcombine.high %v759, %v759
        %v762 = vcombine.high %v666, %v666
        %v764 = vunpack.c.l.s4 1983009808
        %v765 = vunpack.c.0.s8 %v764
        %v766 = vlaneseq
        %v767 = vshrl.u32 %v766, 7
        %v768 = vsub.s32 %v765, %v767
        %v769 = vrot.slane %v666, %v768
        %v771 = vunpack.c.l.s4 1983009808
        %v772 = vunpack.c.0.s8 %v771
        %v773 = vlaneseq
        %v774 = vshrl.u32 %v773, 7
        %v775 = vsub.s32 %v772, %v774
        %v776 = vrot.slane %v762, %v775
        %v777 = vcombine.high %v769, %v769
        %v778 = vcombine.high %v776, %v776
        %v779 = vcombine.high %v667, %v667
        %v781 = vunpack.c.l.s4 1983009808
        %v782 = vunpack.c.0.s8 %v781
        %v783 = vlaneseq
        %v784 = vshrl.u32 %v783, 7
        %v785 = vsub.s32 %v782, %v784
        %v786 = vrot.slane %v667, %v785
        %v788 = vunpack.c.l.s4 1983009808
        %v789 = vunpack.c.0.s8 %v788
        %v790 = vlaneseq
        %v791 = vshrl.u32 %v790, 7
        %v792 = vsub.s32 %v789, %v791
        %v793 = vrot.slane %v779, %v792
        %v794 = vcombine.high %v786, %v786
        %v795 = vcombine.high %v793, %v793
        %v796 = vcombine.high %v668, %v668
        %v798 = vunpack.c.l.s4 1983009808
        %v799 = vunpack.c.0.s8 %v798
        %v800 = vlaneseq
        %v801 = vshrl.u32 %v800, 7
        %v802 = vsub.s32 %v799, %v801
        %v803 = vrot.slane %v668, %v802
        %v805 = vunpack.c.l.s4 1983009808
        %v806 = vunpack.c.0.s8 %v805
        %v807 = vlaneseq
        %v808 = vshrl.u32 %v807, 7
        %v809 = vsub.s32 %v806, %v808
        %v810 = vrot.slane %v796, %v809
        %v811 = vcombine.high %v803, %v803
        %v812 = vcombine.high %v810, %v810
        %v813 = vcombine.high %v669, %v669
        %v815 = vunpack.c.l.s4 1983009808
        %v816 = vunpack.c.0.s8 %v815
        %v817 = vlaneseq
        %v818 = vshrl.u32 %v817, 7
        %v819 = vsub.s32 %v816, %v818
        %v820 = vrot.slane %v669, %v819
        %v822 = vunpack.c.l.s4 1983009808
        %v823 = vunpack.c.0.s8 %v822
        %v824 = vlaneseq
        %v825 = vshrl.u32 %v824, 7
        %v826 = vsub.s32 %v823, %v825
        %v827 = vrot.slane %v813, %v826
        %v828 = vcombine.high %v820, %v820
        %v829 = vcombine.high %v827, %v827
        %v830 = vcombine.high %v670, %v670
        %v832 = vunpack.c.l.s4 1983009808
        %v833 = vunpack.c.0.s8 %v832
        %v834 = vlaneseq
        %v835 = vshrl.u32 %v834, 7
        %v836 = vsub.s32 %v833, %v835
        %v837 = vrot.slane %v670, %v836
        %v839 = vunpack.c.l.s4 1983009808
        %v840 = vunpack.c.0.s8 %v839
        %v841 = vlaneseq
        %v842 = vshrl.u32 %v841, 7
        %v843 = vsub.s32 %v840, %v842
        %v844 = vrot.slane %v830, %v843
        %v845 = vcombine.high %v837, %v837
        %v846 = vcombine.high %v844, %v844
        %v847 = vcombine.high %v671, %v671
        %v849 = vunpack.c.l.s4 1983009808
        %v850 = vunpack.c.0.s8 %v849
        %v851 = vlaneseq
        %v852 = vshrl.u32 %v851, 7
        %v853 = vsub.s32 %v850, %v852
        %v854 = vrot.slane %v671, %v853
        %v856 = vunpack.c.l.s4 1983009808
        %v857 = vunpack.c.0.s8 %v856
        %v858 = vlaneseq
        %v859 = vshrl.u32 %v858, 7
        %v860 = vsub.s32 %v857, %v859
        %v861 = vrot.slane %v847, %v860
        %v862 = vcombine.high %v854, %v854
        %v863 = vcombine.high %v861, %v861
        %v864 = vcombine.high %v672, %v672
        %v866 = vunpack.c.l.s4 1983009808
        %v867 = vunpack.c.0.s8 %v866
        %v868 = vlaneseq
        %v869 = vshrl.u32 %v868, 7
        %v870 = vsub.s32 %v867, %v869
        %v871 = vrot.slane %v672, %v870
        %v873 = vunpack.c.l.s4 1983009808
        %v874 = vunpack.c.0.s8 %v873
        %v875 = vlaneseq
        %v876 = vshrl.u32 %v875, 7
        %v877 = vsub.s32 %v874, %v876
        %v878 = vrot.slane %v864, %v877
        %v879 = vcombine.high %v871, %v871
        %v880 = vcombine.high %v878, %v878
        %v881 = vcombine.high %v673, %v673
        %v883 = vunpack.c.l.s4 1983009808
        %v884 = vunpack.c.0.s8 %v883
        %v885 = vlaneseq
        %v886 = vshrl.u32 %v885, 7
        %v887 = vsub.s32 %v884, %v886
        %v888 = vrot.slane %v673, %v887
        %v890 = vunpack.c.l.s4 1983009808
        %v891 = vunpack.c.0.s8 %v890
        %v892 = vlaneseq
        %v893 = vshrl.u32 %v892, 7
        %v894 = vsub.s32 %v891, %v893
        %v895 = vrot.slane %v881, %v894
        %v896 = vcombine.high %v888, %v888
        %v897 = vcombine.high %v895, %v895
        %v898 = vcombine.high %v674, %v674
        %v900 = vunpack.c.l.s4 1983009808
        %v901 = vunpack.c.0.s8 %v900
        %v902 = vlaneseq
        %v903 = vshrl.u32 %v902, 7
        %v904 = vsub.s32 %v901, %v903
        %v905 = vrot.slane %v674, %v904
        %v907 = vunpack.c.l.s4 1983009808
        %v908 = vunpack.c.0.s8 %v907
        %v909 = vlaneseq
        %v910 = vshrl.u32 %v909, 7
        %v911 = vsub.s32 %v908, %v910
        %v912 = vrot.slane %v898, %v911
        %v913 = vcombine.high %v905, %v905
        %v914 = vcombine.high %v912, %v912
        %v915 = vcombine.high %v675, %v675
        %v917 = vunpack.c.l.s4 1983009808
        %v918 = vunpack.c.0.s8 %v917
        %v919 = vlaneseq
        %v920 = vshrl.u32 %v919, 7
        %v921 = vsub.s32 %v918, %v920
        %v922 = vrot.slane %v675, %v921
        %v924 = vunpack.c.l.s4 1983009808
        %v925 = vunpack.c.0.s8 %v924
        %v926 = vlaneseq
        %v927 = vshrl.u32 %v926, 7
        %v928 = vsub.s32 %v925, %v927
        %v929 = vrot.slane %v915, %v928
        %v930 = vcombine.high %v922, %v922
        %v931 = vcombine.high %v929, %v929
        %v932 = vcombine.high %v676, %v676
        %v934 = vunpack.c.l.s4 1983009808
        %v935 = vunpack.c.0.s8 %v934
        %v936 = vlaneseq
        %v937 = vshrl.u32 %v936, 7
        %v938 = vsub.s32 %v935, %v937
        %v939 = vrot.slane %v676, %v938
        %v941 = vunpack.c.l.s4 1983009808
        %v942 = vunpack.c.0.s8 %v941
        %v943 = vlaneseq
        %v944 = vshrl.u32 %v943, 7
        %v945 = vsub.s32 %v942, %v944
        %v946 = vrot.slane %v932, %v945
        %v947 = vcombine.high %v939, %v939
        %v948 = vcombine.high %v946, %v946
        %v949 = vcombine.high %v677, %v677
        %v951 = vunpack.c.l.s4 1983009808
        %v952 = vunpack.c.0.s8 %v951
        %v953 = vlaneseq
        %v954 = vshrl.u32 %v953, 7
        %v955 = vsub.s32 %v952, %v954
        %v956 = vrot.slane %v677, %v955
        %v958 = vunpack.c.l.s4 1983009808
        %v959 = vunpack.c.0.s8 %v958
        %v960 = vlaneseq
        %v961 = vshrl.u32 %v960, 7
        %v962 = vsub.s32 %v959, %v961
        %v963 = vrot.slane %v949, %v962
        %v964 = vcombine.high %v956, %v956
        %v965 = vcombine.high %v963, %v963
        %v966 = vcombine.high %v678, %v678
        %v968 = vunpack.c.l.s4 1983009808
        %v969 = vunpack.c.0.s8 %v968
        %v970 = vlaneseq
        %v971 = vshrl.u32 %v970, 7
        %v972 = vsub.s32 %v969, %v971
        %v973 = vrot.slane %v678, %v972
        %v975 = vunpack.c.l.s4 1983009808
        %v976 = vunpack.c.0.s8 %v975
        %v977 = vlaneseq
        %v978 = vshrl.u32 %v977, 7
        %v979 = vsub.s32 %v976, %v978
        %v980 = vrot.slane %v966, %v979
        %v981 = vcombine.high %v973, %v973
        %v982 = vcombine.high %v980, %v980
        %v983 = vcombine.high %v679, %v679
        %v985 = vunpack.c.l.s4 1983009808
        %v986 = vunpack.c.0.s8 %v985
        %v987 = vlaneseq
        %v988 = vshrl.u32 %v987, 7
        %v989 = vsub.s32 %v986, %v988
        %v990 = vrot.slane %v679, %v989
        %v992 = vunpack.c.l.s4 1983009808
        %v993 = vunpack.c.0.s8 %v992
        %v994 = vlaneseq
        %v995 = vshrl.u32 %v994, 7
        %v996 = vsub.s32 %v993, %v995
        %v997 = vrot.slane %v983, %v996
        %v998 = vcombine.high %v990, %v990
        %v999 = vcombine.high %v997, %v997
        %v1000 = vcombine.high %v680, %v680
        %v1002 = vunpack.c.l.s4 1983009808
        %v1003 = vunpack.c.0.s8 %v1002
        %v1004 = vlaneseq
        %v1005 = vshrl.u32 %v1004, 7
        %v1006 = vsub.s32 %v1003, %v1005
        %v1007 = vrot.slane %v680, %v1006
        %v1009 = vunpack.c.l.s4 1983009808
        %v1010 = vunpack.c.0.s8 %v1009
        %v1011 = vlaneseq
        %v1012 = vshrl.u32 %v1011, 7
        %v1013 = vsub.s32 %v1010, %v1012
        %v1014 = vrot.slane %v1000, %v1013
        %v1015 = vcombine.high %v1007, %v1007
        %v1016 = vcombine.high %v1014, %v1014
        %v1017 = vcombine.high %v681, %v681
        %v1019 = vunpack.c.l.s4 1983009808
        %v1020 = vunpack.c.0.s8 %v1019
        %v1021 = vlaneseq
        %v1022 = vshrl.u32 %v1021, 7
        %v1023 = vsub.s32 %v1020, %v1022
        %v1024 = vrot.slane %v681, %v1023
        %v1026 = vunpack.c.l.s4 1983009808
        %v1027 = vunpack.c.0.s8 %v1026
        %v1028 = vlaneseq
        %v1029 = vshrl.u32 %v1028, 7
        %v1030 = vsub.s32 %v1027, %v1029
        %v1031 = vrot.slane %v1017, %v1030
        %v1032 = vcombine.high %v1024, %v1024
        %v1033 = vcombine.high %v1031, %v1031
        %v1034 = vcombine.high %v682, %v682
        %v1036 = vunpack.c.l.s4 1983009808
        %v1037 = vunpack.c.0.s8 %v1036
        %v1038 = vlaneseq
        %v1039 = vshrl.u32 %v1038, 7
        %v1040 = vsub.s32 %v1037, %v1039
        %v1041 = vrot.slane %v682, %v1040
        %v1043 = vunpack.c.l.s4 1983009808
        %v1044 = vunpack.c.0.s8 %v1043
        %v1045 = vlaneseq
        %v1046 = vshrl.u32 %v1045, 7
        %v1047 = vsub.s32 %v1044, %v1046
        %v1048 = vrot.slane %v1034, %v1047
        %v1049 = vcombine.high %v1041, %v1041
        %v1050 = vcombine.high %v1048, %v1048
        %v1051 = vcombine.high %v683, %v683
        %v1053 = vunpack.c.l.s4 1983009808
        %v1054 = vunpack.c.0.s8 %v1053
        %v1055 = vlaneseq
        %v1056 = vshrl.u32 %v1055, 7
        %v1057 = vsub.s32 %v1054, %v1056
        %v1058 = vrot.slane %v683, %v1057
        %v1060 = vunpack.c.l.s4 1983009808
        %v1061 = vunpack.c.0.s8 %v1060
        %v1062 = vlaneseq
        %v1063 = vshrl.u32 %v1062, 7
        %v1064 = vsub.s32 %v1061, %v1063
        %v1065 = vrot.slane %v1051, %v1064
        %v1066 = vcombine.high %v1058, %v1058
        %v1067 = vcombine.high %v1065, %v1065
        %v1068 = vcombine.high %v684, %v684
        %v1070 = vunpack.c.l.s4 1983009808
        %v1071 = vunpack.c.0.s8 %v1070
        %v1072 = vlaneseq
        %v1073 = vshrl.u32 %v1072, 7
        %v1074 = vsub.s32 %v1071, %v1073
        %v1075 = vrot.slane %v684, %v1074
        %v1077 = vunpack.c.l.s4 1983009808
        %v1078 = vunpack.c.0.s8 %v1077
        %v1079 = vlaneseq
        %v1080 = vshrl.u32 %v1079, 7
        %v1081 = vsub.s32 %v1078, %v1080
        %v1082 = vrot.slane %v1068, %v1081
        %v1083 = vcombine.high %v1075, %v1075
        %v1084 = vcombine.high %v1082, %v1082
        %v1085 = vcombine.high %v685, %v685
        %v1087 = vunpack.c.l.s4 1983009808
        %v1088 = vunpack.c.0.s8 %v1087
        %v1089 = vlaneseq
        %v1090 = vshrl.u32 %v1089, 7
        %v1091 = vsub.s32 %v1088, %v1090
        %v1092 = vrot.slane %v685, %v1091
        %v1094 = vunpack.c.l.s4 1983009808
        %v1095 = vunpack.c.0.s8 %v1094
        %v1096 = vlaneseq
        %v1097 = vshrl.u32 %v1096, 7
        %v1098 = vsub.s32 %v1095, %v1097
        %v1099 = vrot.slane %v1085, %v1098
        %v1100 = vcombine.high %v1092, %v1092
        %v1101 = vcombine.high %v1099, %v1099
        %v1102 = vcombine.high %v686, %v686
        %v1104 = vunpack.c.l.s4 1983009808
        %v1105 = vunpack.c.0.s8 %v1104
        %v1106 = vlaneseq
        %v1107 = vshrl.u32 %v1106, 7
        %v1108 = vsub.s32 %v1105, %v1107
        %v1109 = vrot.slane %v686, %v1108
        %v1111 = vunpack.c.l.s4 1983009808
        %v1112 = vunpack.c.0.s8 %v1111
        %v1113 = vlaneseq
        %v1114 = vshrl.u32 %v1113, 7
        %v1115 = vsub.s32 %v1112, %v1114
        %v1116 = vrot.slane %v1102, %v1115
        %v1117 = vcombine.high %v1109, %v1109
        %v1118 = vcombine.high %v1116, %v1116
        %v1119 = vcombine.high %v687, %v687
        %v1121 = vunpack.c.l.s4 1983009808
        %v1122 = vunpack.c.0.s8 %v1121
        %v1123 = vlaneseq
        %v1124 = vshrl.u32 %v1123, 7
        %v1125 = vsub.s32 %v1122, %v1124
        %v1126 = vrot.slane %v687, %v1125
        %v1128 = vunpack.c.l.s4 1983009808
        %v1129 = vunpack.c.0.s8 %v1128
        %v1130 = vlaneseq
        %v1131 = vshrl.u32 %v1130, 7
        %v1132 = vsub.s32 %v1129, %v1131
        %v1133 = vrot.slane %v1119, %v1132
        %v1134 = vcombine.high %v1126, %v1126
        %v1135 = vcombine.high %v1133, %v1133
        %v1136 = vcombine.high %v688, %v688
        %v1138 = vunpack.c.l.s4 1983009808
        %v1139 = vunpack.c.0.s8 %v1138
        %v1140 = vlaneseq
        %v1141 = vshrl.u32 %v1140, 7
        %v1142 = vsub.s32 %v1139, %v1141
        %v1143 = vrot.slane %v688, %v1142
        %v1145 = vunpack.c.l.s4 1983009808
        %v1146 = vunpack.c.0.s8 %v1145
        %v1147 = vlaneseq
        %v1148 = vshrl.u32 %v1147, 7
        %v1149 = vsub.s32 %v1146, %v1148
        %v1150 = vrot.slane %v1136, %v1149
        %v1151 = vcombine.high %v1143, %v1143
        %v1152 = vcombine.high %v1150, %v1150
        %v1153 = vcombine.high %v689, %v689
        %v1155 = vunpack.c.l.s4 1983009808
        %v1156 = vunpack.c.0.s8 %v1155
        %v1157 = vlaneseq
        %v1158 = vshrl.u32 %v1157, 7
        %v1159 = vsub.s32 %v1156, %v1158
        %v1160 = vrot.slane %v689, %v1159
        %v1162 = vunpack.c.l.s4 1983009808
        %v1163 = vunpack.c.0.s8 %v1162
        %v1164 = vlaneseq
        %v1165 = vshrl.u32 %v1164, 7
        %v1166 = vsub.s32 %v1163, %v1165
        %v1167 = vrot.slane %v1153, %v1166
        %v1168 = vcombine.high %v1160, %v1160
        %v1169 = vcombine.high %v1167, %v1167
        %v1170 = vcombine.high %v690, %v690
        %v1172 = vunpack.c.l.s4 1983009808
        %v1173 = vunpack.c.0.s8 %v1172
        %v1174 = vlaneseq
        %v1175 = vshrl.u32 %v1174, 7
        %v1176 = vsub.s32 %v1173, %v1175
        %v1177 = vrot.slane %v690, %v1176
        %v1179 = vunpack.c.l.s4 1983009808
        %v1180 = vunpack.c.0.s8 %v1179
        %v1181 = vlaneseq
        %v1182 = vshrl.u32 %v1181, 7
        %v1183 = vsub.s32 %v1180, %v1182
        %v1184 = vrot.slane %v1170, %v1183
        %v1185 = vcombine.high %v1177, %v1177
        %v1186 = vcombine.high %v1184, %v1184
        %v1187 = vcombine.high %v691, %v691
        %v1189 = vunpack.c.l.s4 1983009808
        %v1190 = vunpack.c.0.s8 %v1189
        %v1191 = vlaneseq
        %v1192 = vshrl.u32 %v1191, 7
        %v1193 = vsub.s32 %v1190, %v1192
        %v1194 = vrot.slane %v691, %v1193
        %v1196 = vunpack.c.l.s4 1983009808
        %v1197 = vunpack.c.0.s8 %v1196
        %v1198 = vlaneseq
        %v1199 = vshrl.u32 %v1198, 7
        %v1200 = vsub.s32 %v1197, %v1199
        %v1201 = vrot.slane %v1187, %v1200
        %v1202 = vcombine.high %v1194, %v1194
        %v1203 = vcombine.high %v1201, %v1201
        %v1204 = vcombine.high %v692, %v692
        %v1206 = vunpack.c.l.s4 1983009808
        %v1207 = vunpack.c.0.s8 %v1206
        %v1208 = vlaneseq
        %v1209 = vshrl.u32 %v1208, 7
        %v1210 = vsub.s32 %v1207, %v1209
        %v1211 = vrot.slane %v692, %v1210
        %v1213 = vunpack.c.l.s4 1983009808
        %v1214 = vunpack.c.0.s8 %v1213
        %v1215 = vlaneseq
        %v1216 = vshrl.u32 %v1215, 7
        %v1217 = vsub.s32 %v1214, %v1216
        %v1218 = vrot.slane %v1204, %v1217
        %v1219 = vcombine.high %v1211, %v1211
        %v1220 = vcombine.high %v1218, %v1218
        %v1221 = vcombine.high %v693, %v693
        %v1223 = vunpack.c.l.s4 1983009808
        %v1224 = vunpack.c.0.s8 %v1223
        %v1225 = vlaneseq
        %v1226 = vshrl.u32 %v1225, 7
        %v1227 = vsub.s32 %v1224, %v1226
        %v1228 = vrot.slane %v693, %v1227
        %v1230 = vunpack.c.l.s4 1983009808
        %v1231 = vunpack.c.0.s8 %v1230
        %v1232 = vlaneseq
        %v1233 = vshrl.u32 %v1232, 7
        %v1234 = vsub.s32 %v1231, %v1233
        %v1235 = vrot.slane %v1221, %v1234
        %v1236 = vcombine.high %v1228, %v1228
        %v1237 = vcombine.high %v1235, %v1235
        %v1238 = vcombine.high %v694, %v694
        %v1240 = vunpack.c.l.s4 1983009808
        %v1241 = vunpack.c.0.s8 %v1240
        %v1242 = vlaneseq
        %v1243 = vshrl.u32 %v1242, 7
        %v1244 = vsub.s32 %v1241, %v1243
        %v1245 = vrot.slane %v694, %v1244
        %v1247 = vunpack.c.l.s4 1983009808
        %v1248 = vunpack.c.0.s8 %v1247
        %v1249 = vlaneseq
        %v1250 = vshrl.u32 %v1249, 7
        %v1251 = vsub.s32 %v1248, %v1250
        %v1252 = vrot.slane %v1238, %v1251
        %v1253 = vcombine.high %v1245, %v1245
        %v1254 = vcombine.high %v1252, %v1252
        %v1255 = vcombine.high %v695, %v695
        %v1257 = vunpack.c.l.s4 1983009808
        %v1258 = vunpack.c.0.s8 %v1257
        %v1259 = vlaneseq
        %v1260 = vshrl.u32 %v1259, 7
        %v1261 = vsub.s32 %v1258, %v1260
        %v1262 = vrot.slane %v695, %v1261
        %v1264 = vunpack.c.l.s4 1983009808
        %v1265 = vunpack.c.0.s8 %v1264
        %v1266 = vlaneseq
        %v1267 = vshrl.u32 %v1266, 7
        %v1268 = vsub.s32 %v1265, %v1267
        %v1269 = vrot.slane %v1255, %v1268
        %v1270 = vcombine.high %v1262, %v1262
        %v1271 = vcombine.high %v1269, %v1269
        %vm1400 = vcmask 1041408
        %v1401 = vsel %vm1400, %v735, -inf
        %v1402 = vrot.slane %v1401, 4
        %v1403 = vmax.f32 %v1401, %v1402
        %v1404 = vrot.slane %v1403, 2
        %v1405 = vmax.f32 %v1403, %v1404
        %v1406 = vrot.slane %v1405, 1
        %v1407 = vmax.f32 %v1405, %v1406
        %v1408 = vsel %vm1400, %v743, -inf
        %v1409 = vrot.slane %v1408, 4
        %v1410 = vmax.f32 %v1408, %v1409
        %v1411 = vrot.slane %v1410, 2
        %v1412 = vmax.f32 %v1410, %v1411
        %v1413 = vrot.slane %v1412, 1
        %v1414 = vmax.f32 %v1412, %v1413
        %v1415 = vsel %vm1400, %v742, -inf
        %v1416 = vrot.slane %v1415, 4
        %v1417 = vmax.f32 %v1415, %v1416
        %v1418 = vrot.slane %v1417, 2
        %v1419 = vmax.f32 %v1417, %v1418
        %v1420 = vrot.slane %v1419, 1
        %v1421 = vmax.f32 %v1419, %v1420
        %v1422 = vsel %vm1400, %v744, -inf
        %v1423 = vrot.slane %v1422, 4
        %v1424 = vmax.f32 %v1422, %v1423
        %v1425 = vrot.slane %v1424, 2
        %v1426 = vmax.f32 %v1424, %v1425
        %v1427 = vrot.slane %v1426, 1
        %v1428 = vmax.f32 %v1426, %v1427
        %v1429 = vsel %vm1400, %v752, -inf
        %v1430 = vrot.slane %v1429, 4
        %v1431 = vmax.f32 %v1429, %v1430
        %v1432 = vrot.slane %v1431, 2
        %v1433 = vmax.f32 %v1431, %v1432
        %v1434 = vrot.slane %v1433, 1
        %v1435 = vmax.f32 %v1433, %v1434
        %v1436 = vsel %vm1400, %v760, -inf
        %v1437 = vrot.slane %v1436, 4
        %v1438 = vmax.f32 %v1436, %v1437
        %v1439 = vrot.slane %v1438, 2
        %v1440 = vmax.f32 %v1438, %v1439
        %v1441 = vrot.slane %v1440, 1
        %v1442 = vmax.f32 %v1440, %v1441
        %v1443 = vsel %vm1400, %v759, -inf
        %v1444 = vrot.slane %v1443, 4
        %v1445 = vmax.f32 %v1443, %v1444
        %v1446 = vrot.slane %v1445, 2
        %v1447 = vmax.f32 %v1445, %v1446
        %v1448 = vrot.slane %v1447, 1
        %v1449 = vmax.f32 %v1447, %v1448
        %v1450 = vsel %vm1400, %v761, -inf
        %v1451 = vrot.slane %v1450, 4
        %v1452 = vmax.f32 %v1450, %v1451
        %v1453 = vrot.slane %v1452, 2
        %v1454 = vmax.f32 %v1452, %v1453
        %v1455 = vrot.slane %v1454, 1
        %v1456 = vmax.f32 %v1454, %v1455
        %v1457 = vsel %vm1400, %v769, -inf
        %v1458 = vrot.slane %v1457, 4
        %v1459 = vmax.f32 %v1457, %v1458
        %v1460 = vrot.slane %v1459, 2
        %v1461 = vmax.f32 %v1459, %v1460
        %v1462 = vrot.slane %v1461, 1
        %v1463 = vmax.f32 %v1461, %v1462
        %v1464 = vsel %vm1400, %v777, -inf
        %v1465 = vrot.slane %v1464, 4
        %v1466 = vmax.f32 %v1464, %v1465
        %v1467 = vrot.slane %v1466, 2
        %v1468 = vmax.f32 %v1466, %v1467
        %v1469 = vrot.slane %v1468, 1
        %v1470 = vmax.f32 %v1468, %v1469
        %v1471 = vsel %vm1400, %v776, -inf
        %v1472 = vrot.slane %v1471, 4
        %v1473 = vmax.f32 %v1471, %v1472
        %v1474 = vrot.slane %v1473, 2
        %v1475 = vmax.f32 %v1473, %v1474
        %v1476 = vrot.slane %v1475, 1
        %v1477 = vmax.f32 %v1475, %v1476
        %v1478 = vsel %vm1400, %v778, -inf
        %v1479 = vrot.slane %v1478, 4
        %v1480 = vmax.f32 %v1478, %v1479
        %v1481 = vrot.slane %v1480, 2
        %v1482 = vmax.f32 %v1480, %v1481
        %v1483 = vrot.slane %v1482, 1
        %v1484 = vmax.f32 %v1482, %v1483
        %v1485 = vsel %vm1400, %v786, -inf
        %v1486 = vrot.slane %v1485, 4
        %v1487 = vmax.f32 %v1485, %v1486
        %v1488 = vrot.slane %v1487, 2
        %v1489 = vmax.f32 %v1487, %v1488
        %v1490 = vrot.slane %v1489, 1
        %v1491 = vmax.f32 %v1489, %v1490
        %v1492 = vsel %vm1400, %v794, -inf
        %v1493 = vrot.slane %v1492, 4
        %v1494 = vmax.f32 %v1492, %v1493
        %v1495 = vrot.slane %v1494, 2
        %v1496 = vmax.f32 %v1494, %v1495
        %v1497 = vrot.slane %v1496, 1
        %v1498 = vmax.f32 %v1496, %v1497
        %v1499 = vsel %vm1400, %v793, -inf
        %v1500 = vrot.slane %v1499, 4
        %v1501 = vmax.f32 %v1499, %v1500
        %v1502 = vrot.slane %v1501, 2
        %v1503 = vmax.f32 %v1501, %v1502
        %v1504 = vrot.slane %v1503, 1
        %v1505 = vmax.f32 %v1503, %v1504
        %v1506 = vsel %vm1400, %v795, -inf
        %v1507 = vrot.slane %v1506, 4
        %v1508 = vmax.f32 %v1506, %v1507
        %v1509 = vrot.slane %v1508, 2
        %v1510 = vmax.f32 %v1508, %v1509
        %v1511 = vrot.slane %v1510, 1
        %v1512 = vmax.f32 %v1510, %v1511
        %v1513 = vsel %vm1400, %v803, -inf
        %v1514 = vrot.slane %v1513, 4
        %v1515 = vmax.f32 %v1513, %v1514
        %v1516 = vrot.slane %v1515, 2
        %v1517 = vmax.f32 %v1515, %v1516
        %v1518 = vrot.slane %v1517, 1
        %v1519 = vmax.f32 %v1517, %v1518
        %v1520 = vsel %vm1400, %v811, -inf
        %v1521 = vrot.slane %v1520, 4
        %v1522 = vmax.f32 %v1520, %v1521
        %v1523 = vrot.slane %v1522, 2
        %v1524 = vmax.f32 %v1522, %v1523
        %v1525 = vrot.slane %v1524, 1
        %v1526 = vmax.f32 %v1524, %v1525
        %v1527 = vsel %vm1400, %v810, -inf
        %v1528 = vrot.slane %v1527, 4
        %v1529 = vmax.f32 %v1527, %v1528
        %v1530 = vrot.slane %v1529, 2
        %v1531 = vmax.f32 %v1529, %v1530
        %v1532 = vrot.slane %v1531, 1
        %v1533 = vmax.f32 %v1531, %v1532
        %v1534 = vsel %vm1400, %v812, -inf
        %v1535 = vrot.slane %v1534, 4
        %v1536 = vmax.f32 %v1534, %v1535
        %v1537 = vrot.slane %v1536, 2
        %v1538 = vmax.f32 %v1536, %v1537
        %v1539 = vrot.slane %v1538, 1
        %v1540 = vmax.f32 %v1538, %v1539
        %v1541 = vsel %vm1400, %v820, -inf
        %v1542 = vrot.slane %v1541, 4
        %v1543 = vmax.f32 %v1541, %v1542
        %v1544 = vrot.slane %v1543, 2
        %v1545 = vmax.f32 %v1543, %v1544
        %v1546 = vrot.slane %v1545, 1
        %v1547 = vmax.f32 %v1545, %v1546
        %v1548 = vsel %vm1400, %v828, -inf
        %v1549 = vrot.slane %v1548, 4
        %v1550 = vmax.f32 %v1548, %v1549
        %v1551 = vrot.slane %v1550, 2
        %v1552 = vmax.f32 %v1550, %v1551
        %v1553 = vrot.slane %v1552, 1
        %v1554 = vmax.f32 %v1552, %v1553
        %v1555 = vsel %vm1400, %v827, -inf
        %v1556 = vrot.slane %v1555, 4
        %v1557 = vmax.f32 %v1555, %v1556
        %v1558 = vrot.slane %v1557, 2
        %v1559 = vmax.f32 %v1557, %v1558
        %v1560 = vrot.slane %v1559, 1
        %v1561 = vmax.f32 %v1559, %v1560
        %v1562 = vsel %vm1400, %v829, -inf
        %v1563 = vrot.slane %v1562, 4
        %v1564 = vmax.f32 %v1562, %v1563
        %v1565 = vrot.slane %v1564, 2
        %v1566 = vmax.f32 %v1564, %v1565
        %v1567 = vrot.slane %v1566, 1
        %v1568 = vmax.f32 %v1566, %v1567
        %v1569 = vsel %vm1400, %v837, -inf
        %v1570 = vrot.slane %v1569, 4
        %v1571 = vmax.f32 %v1569, %v1570
        %v1572 = vrot.slane %v1571, 2
        %v1573 = vmax.f32 %v1571, %v1572
        %v1574 = vrot.slane %v1573, 1
        %v1575 = vmax.f32 %v1573, %v1574
        %v1576 = vsel %vm1400, %v845, -inf
        %v1577 = vrot.slane %v1576, 4
        %v1578 = vmax.f32 %v1576, %v1577
        %v1579 = vrot.slane %v1578, 2
        %v1580 = vmax.f32 %v1578, %v1579
        %v1581 = vrot.slane %v1580, 1
        %v1582 = vmax.f32 %v1580, %v1581
        %v1583 = vsel %vm1400, %v844, -inf
        %v1584 = vrot.slane %v1583, 4
        %v1585 = vmax.f32 %v1583, %v1584
        %v1586 = vrot.slane %v1585, 2
        %v1587 = vmax.f32 %v1585, %v1586
        %v1588 = vrot.slane %v1587, 1
        %v1589 = vmax.f32 %v1587, %v1588
        %v1590 = vsel %vm1400, %v846, -inf
        %v1591 = vrot.slane %v1590, 4
        %v1592 = vmax.f32 %v1590, %v1591
        %v1593 = vrot.slane %v1592, 2
        %v1594 = vmax.f32 %v1592, %v1593
        %v1595 = vrot.slane %v1594, 1
        %v1596 = vmax.f32 %v1594, %v1595
        %v1597 = vsel %vm1400, %v854, -inf
        %v1598 = vrot.slane %v1597, 4
        %v1599 = vmax.f32 %v1597, %v1598
        %v1600 = vrot.slane %v1599, 2
        %v1601 = vmax.f32 %v1599, %v1600
        %v1602 = vrot.slane %v1601, 1
        %v1603 = vmax.f32 %v1601, %v1602
        %v1604 = vsel %vm1400, %v862, -inf
        %v1605 = vrot.slane %v1604, 4
        %v1606 = vmax.f32 %v1604, %v1605
        %v1607 = vrot.slane %v1606, 2
        %v1608 = vmax.f32 %v1606, %v1607
        %v1609 = vrot.slane %v1608, 1
        %v1610 = vmax.f32 %v1608, %v1609
        %v1611 = vsel %vm1400, %v861, -inf
        %v1612 = vrot.slane %v1611, 4
        %v1613 = vmax.f32 %v1611, %v1612
        %v1614 = vrot.slane %v1613, 2
        %v1615 = vmax.f32 %v1613, %v1614
        %v1616 = vrot.slane %v1615, 1
        %v1617 = vmax.f32 %v1615, %v1616
        %v1618 = vsel %vm1400, %v863, -inf
        %v1619 = vrot.slane %v1618, 4
        %v1620 = vmax.f32 %v1618, %v1619
        %v1621 = vrot.slane %v1620, 2
        %v1622 = vmax.f32 %v1620, %v1621
        %v1623 = vrot.slane %v1622, 1
        %v1624 = vmax.f32 %v1622, %v1623
        %v1625 = vsel %vm1400, %v871, -inf
        %v1626 = vrot.slane %v1625, 4
        %v1627 = vmax.f32 %v1625, %v1626
        %v1628 = vrot.slane %v1627, 2
        %v1629 = vmax.f32 %v1627, %v1628
        %v1630 = vrot.slane %v1629, 1
        %v1631 = vmax.f32 %v1629, %v1630
        %v1632 = vsel %vm1400, %v879, -inf
        %v1633 = vrot.slane %v1632, 4
        %v1634 = vmax.f32 %v1632, %v1633
        %v1635 = vrot.slane %v1634, 2
        %v1636 = vmax.f32 %v1634, %v1635
        %v1637 = vrot.slane %v1636, 1
        %v1638 = vmax.f32 %v1636, %v1637
        %v1639 = vsel %vm1400, %v878, -inf
        %v1640 = vrot.slane %v1639, 4
        %v1641 = vmax.f32 %v1639, %v1640
        %v1642 = vrot.slane %v1641, 2
        %v1643 = vmax.f32 %v1641, %v1642
        %v1644 = vrot.slane %v1643, 1
        %v1645 = vmax.f32 %v1643, %v1644
        %v1646 = vsel %vm1400, %v880, -inf
        %v1647 = vrot.slane %v1646, 4
        %v1648 = vmax.f32 %v1646, %v1647
        %v1649 = vrot.slane %v1648, 2
        %v1650 = vmax.f32 %v1648, %v1649
        %v1651 = vrot.slane %v1650, 1
        %v1652 = vmax.f32 %v1650, %v1651
        %v1653 = vsel %vm1400, %v888, -inf
        %v1654 = vrot.slane %v1653, 4
        %v1655 = vmax.f32 %v1653, %v1654
        %v1656 = vrot.slane %v1655, 2
        %v1657 = vmax.f32 %v1655, %v1656
        %v1658 = vrot.slane %v1657, 1
        %v1659 = vmax.f32 %v1657, %v1658
        %v1660 = vsel %vm1400, %v896, -inf
        %v1661 = vrot.slane %v1660, 4
        %v1662 = vmax.f32 %v1660, %v1661
        %v1663 = vrot.slane %v1662, 2
        %v1664 = vmax.f32 %v1662, %v1663
        %v1665 = vrot.slane %v1664, 1
        %v1666 = vmax.f32 %v1664, %v1665
        %v1667 = vsel %vm1400, %v895, -inf
        %v1668 = vrot.slane %v1667, 4
        %v1669 = vmax.f32 %v1667, %v1668
        %v1670 = vrot.slane %v1669, 2
        %v1671 = vmax.f32 %v1669, %v1670
        %v1672 = vrot.slane %v1671, 1
        %v1673 = vmax.f32 %v1671, %v1672
        %v1674 = vsel %vm1400, %v897, -inf
        %v1675 = vrot.slane %v1674, 4
        %v1676 = vmax.f32 %v1674, %v1675
        %v1677 = vrot.slane %v1676, 2
        %v1678 = vmax.f32 %v1676, %v1677
        %v1679 = vrot.slane %v1678, 1
        %v1680 = vmax.f32 %v1678, %v1679
        %v1681 = vsel %vm1400, %v905, -inf
        %v1682 = vrot.slane %v1681, 4
        %v1683 = vmax.f32 %v1681, %v1682
        %v1684 = vrot.slane %v1683, 2
        %v1685 = vmax.f32 %v1683, %v1684
        %v1686 = vrot.slane %v1685, 1
        %v1687 = vmax.f32 %v1685, %v1686
        %v1688 = vsel %vm1400, %v913, -inf
        %v1689 = vrot.slane %v1688, 4
        %v1690 = vmax.f32 %v1688, %v1689
        %v1691 = vrot.slane %v1690, 2
        %v1692 = vmax.f32 %v1690, %v1691
        %v1693 = vrot.slane %v1692, 1
        %v1694 = vmax.f32 %v1692, %v1693
        %v1695 = vsel %vm1400, %v912, -inf
        %v1696 = vrot.slane %v1695, 4
        %v1697 = vmax.f32 %v1695, %v1696
        %v1698 = vrot.slane %v1697, 2
        %v1699 = vmax.f32 %v1697, %v1698
        %v1700 = vrot.slane %v1699, 1
        %v1701 = vmax.f32 %v1699, %v1700
        %v1702 = vsel %vm1400, %v914, -inf
        %v1703 = vrot.slane %v1702, 4
        %v1704 = vmax.f32 %v1702, %v1703
        %v1705 = vrot.slane %v1704, 2
        %v1706 = vmax.f32 %v1704, %v1705
        %v1707 = vrot.slane %v1706, 1
        %v1708 = vmax.f32 %v1706, %v1707
        %v1709 = vsel %vm1400, %v922, -inf
        %v1710 = vrot.slane %v1709, 4
        %v1711 = vmax.f32 %v1709, %v1710
        %v1712 = vrot.slane %v1711, 2
        %v1713 = vmax.f32 %v1711, %v1712
        %v1714 = vrot.slane %v1713, 1
        %v1715 = vmax.f32 %v1713, %v1714
        %v1716 = vsel %vm1400, %v930, -inf
        %v1717 = vrot.slane %v1716, 4
        %v1718 = vmax.f32 %v1716, %v1717
        %v1719 = vrot.slane %v1718, 2
        %v1720 = vmax.f32 %v1718, %v1719
        %v1721 = vrot.slane %v1720, 1
        %v1722 = vmax.f32 %v1720, %v1721
        %v1723 = vsel %vm1400, %v929, -inf
        %v1724 = vrot.slane %v1723, 4
        %v1725 = vmax.f32 %v1723, %v1724
        %v1726 = vrot.slane %v1725, 2
        %v1727 = vmax.f32 %v1725, %v1726
        %v1728 = vrot.slane %v1727, 1
        %v1729 = vmax.f32 %v1727, %v1728
        %v1730 = vsel %vm1400, %v931, -inf
        %v1731 = vrot.slane %v1730, 4
        %v1732 = vmax.f32 %v1730, %v1731
        %v1733 = vrot.slane %v1732, 2
        %v1734 = vmax.f32 %v1732, %v1733
        %v1735 = vrot.slane %v1734, 1
        %v1736 = vmax.f32 %v1734, %v1735
        %v1737 = vsel %vm1400, %v939, -inf
        %v1738 = vrot.slane %v1737, 4
        %v1739 = vmax.f32 %v1737, %v1738
        %v1740 = vrot.slane %v1739, 2
        %v1741 = vmax.f32 %v1739, %v1740
        %v1742 = vrot.slane %v1741, 1
        %v1743 = vmax.f32 %v1741, %v1742
        %v1744 = vsel %vm1400, %v947, -inf
        %v1745 = vrot.slane %v1744, 4
        %v1746 = vmax.f32 %v1744, %v1745
        %v1747 = vrot.slane %v1746, 2
        %v1748 = vmax.f32 %v1746, %v1747
        %v1749 = vrot.slane %v1748, 1
        %v1750 = vmax.f32 %v1748, %v1749
        %v1751 = vsel %vm1400, %v946, -inf
        %v1752 = vrot.slane %v1751, 4
        %v1753 = vmax.f32 %v1751, %v1752
        %v1754 = vrot.slane %v1753, 2
        %v1755 = vmax.f32 %v1753, %v1754
        %v1756 = vrot.slane %v1755, 1
        %v1757 = vmax.f32 %v1755, %v1756
        %v1758 = vsel %vm1400, %v948, -inf
        %v1759 = vrot.slane %v1758, 4
        %v1760 = vmax.f32 %v1758, %v1759
        %v1761 = vrot.slane %v1760, 2
        %v1762 = vmax.f32 %v1760, %v1761
        %v1763 = vrot.slane %v1762, 1
        %v1764 = vmax.f32 %v1762, %v1763
        %v1765 = vsel %vm1400, %v956, -inf
        %v1766 = vrot.slane %v1765, 4
        %v1767 = vmax.f32 %v1765, %v1766
        %v1768 = vrot.slane %v1767, 2
        %v1769 = vmax.f32 %v1767, %v1768
        %v1770 = vrot.slane %v1769, 1
        %v1771 = vmax.f32 %v1769, %v1770
        %v1772 = vsel %vm1400, %v964, -inf
        %v1773 = vrot.slane %v1772, 4
        %v1774 = vmax.f32 %v1772, %v1773
        %v1775 = vrot.slane %v1774, 2
        %v1776 = vmax.f32 %v1774, %v1775
        %v1777 = vrot.slane %v1776, 1
        %v1778 = vmax.f32 %v1776, %v1777
        %v1779 = vsel %vm1400, %v963, -inf
        %v1780 = vrot.slane %v1779, 4
        %v1781 = vmax.f32 %v1779, %v1780
        %v1782 = vrot.slane %v1781, 2
        %v1783 = vmax.f32 %v1781, %v1782
        %v1784 = vrot.slane %v1783, 1
        %v1785 = vmax.f32 %v1783, %v1784
        %v1786 = vsel %vm1400, %v965, -inf
        %v1787 = vrot.slane %v1786, 4
        %v1788 = vmax.f32 %v1786, %v1787
        %v1789 = vrot.slane %v1788, 2
        %v1790 = vmax.f32 %v1788, %v1789
        %v1791 = vrot.slane %v1790, 1
        %v1792 = vmax.f32 %v1790, %v1791
        %v1793 = vsel %vm1400, %v973, -inf
        %v1794 = vrot.slane %v1793, 4
        %v1795 = vmax.f32 %v1793, %v1794
        %v1796 = vrot.slane %v1795, 2
        %v1797 = vmax.f32 %v1795, %v1796
        %v1798 = vrot.slane %v1797, 1
        %v1799 = vmax.f32 %v1797, %v1798
        %v1800 = vsel %vm1400, %v981, -inf
        %v1801 = vrot.slane %v1800, 4
        %v1802 = vmax.f32 %v1800, %v1801
        %v1803 = vrot.slane %v1802, 2
        %v1804 = vmax.f32 %v1802, %v1803
        %v1805 = vrot.slane %v1804, 1
        %v1806 = vmax.f32 %v1804, %v1805
        %v1807 = vsel %vm1400, %v980, -inf
        %v1808 = vrot.slane %v1807, 4
        %v1809 = vmax.f32 %v1807, %v1808
        %v1810 = vrot.slane %v1809, 2
        %v1811 = vmax.f32 %v1809, %v1810
        %v1812 = vrot.slane %v1811, 1
        %v1813 = vmax.f32 %v1811, %v1812
        %v1814 = vsel %vm1400, %v982, -inf
        %v1815 = vrot.slane %v1814, 4
        %v1816 = vmax.f32 %v1814, %v1815
        %v1817 = vrot.slane %v1816, 2
        %v1818 = vmax.f32 %v1816, %v1817
        %v1819 = vrot.slane %v1818, 1
        %v1820 = vmax.f32 %v1818, %v1819
        %v1821 = vsel %vm1400, %v990, -inf
        %v1822 = vrot.slane %v1821, 4
        %v1823 = vmax.f32 %v1821, %v1822
        %v1824 = vrot.slane %v1823, 2
        %v1825 = vmax.f32 %v1823, %v1824
        %v1826 = vrot.slane %v1825, 1
        %v1827 = vmax.f32 %v1825, %v1826
        %v1828 = vsel %vm1400, %v998, -inf
        %v1829 = vrot.slane %v1828, 4
        %v1830 = vmax.f32 %v1828, %v1829
        %v1831 = vrot.slane %v1830, 2
        %v1832 = vmax.f32 %v1830, %v1831
        %v1833 = vrot.slane %v1832, 1
        %v1834 = vmax.f32 %v1832, %v1833
        %v1835 = vsel %vm1400, %v997, -inf
        %v1836 = vrot.slane %v1835, 4
        %v1837 = vmax.f32 %v1835, %v1836
        %v1838 = vrot.slane %v1837, 2
        %v1839 = vmax.f32 %v1837, %v1838
        %v1840 = vrot.slane %v1839, 1
        %v1841 = vmax.f32 %v1839, %v1840
        %v1842 = vsel %vm1400, %v999, -inf
        %v1843 = vrot.slane %v1842, 4
        %v1844 = vmax.f32 %v1842, %v1843
        %v1845 = vrot.slane %v1844, 2
        %v1846 = vmax.f32 %v1844, %v1845
        %v1847 = vrot.slane %v1846, 1
        %v1848 = vmax.f32 %v1846, %v1847
        %v1849 = vsel %vm1400, %v1007, -inf
        %v1850 = vrot.slane %v1849, 4
        %v1851 = vmax.f32 %v1849, %v1850
        %v1852 = vrot.slane %v1851, 2
        %v1853 = vmax.f32 %v1851, %v1852
        %v1854 = vrot.slane %v1853, 1
        %v1855 = vmax.f32 %v1853, %v1854
        %v1856 = vsel %vm1400, %v1015, -inf
        %v1857 = vrot.slane %v1856, 4
        %v1858 = vmax.f32 %v1856, %v1857
        %v1859 = vrot.slane %v1858, 2
        %v1860 = vmax.f32 %v1858, %v1859
        %v1861 = vrot.slane %v1860, 1
        %v1862 = vmax.f32 %v1860, %v1861
        %v1863 = vsel %vm1400, %v1014, -inf
        %v1864 = vrot.slane %v1863, 4
        %v1865 = vmax.f32 %v1863, %v1864
        %v1866 = vrot.slane %v1865, 2
        %v1867 = vmax.f32 %v1865, %v1866
        %v1868 = vrot.slane %v1867, 1
        %v1869 = vmax.f32 %v1867, %v1868
        %v1870 = vsel %vm1400, %v1016, -inf
        %v1871 = vrot.slane %v1870, 4
        %v1872 = vmax.f32 %v1870, %v1871
        %v1873 = vrot.slane %v1872, 2
        %v1874 = vmax.f32 %v1872, %v1873
        %v1875 = vrot.slane %v1874, 1
        %v1876 = vmax.f32 %v1874, %v1875
        %v1877 = vsel %vm1400, %v1024, -inf
        %v1878 = vrot.slane %v1877, 4
        %v1879 = vmax.f32 %v1877, %v1878
        %v1880 = vrot.slane %v1879, 2
        %v1881 = vmax.f32 %v1879, %v1880
        %v1882 = vrot.slane %v1881, 1
        %v1883 = vmax.f32 %v1881, %v1882
        %v1884 = vsel %vm1400, %v1032, -inf
        %v1885 = vrot.slane %v1884, 4
        %v1886 = vmax.f32 %v1884, %v1885
        %v1887 = vrot.slane %v1886, 2
        %v1888 = vmax.f32 %v1886, %v1887
        %v1889 = vrot.slane %v1888, 1
        %v1890 = vmax.f32 %v1888, %v1889
        %v1891 = vsel %vm1400, %v1031, -inf
        %v1892 = vrot.slane %v1891, 4
        %v1893 = vmax.f32 %v1891, %v1892
        %v1894 = vrot.slane %v1893, 2
        %v1895 = vmax.f32 %v1893, %v1894
        %v1896 = vrot.slane %v1895, 1
        %v1897 = vmax.f32 %v1895, %v1896
        %v1898 = vsel %vm1400, %v1033, -inf
        %v1899 = vrot.slane %v1898, 4
        %v1900 = vmax.f32 %v1898, %v1899
        %v1901 = vrot.slane %v1900, 2
        %v1902 = vmax.f32 %v1900, %v1901
        %v1903 = vrot.slane %v1902, 1
        %v1904 = vmax.f32 %v1902, %v1903
        %v1905 = vsel %vm1400, %v1041, -inf
        %v1906 = vrot.slane %v1905, 4
        %v1907 = vmax.f32 %v1905, %v1906
        %v1908 = vrot.slane %v1907, 2
        %v1909 = vmax.f32 %v1907, %v1908
        %v1910 = vrot.slane %v1909, 1
        %v1911 = vmax.f32 %v1909, %v1910
        %v1912 = vsel %vm1400, %v1049, -inf
        %v1913 = vrot.slane %v1912, 4
        %v1914 = vmax.f32 %v1912, %v1913
        %v1915 = vrot.slane %v1914, 2
        %v1916 = vmax.f32 %v1914, %v1915
        %v1917 = vrot.slane %v1916, 1
        %v1918 = vmax.f32 %v1916, %v1917
        %v1919 = vsel %vm1400, %v1048, -inf
        %v1920 = vrot.slane %v1919, 4
        %v1921 = vmax.f32 %v1919, %v1920
        %v1922 = vrot.slane %v1921, 2
        %v1923 = vmax.f32 %v1921, %v1922
        %v1924 = vrot.slane %v1923, 1
        %v1925 = vmax.f32 %v1923, %v1924
        %v1926 = vsel %vm1400, %v1050, -inf
        %v1927 = vrot.slane %v1926, 4
        %v1928 = vmax.f32 %v1926, %v1927
        %v1929 = vrot.slane %v1928, 2
        %v1930 = vmax.f32 %v1928, %v1929
        %v1931 = vrot.slane %v1930, 1
        %v1932 = vmax.f32 %v1930, %v1931
        %v1933 = vsel %vm1400, %v1058, -inf
        %v1934 = vrot.slane %v1933, 4
        %v1935 = vmax.f32 %v1933, %v1934
        %v1936 = vrot.slane %v1935, 2
        %v1937 = vmax.f32 %v1935, %v1936
        %v1938 = vrot.slane %v1937, 1
        %v1939 = vmax.f32 %v1937, %v1938
        %v1940 = vsel %vm1400, %v1066, -inf
        %v1941 = vrot.slane %v1940, 4
        %v1942 = vmax.f32 %v1940, %v1941
        %v1943 = vrot.slane %v1942, 2
        %v1944 = vmax.f32 %v1942, %v1943
        %v1945 = vrot.slane %v1944, 1
        %v1946 = vmax.f32 %v1944, %v1945
        %v1947 = vsel %vm1400, %v1065, -inf
        %v1948 = vrot.slane %v1947, 4
        %v1949 = vmax.f32 %v1947, %v1948
        %v1950 = vrot.slane %v1949, 2
        %v1951 = vmax.f32 %v1949, %v1950
        %v1952 = vrot.slane %v1951, 1
        %v1953 = vmax.f32 %v1951, %v1952
        %v1954 = vsel %vm1400, %v1067, -inf
        %v1955 = vrot.slane %v1954, 4
        %v1956 = vmax.f32 %v1954, %v1955
        %v1957 = vrot.slane %v1956, 2
        %v1958 = vmax.f32 %v1956, %v1957
        %v1959 = vrot.slane %v1958, 1
        %v1960 = vmax.f32 %v1958, %v1959
        %v1961 = vsel %vm1400, %v1075, -inf
        %v1962 = vrot.slane %v1961, 4
        %v1963 = vmax.f32 %v1961, %v1962
        %v1964 = vrot.slane %v1963, 2
        %v1965 = vmax.f32 %v1963, %v1964
        %v1966 = vrot.slane %v1965, 1
        %v1967 = vmax.f32 %v1965, %v1966
        %v1968 = vsel %vm1400, %v1083, -inf
        %v1969 = vrot.slane %v1968, 4
        %v1970 = vmax.f32 %v1968, %v1969
        %v1971 = vrot.slane %v1970, 2
        %v1972 = vmax.f32 %v1970, %v1971
        %v1973 = vrot.slane %v1972, 1
        %v1974 = vmax.f32 %v1972, %v1973
        %v1975 = vsel %vm1400, %v1082, -inf
        %v1976 = vrot.slane %v1975, 4
        %v1977 = vmax.f32 %v1975, %v1976
        %v1978 = vrot.slane %v1977, 2
        %v1979 = vmax.f32 %v1977, %v1978
        %v1980 = vrot.slane %v1979, 1
        %v1981 = vmax.f32 %v1979, %v1980
        %v1982 = vsel %vm1400, %v1084, -inf
        %v1983 = vrot.slane %v1982, 4
        %v1984 = vmax.f32 %v1982, %v1983
        %v1985 = vrot.slane %v1984, 2
        %v1986 = vmax.f32 %v1984, %v1985
        %v1987 = vrot.slane %v1986, 1
        %v1988 = vmax.f32 %v1986, %v1987
        %v1989 = vsel %vm1400, %v1092, -inf
        %v1990 = vrot.slane %v1989, 4
        %v1991 = vmax.f32 %v1989, %v1990
        %v1992 = vrot.slane %v1991, 2
        %v1993 = vmax.f32 %v1991, %v1992
        %v1994 = vrot.slane %v1993, 1
        %v1995 = vmax.f32 %v1993, %v1994
        %v1996 = vsel %vm1400, %v1100, -inf
        %v1997 = vrot.slane %v1996, 4
        %v1998 = vmax.f32 %v1996, %v1997
        %v1999 = vrot.slane %v1998, 2
        %v2000 = vmax.f32 %v1998, %v1999
        %v2001 = vrot.slane %v2000, 1
        %v2002 = vmax.f32 %v2000, %v2001
        %v2003 = vsel %vm1400, %v1099, -inf
        %v2004 = vrot.slane %v2003, 4
        %v2005 = vmax.f32 %v2003, %v2004
        %v2006 = vrot.slane %v2005, 2
        %v2007 = vmax.f32 %v2005, %v2006
        %v2008 = vrot.slane %v2007, 1
        %v2009 = vmax.f32 %v2007, %v2008
        %v2010 = vsel %vm1400, %v1101, -inf
        %v2011 = vrot.slane %v2010, 4
        %v2012 = vmax.f32 %v2010, %v2011
        %v2013 = vrot.slane %v2012, 2
        %v2014 = vmax.f32 %v2012, %v2013
        %v2015 = vrot.slane %v2014, 1
        %v2016 = vmax.f32 %v2014, %v2015
        %v2017 = vsel %vm1400, %v1109, -inf
        %v2018 = vrot.slane %v2017, 4
        %v2019 = vmax.f32 %v2017, %v2018
        %v2020 = vrot.slane %v2019, 2
        %v2021 = vmax.f32 %v2019, %v2020
        %v2022 = vrot.slane %v2021, 1
        %v2023 = vmax.f32 %v2021, %v2022
        %v2024 = vsel %vm1400, %v1117, -inf
        %v2025 = vrot.slane %v2024, 4
        %v2026 = vmax.f32 %v2024, %v2025
        %v2027 = vrot.slane %v2026, 2
        %v2028 = vmax.f32 %v2026, %v2027
        %v2029 = vrot.slane %v2028, 1
        %v2030 = vmax.f32 %v2028, %v2029
        %v2031 = vsel %vm1400, %v1116, -inf
        %v2032 = vrot.slane %v2031, 4
        %v2033 = vmax.f32 %v2031, %v2032
        %v2034 = vrot.slane %v2033, 2
        %v2035 = vmax.f32 %v2033, %v2034
        %v2036 = vrot.slane %v2035, 1
        %v2037 = vmax.f32 %v2035, %v2036
        %v2038 = vsel %vm1400, %v1118, -inf
        %v2039 = vrot.slane %v2038, 4
        %v2040 = vmax.f32 %v2038, %v2039
        %v2041 = vrot.slane %v2040, 2
        %v2042 = vmax.f32 %v2040, %v2041
        %v2043 = vrot.slane %v2042, 1
        %v2044 = vmax.f32 %v2042, %v2043
        %v2045 = vsel %vm1400, %v1126, -inf
        %v2046 = vrot.slane %v2045, 4
        %v2047 = vmax.f32 %v2045, %v2046
        %v2048 = vrot.slane %v2047, 2
        %v2049 = vmax.f32 %v2047, %v2048
        %v2050 = vrot.slane %v2049, 1
        %v2051 = vmax.f32 %v2049, %v2050
        %v2052 = vsel %vm1400, %v1134, -inf
        %v2053 = vrot.slane %v2052, 4
        %v2054 = vmax.f32 %v2052, %v2053
        %v2055 = vrot.slane %v2054, 2
        %v2056 = vmax.f32 %v2054, %v2055
        %v2057 = vrot.slane %v2056, 1
        %v2058 = vmax.f32 %v2056, %v2057
        %v2059 = vsel %vm1400, %v1133, -inf
        %v2060 = vrot.slane %v2059, 4
        %v2061 = vmax.f32 %v2059, %v2060
        %v2062 = vrot.slane %v2061, 2
        %v2063 = vmax.f32 %v2061, %v2062
        %v2064 = vrot.slane %v2063, 1
        %v2065 = vmax.f32 %v2063, %v2064
        %v2066 = vsel %vm1400, %v1135, -inf
        %v2067 = vrot.slane %v2066, 4
        %v2068 = vmax.f32 %v2066, %v2067
        %v2069 = vrot.slane %v2068, 2
        %v2070 = vmax.f32 %v2068, %v2069
        %v2071 = vrot.slane %v2070, 1
        %v2072 = vmax.f32 %v2070, %v2071
        %v2073 = vsel %vm1400, %v1143, -inf
        %v2074 = vrot.slane %v2073, 4
        %v2075 = vmax.f32 %v2073, %v2074
        %v2076 = vrot.slane %v2075, 2
        %v2077 = vmax.f32 %v2075, %v2076
        %v2078 = vrot.slane %v2077, 1
        %v2079 = vmax.f32 %v2077, %v2078
        %v2080 = vsel %vm1400, %v1151, -inf
        %v2081 = vrot.slane %v2080, 4
        %v2082 = vmax.f32 %v2080, %v2081
        %v2083 = vrot.slane %v2082, 2
        %v2084 = vmax.f32 %v2082, %v2083
        %v2085 = vrot.slane %v2084, 1
        %v2086 = vmax.f32 %v2084, %v2085
        %v2087 = vsel %vm1400, %v1150, -inf
        %v2088 = vrot.slane %v2087, 4
        %v2089 = vmax.f32 %v2087, %v2088
        %v2090 = vrot.slane %v2089, 2
        %v2091 = vmax.f32 %v2089, %v2090
        %v2092 = vrot.slane %v2091, 1
        %v2093 = vmax.f32 %v2091, %v2092
        %v2094 = vsel %vm1400, %v1152, -inf
        %v2095 = vrot.slane %v2094, 4
        %v2096 = vmax.f32 %v2094, %v2095
        %v2097 = vrot.slane %v2096, 2
        %v2098 = vmax.f32 %v2096, %v2097
        %v2099 = vrot.slane %v2098, 1
        %v2100 = vmax.f32 %v2098, %v2099
        %v2101 = vsel %vm1400, %v1160, -inf
        %v2102 = vrot.slane %v2101, 4
        %v2103 = vmax.f32 %v2101, %v2102
        %v2104 = vrot.slane %v2103, 2
        %v2105 = vmax.f32 %v2103, %v2104
        %v2106 = vrot.slane %v2105, 1
        %v2107 = vmax.f32 %v2105, %v2106
        %v2108 = vsel %vm1400, %v1168, -inf
        %v2109 = vrot.slane %v2108, 4
        %v2110 = vmax.f32 %v2108, %v2109
        %v2111 = vrot.slane %v2110, 2
        %v2112 = vmax.f32 %v2110, %v2111
        %v2113 = vrot.slane %v2112, 1
        %v2114 = vmax.f32 %v2112, %v2113
        %v2115 = vsel %vm1400, %v1167, -inf
        %v2116 = vrot.slane %v2115, 4
        %v2117 = vmax.f32 %v2115, %v2116
        %v2118 = vrot.slane %v2117, 2
        %v2119 = vmax.f32 %v2117, %v2118
        %v2120 = vrot.slane %v2119, 1
        %v2121 = vmax.f32 %v2119, %v2120
        %v2122 = vsel %vm1400, %v1169, -inf
        %v2123 = vrot.slane %v2122, 4
        %v2124 = vmax.f32 %v2122, %v2123
        %v2125 = vrot.slane %v2124, 2
        %v2126 = vmax.f32 %v2124, %v2125
        %v2127 = vrot.slane %v2126, 1
        %v2128 = vmax.f32 %v2126, %v2127
        %v2129 = vsel %vm1400, %v1177, -inf
        %v2130 = vrot.slane %v2129, 4
        %v2131 = vmax.f32 %v2129, %v2130
        %v2132 = vrot.slane %v2131, 2
        %v2133 = vmax.f32 %v2131, %v2132
        %v2134 = vrot.slane %v2133, 1
        %v2135 = vmax.f32 %v2133, %v2134
        %v2136 = vsel %vm1400, %v1185, -inf
        %v2137 = vrot.slane %v2136, 4
        %v2138 = vmax.f32 %v2136, %v2137
        %v2139 = vrot.slane %v2138, 2
        %v2140 = vmax.f32 %v2138, %v2139
        %v2141 = vrot.slane %v2140, 1
        %v2142 = vmax.f32 %v2140, %v2141
        %v2143 = vsel %vm1400, %v1184, -inf
        %v2144 = vrot.slane %v2143, 4
        %v2145 = vmax.f32 %v2143, %v2144
        %v2146 = vrot.slane %v2145, 2
        %v2147 = vmax.f32 %v2145, %v2146
        %v2148 = vrot.slane %v2147, 1
        %v2149 = vmax.f32 %v2147, %v2148
        %v2150 = vsel %vm1400, %v1186, -inf
        %v2151 = vrot.slane %v2150, 4
        %v2152 = vmax.f32 %v2150, %v2151
        %v2153 = vrot.slane %v2152, 2
        %v2154 = vmax.f32 %v2152, %v2153
        %v2155 = vrot.slane %v2154, 1
        %v2156 = vmax.f32 %v2154, %v2155
        %v2157 = vsel %vm1400, %v1194, -inf
        %v2158 = vrot.slane %v2157, 4
        %v2159 = vmax.f32 %v2157, %v2158
        %v2160 = vrot.slane %v2159, 2
        %v2161 = vmax.f32 %v2159, %v2160
        %v2162 = vrot.slane %v2161, 1
        %v2163 = vmax.f32 %v2161, %v2162
        %v2164 = vsel %vm1400, %v1202, -inf
        %v2165 = vrot.slane %v2164, 4
        %v2166 = vmax.f32 %v2164, %v2165
        %v2167 = vrot.slane %v2166, 2
        %v2168 = vmax.f32 %v2166, %v2167
        %v2169 = vrot.slane %v2168, 1
        %v2170 = vmax.f32 %v2168, %v2169
        %v2171 = vsel %vm1400, %v1201, -inf
        %v2172 = vrot.slane %v2171, 4
        %v2173 = vmax.f32 %v2171, %v2172
        %v2174 = vrot.slane %v2173, 2
        %v2175 = vmax.f32 %v2173, %v2174
        %v2176 = vrot.slane %v2175, 1
        %v2177 = vmax.f32 %v2175, %v2176
        %v2178 = vsel %vm1400, %v1203, -inf
        %v2179 = vrot.slane %v2178, 4
        %v2180 = vmax.f32 %v2178, %v2179
        %v2181 = vrot.slane %v2180, 2
        %v2182 = vmax.f32 %v2180, %v2181
        %v2183 = vrot.slane %v2182, 1
        %v2184 = vmax.f32 %v2182, %v2183
        %v2185 = vsel %vm1400, %v1211, -inf
        %v2186 = vrot.slane %v2185, 4
        %v2187 = vmax.f32 %v2185, %v2186
        %v2188 = vrot.slane %v2187, 2
        %v2189 = vmax.f32 %v2187, %v2188
        %v2190 = vrot.slane %v2189, 1
        %v2191 = vmax.f32 %v2189, %v2190
        %v2192 = vsel %vm1400, %v1219, -inf
        %v2193 = vrot.slane %v2192, 4
        %v2194 = vmax.f32 %v2192, %v2193
        %v2195 = vrot.slane %v2194, 2
        %v2196 = vmax.f32 %v2194, %v2195
        %v2197 = vrot.slane %v2196, 1
        %v2198 = vmax.f32 %v2196, %v2197
        %v2199 = vsel %vm1400, %v1218, -inf
        %v2200 = vrot.slane %v2199, 4
        %v2201 = vmax.f32 %v2199, %v2200
        %v2202 = vrot.slane %v2201, 2
        %v2203 = vmax.f32 %v2201, %v2202
        %v2204 = vrot.slane %v2203, 1
        %v2205 = vmax.f32 %v2203, %v2204
        %v2206 = vsel %vm1400, %v1220, -inf
        %v2207 = vrot.slane %v2206, 4
        %v2208 = vmax.f32 %v2206, %v2207
        %v2209 = vrot.slane %v2208, 2
        %v2210 = vmax.f32 %v2208, %v2209
        %v2211 = vrot.slane %v2210, 1
        %v2212 = vmax.f32 %v2210, %v2211
        %v2213 = vsel %vm1400, %v1228, -inf
        %v2214 = vrot.slane %v2213, 4
        %v2215 = vmax.f32 %v2213, %v2214
        %v2216 = vrot.slane %v2215, 2
        %v2217 = vmax.f32 %v2215, %v2216
        %v2218 = vrot.slane %v2217, 1
        %v2219 = vmax.f32 %v2217, %v2218
        %v2220 = vsel %vm1400, %v1236, -inf
        %v2221 = vrot.slane %v2220, 4
        %v2222 = vmax.f32 %v2220, %v2221
        %v2223 = vrot.slane %v2222, 2
        %v2224 = vmax.f32 %v2222, %v2223
        %v2225 = vrot.slane %v2224, 1
        %v2226 = vmax.f32 %v2224, %v2225
        %v2227 = vsel %vm1400, %v1235, -inf
        %v2228 = vrot.slane %v2227, 4
        %v2229 = vmax.f32 %v2227, %v2228
        %v2230 = vrot.slane %v2229, 2
        %v2231 = vmax.f32 %v2229, %v2230
        %v2232 = vrot.slane %v2231, 1
        %v2233 = vmax.f32 %v2231, %v2232
        %v2234 = vsel %vm1400, %v1237, -inf
        %v2235 = vrot.slane %v2234, 4
        %v2236 = vmax.f32 %v2234, %v2235
        %v2237 = vrot.slane %v2236, 2
        %v2238 = vmax.f32 %v2236, %v2237
        %v2239 = vrot.slane %v2238, 1
        %v2240 = vmax.f32 %v2238, %v2239
        %v2241 = vsel %vm1400, %v1245, -inf
        %v2242 = vrot.slane %v2241, 4
        %v2243 = vmax.f32 %v2241, %v2242
        %v2244 = vrot.slane %v2243, 2
        %v2245 = vmax.f32 %v2243, %v2244
        %v2246 = vrot.slane %v2245, 1
        %v2247 = vmax.f32 %v2245, %v2246
        %v2248 = vsel %vm1400, %v1253, -inf
        %v2249 = vrot.slane %v2248, 4
        %v2250 = vmax.f32 %v2248, %v2249
        %v2251 = vrot.slane %v2250, 2
        %v2252 = vmax.f32 %v2250, %v2251
        %v2253 = vrot.slane %v2252, 1
        %v2254 = vmax.f32 %v2252, %v2253
        %v2255 = vsel %vm1400, %v1252, -inf
        %v2256 = vrot.slane %v2255, 4
        %v2257 = vmax.f32 %v2255, %v2256
        %v2258 = vrot.slane %v2257, 2
        %v2259 = vmax.f32 %v2257, %v2258
        %v2260 = vrot.slane %v2259, 1
        %v2261 = vmax.f32 %v2259, %v2260
        %v2262 = vsel %vm1400, %v1254, -inf
        %v2263 = vrot.slane %v2262, 4
        %v2264 = vmax.f32 %v2262, %v2263
        %v2265 = vrot.slane %v2264, 2
        %v2266 = vmax.f32 %v2264, %v2265
        %v2267 = vrot.slane %v2266, 1
        %v2268 = vmax.f32 %v2266, %v2267
        %v2269 = vsel %vm1400, %v1262, -inf
        %v2270 = vrot.slane %v2269, 4
        %v2271 = vmax.f32 %v2269, %v2270
        %v2272 = vrot.slane %v2271, 2
        %v2273 = vmax.f32 %v2271, %v2272
        %v2274 = vrot.slane %v2273, 1
        %v2275 = vmax.f32 %v2273, %v2274
        %v2276 = vsel %vm1400, %v1270, -inf
        %v2277 = vrot.slane %v2276, 4
        %v2278 = vmax.f32 %v2276, %v2277
        %v2279 = vrot.slane %v2278, 2
        %v2280 = vmax.f32 %v2278, %v2279
        %v2281 = vrot.slane %v2280, 1
        %v2282 = vmax.f32 %v2280, %v2281
        %v2283 = vsel %vm1400, %v1269, -inf
        %v2284 = vrot.slane %v2283, 4
        %v2285 = vmax.f32 %v2283, %v2284
        %v2286 = vrot.slane %v2285, 2
        %v2287 = vmax.f32 %v2285, %v2286
        %v2288 = vrot.slane %v2287, 1
        %v2289 = vmax.f32 %v2287, %v2288
        %v2290 = vsel %vm1400, %v1271, -inf
        %v2291 = vrot.slane %v2290, 4
        %v2292 = vmax.f32 %v2290, %v2291
        %v2293 = vrot.slane %v2292, 2
        %v2294 = vmax.f32 %v2292, %v2293
        %v2295 = vrot.slane %v2294, 1
        %v2296 = vmax.f32 %v2294, %v2295
        %v2297 = vmax.f32 %v1407, %v1463
        %v2298 = vmax.f32 %v1414, %v1470
        %v2299 = vmax.f32 %v1421, %v1477
        %v2300 = vmax.f32 %v1428, %v1484
        %v2301 = vmax.f32 %v1435, %v1491
        %v2302 = vmax.f32 %v1442, %v1498
        %v2303 = vmax.f32 %v1449, %v1505
        %v2304 = vmax.f32 %v1456, %v1512
        %v2305 = vmax.f32 %v1519, %v1575
        %v2306 = vmax.f32 %v1526, %v1582
        %v2307 = vmax.f32 %v1533, %v1589
        %v2308 = vmax.f32 %v1540, %v1596
        %v2309 = vmax.f32 %v1547, %v1603
        %v2310 = vmax.f32 %v1554, %v1610
        %v2311 = vmax.f32 %v1561, %v1617
        %v2312 = vmax.f32 %v1568, %v1624
        %v2313 = vmax.f32 %v1631, %v1687
        %v2314 = vmax.f32 %v1638, %v1694
        %v2315 = vmax.f32 %v1645, %v1701
        %v2316 = vmax.f32 %v1652, %v1708
        %v2317 = vmax.f32 %v1659, %v1715
        %v2318 = vmax.f32 %v1666, %v1722
        %v2319 = vmax.f32 %v1673, %v1729
        %v2320 = vmax.f32 %v1680, %v1736
        %v2321 = vmax.f32 %v1743, %v1799
        %v2322 = vmax.f32 %v1750, %v1806
        %v2323 = vmax.f32 %v1757, %v1813
        %v2324 = vmax.f32 %v1764, %v1820
        %v2325 = vmax.f32 %v1771, %v1827
        %v2326 = vmax.f32 %v1778, %v1834
        %v2327 = vmax.f32 %v1785, %v1841
        %v2328 = vmax.f32 %v1792, %v1848
        %v2329 = vmax.f32 %v1855, %v1911
        %v2330 = vmax.f32 %v1862, %v1918
        %v2331 = vmax.f32 %v1869, %v1925
        %v2332 = vmax.f32 %v1876, %v1932
        %v2333 = vmax.f32 %v1883, %v1939
        %v2334 = vmax.f32 %v1890, %v1946
        %v2335 = vmax.f32 %v1897, %v1953
        %v2336 = vmax.f32 %v1904, %v1960
        %v2337 = vmax.f32 %v1967, %v2023
        %v2338 = vmax.f32 %v1974, %v2030
        %v2339 = vmax.f32 %v1981, %v2037
        %v2340 = vmax.f32 %v1988, %v2044
        %v2341 = vmax.f32 %v1995, %v2051
        %v2342 = vmax.f32 %v2002, %v2058
        %v2343 = vmax.f32 %v2009, %v2065
        %v2344 = vmax.f32 %v2016, %v2072
        %v2345 = vmax.f32 %v2079, %v2135
        %v2346 = vmax.f32 %v2086, %v2142
        %v2347 = vmax.f32 %v2093, %v2149
        %v2348 = vmax.f32 %v2100, %v2156
        %v2349 = vmax.f32 %v2107, %v2163
        %v2350 = vmax.f32 %v2114, %v2170
        %v2351 = vmax.f32 %v2121, %v2177
        %v2352 = vmax.f32 %v2128, %v2184
        %v2353 = vmax.f32 %v2191, %v2247
        %v2354 = vmax.f32 %v2198, %v2254
        %v2355 = vmax.f32 %v2205, %v2261
        %v2356 = vmax.f32 %v2212, %v2268
        %v2357 = vmax.f32 %v2219, %v2275
        %v2358 = vmax.f32 %v2226, %v2282
        %v2359 = vmax.f32 %v2233, %v2289
        %v2360 = vmax.f32 %v2240, %v2296
        %vm2425 = vcmask 1041409
        %v2426 = vsel %vm2425, %v2298, %v2297
        %vm2427 = vcmask 1042434
        %v2428 = vsel %vm2427, %v2299, %v2426
        %vm2429 = vcmask 1043459
        %v2430 = vsel %vm2429, %v2300, %v2428
        %vm2431 = vcmask 1044484
        %v2432 = vsel %vm2431, %v2301, %v2430
        %vm2433 = vcmask 1045509
        %v2434 = vsel %vm2433, %v2302, %v2432
        %vm2435 = vcmask 1046534
        %v2436 = vsel %vm2435, %v2303, %v2434
        %vm2437 = vcmask 1047559
        %v2438 = vsel %vm2437, %v2304, %v2436
        %v2439 = vsel %vm2425, %v2306, %v2305
        %v2440 = vsel %vm2427, %v2307, %v2439
        %v2441 = vsel %vm2429, %v2308, %v2440
        %v2442 = vsel %vm2431, %v2309, %v2441
        %v2443 = vsel %vm2433, %v2310, %v2442
        %v2444 = vsel %vm2435, %v2311, %v2443
        %v2445 = vsel %vm2437, %v2312, %v2444
        %v2446 = vsel %vm2425, %v2314, %v2313
        %v2447 = vsel %vm2427, %v2315, %v2446
        %v2448 = vsel %vm2429, %v2316, %v2447
        %v2449 = vsel %vm2431, %v2317, %v2448
        %v2450 = vsel %vm2433, %v2318, %v2449
        %v2451 = vsel %vm2435, %v2319, %v2450
        %v2452 = vsel %vm2437, %v2320, %v2451
        %v2453 = vsel %vm2425, %v2322, %v2321
        %v2454 = vsel %vm2427, %v2323, %v2453
        %v2455 = vsel %vm2429, %v2324, %v2454
        %v2456 = vsel %vm2431, %v2325, %v2455
        %v2457 = vsel %vm2433, %v2326, %v2456
        %v2458 = vsel %vm2435, %v2327, %v2457
        %v2459 = vsel %vm2437, %v2328, %v2458
        %v2460 = vsel %vm2425, %v2330, %v2329
        %v2461 = vsel %vm2427, %v2331, %v2460
        %v2462 = vsel %vm2429, %v2332, %v2461
        %v2463 = vsel %vm2431, %v2333, %v2462
        %v2464 = vsel %vm2433, %v2334, %v2463
        %v2465 = vsel %vm2435, %v2335, %v2464
        %v2466 = vsel %vm2437, %v2336, %v2465
        %v2467 = vsel %vm2425, %v2338, %v2337
        %v2468 = vsel %vm2427, %v2339, %v2467
        %v2469 = vsel %vm2429, %v2340, %v2468
        %v2470 = vsel %vm2431, %v2341, %v2469
        %v2471 = vsel %vm2433, %v2342, %v2470
        %v2472 = vsel %vm2435, %v2343, %v2471
        %v2473 = vsel %vm2437, %v2344, %v2472
        %v2474 = vsel %vm2425, %v2346, %v2345
        %v2475 = vsel %vm2427, %v2347, %v2474
        %v2476 = vsel %vm2429, %v2348, %v2475
        %v2477 = vsel %vm2431, %v2349, %v2476
        %v2478 = vsel %vm2433, %v2350, %v2477
        %v2479 = vsel %vm2435, %v2351, %v2478
        %v2480 = vsel %vm2437, %v2352, %v2479
        %v2481 = vsel %vm2425, %v2354, %v2353
        %v2482 = vsel %vm2427, %v2355, %v2481
        %v2483 = vsel %vm2429, %v2356, %v2482
        %v2484 = vsel %vm2431, %v2357, %v2483
        %v2485 = vsel %vm2433, %v2358, %v2484
        %v2486 = vsel %vm2435, %v2359, %v2485
        %v2487 = vsel %vm2437, %v2360, %v2486
        %2496 = vst [vmem:[#allocation2] sm:$0xff] %v2438
        %2497 = vst [vmem:[#allocation2 + $0x8] sm:$0xff] %v2445
        %2498 = vst [vmem:[#allocation2 + $0x10] sm:$0xff] %v2452
        %2499 = vst [vmem:[#allocation2 + $0x18] sm:$0xff] %v2459
        %2500 = vst [vmem:[#allocation2 + $0x20] sm:$0xff] %v2466
        %2501 = vst [vmem:[#allocation2 + $0x28] sm:$0xff] %v2473
        %2502 = vst [vmem:[#allocation2 + $0x30] sm:$0xff] %v2480
        %2503 = vst [vmem:[#allocation2 + $0x38] sm:$0xff] %v2487
        %2504 = vst [vmem:[#allocation3] sm:$0xff] 0.0
        %2505 = vst [vmem:[#allocation3 + $0x8] sm:$0x3] 0.0
        %2506 = vst [vmem:[#allocation3 + $0x10] sm:$0xff] 0.0
        %2507 = vst [vmem:[#allocation3 + $0x18] sm:$0x3] 0.0
        %2508 = vst [vmem:[#allocation3 + $0x20] sm:$0xff] 0.0
        %2509 = vst [vmem:[#allocation3 + $0x28] sm:$0x3] 0.0
        %2510 = vst [vmem:[#allocation3 + $0x30] sm:$0xff] 0.0
        %2511 = vst [vmem:[#allocation3 + $0x38] sm:$0x3] 0.0
        %2512 = vst [vmem:[#allocation3 + $0x40] sm:$0xff] 0.0
        %2513 = vst [vmem:[#allocation3 + $0x48] sm:$0x3] 0.0
        %2514 = vst [vmem:[#allocation3 + $0x50] sm:$0xff] 0.0
        %2515 = vst [vmem:[#allocation3 + $0x58] sm:$0x3] 0.0
        %2516 = vst [vmem:[#allocation3 + $0x60] sm:$0xff] 0.0
        %2517 = vst [vmem:[#allocation3 + $0x68] sm:$0x3] 0.0
        %2518 = vst [vmem:[#allocation3 + $0x70] sm:$0xff] 0.0
        %2519 = vst [vmem:[#allocation3 + $0x78] sm:$0x3] 0.0
        %2520 = vst [vmem:[#allocation3 + $0x80] sm:$0xff] 0.0
        %2521 = vst [vmem:[#allocation3 + $0x88] sm:$0x3] 0.0
        %2522 = vst [vmem:[#allocation3 + $0x90] sm:$0xff] 0.0
        %2523 = vst [vmem:[#allocation3 + $0x98] sm:$0x3] 0.0
        %v2524 = vld [vmem:[%s3] sm:$0x7]
        %v2525 = vld [vmem:[#allocation2] sm:$0xff]
        %v2526 = vld [vmem:[#allocation2 + $0x8] sm:$0xff]
        %v2527 = vld [vmem:[#allocation2 + $0x10] sm:$0xff]
        %v2528 = vld [vmem:[#allocation2 + $0x18] sm:$0xff]
        %v2529 = vld [vmem:[#allocation2 + $0x20] sm:$0xff]
        %v2530 = vld [vmem:[#allocation2 + $0x28] sm:$0xff]
        %v2531 = vld [vmem:[#allocation2 + $0x30] sm:$0xff]
        %v2532 = vld [vmem:[#allocation2 + $0x38] sm:$0xff]
        %v2533 = vlaneseq
        %v2534 = vshrl.u32 %v2533, 7
        %v2535 = vsub.s32 0, %v2534
        %v2536 = vrot.slane %v2524, %v2535
        %v2537 = vmul.f32 %v2525, %v2536
        %v2538 = vmul.f32 %v2526, %v2536
        %v2539 = vmul.f32 %v2527, %v2536
        %v2540 = vmul.f32 %v2528, %v2536
        %v2541 = vmul.f32 %v2529, %v2536
        %v2542 = vmul.f32 %v2530, %v2536
        %v2543 = vmul.f32 %v2531, %v2536
        %v2544 = vmul.f32 %v2532, %v2536
        %v2545 = vlaneseq
        %v2546 = vshrl.u32 %v2545, 7
        %v2547 = vsub.s32 1, %v2546
        %v2548 = vrot.slane %v2524, %v2547
        %v2549 = vadd.f32 %v2537, %v2548
        %v2550 = vadd.f32 %v2538, %v2548
        %v2551 = vadd.f32 %v2539, %v2548
        %v2552 = vadd.f32 %v2540, %v2548
        %v2553 = vadd.f32 %v2541, %v2548
        %v2554 = vadd.f32 %v2542, %v2548
        %v2555 = vadd.f32 %v2543, %v2548
        %v2556 = vadd.f32 %v2544, %v2548
        %v2557 = vmax.f32 %v2549, 0.0
        %v2558 = vmax.f32 %v2550, 0.0
        %v2559 = vmax.f32 %v2551, 0.0
        %v2560 = vmax.f32 %v2552, 0.0
        %v2561 = vmax.f32 %v2553, 0.0
        %v2562 = vmax.f32 %v2554, 0.0
        %v2563 = vmax.f32 %v2555, 0.0
        %v2564 = vmax.f32 %v2556, 0.0
        %v2565 = vpack.c.bf16 %v2558, %v2557
        %v2566 = vpack.c.bf16 %v2560, %v2559
        %v2567 = vpack.c.bf16 %v2562, %v2561
        %v2568 = vpack.c.bf16 %v2564, %v2563
        %v2569 = vld [vmem:[%s4] sm:$0xf]
        %v2570 = vld [vmem:[%s4 + $0x4] sm:$0xf]
        %v2571 = vld [vmem:[%s4 + $0x8] sm:$0xf]
        %v2572 = vld [vmem:[%s4 + $0xc] sm:$0xf]
        %v2573 = vld [vmem:[%s4 + $0x10] sm:$0xf]
        %v2574 = vld [vmem:[%s4 + $0x14] sm:$0xf]
        %v2575 = vld [vmem:[%s4 + $0x18] sm:$0xf]
        %v2576 = vld [vmem:[%s4 + $0x1c] sm:$0xf]
        %v2577 = vld [vmem:[%s4 + $0x20] sm:$0xf]
        %v2578 = vld [vmem:[%s4 + $0x24] sm:$0xf]
        %v2579 = vld [vmem:[%s4 + $0x28] sm:$0xf]
        %v2580 = vld [vmem:[%s4 + $0x2c] sm:$0xf]
        %v2581 = vld [vmem:[%s4 + $0x30] sm:$0xf]
        %v2582 = vld [vmem:[%s4 + $0x34] sm:$0xf]
        %v2583 = vld [vmem:[%s4 + $0x38] sm:$0xf]
        %v2584 = vld [vmem:[%s4 + $0x3c] sm:$0xf]
        %v2585 = vlaneseq
        %v2586 = vshrl.u32 %v2585, 7
        %v2587 = vsub.s32 2, %v2586
        %v2588 = vrot.slane %v2524, %v2587
        %v2605 = vunpack.c.l.b16 %v2569
        %v2606 = vunpack.c.l.b16 %v2570
        %v2607 = vunpack.c.l.b16 %v2571
        %v2608 = vunpack.c.l.b16 %v2572
        %v2609 = vunpack.c.l.b16 %v2573
        %v2610 = vunpack.c.l.b16 %v2574
        %v2611 = vunpack.c.l.b16 %v2575
        %v2612 = vunpack.c.l.b16 %v2576
        %v2613 = vunpack.c.l.b16 %v2577
        %v2614 = vunpack.c.l.b16 %v2578
        %v2615 = vunpack.c.l.b16 %v2579
        %v2616 = vunpack.c.l.b16 %v2580
        %v2617 = vunpack.c.l.b16 %v2581
        %v2618 = vunpack.c.l.b16 %v2582
        %v2619 = vunpack.c.l.b16 %v2583
        %v2620 = vunpack.c.l.b16 %v2584
        %v2621 = vpack.c.b16 %v2606, %v2605
        %v2622 = vpack.c.b16 %v2608, %v2607
        %v2623 = vpack.c.b16 %v2610, %v2609
        %v2624 = vpack.c.b16 %v2612, %v2611
        %v2625 = vpack.c.b16 %v2614, %v2613
        %v2626 = vpack.c.b16 %v2616, %v2615
        %v2627 = vpack.c.b16 %v2618, %v2617
        %v2628 = vpack.c.b16 %v2620, %v2619
        %2637 = vmatprep.subr.bf16.mxu0 0
        %2638 = vmatpush1.bf16.msra.mxu0 %v2621
        %2639 = vmatprep.subr.bf16.mxu0 0
        %2640 = vmatpush1.bf16.msra.mxu0 %v2622
        %2641 = vmatprep.subr.bf16.mxu0 0
        %2642 = vmatpush1.bf16.msra.mxu0 %v2623
        %2643 = vmatprep.subr.bf16.mxu0 0
        %2644 = vmatpush1.bf16.msra.mxu0 %v2624
        %2645 = vmatprep.subr.bf16.mxu0 0
        %2646 = vmatpush1.bf16.msra.mxu0 %v2625
        %2647 = vmatprep.subr.bf16.mxu0 0
        %2648 = vmatpush1.bf16.msra.mxu0 %v2626
        %2649 = vmatprep.subr.bf16.mxu0 0
        %2650 = vmatpush1.bf16.msra.mxu0 %v2627
        %2651 = vmatprep.subr.bf16.mxu0 0
        %2652 = vmatpush1.bf16.msra.mxu0 %v2628
        %2653 = vmatprep.subr.bf16.mxu0 0
        %2654 = vmatpush1.bf16.msra.mxu0 0
        %2655 = vmatprep.subr.bf16.mxu0 0
        %2656 = vmatpush1.bf16.msra.mxu0 0
        %2657 = vmatprep.subr.bf16.mxu0 0
        %2658 = vmatpush1.bf16.msra.mxu0 0
        %2659 = vmatprep.subr.bf16.mxu0 0
        %2660 = vmatpush1.bf16.msra.mxu0 0
        %2661 = vmatprep.subr.bf16.mxu0 0
        %2662 = vmatpush1.bf16.msra.mxu0 0
        %2663 = vmatprep.subr.bf16.mxu0 0
        %2664 = vmatpush1.bf16.msra.mxu0 0
        %2665 = vmatprep.subr.bf16.mxu0 0
        %2666 = vmatpush1.bf16.msra.mxu0 0
        %2667 = vmatprep.subr.bf16.mxu0 0
        %2668 = vmatpush1.bf16.msra.mxu0 0
        %2669 = vmatprep.mubr.bf16.mxu0 0
        %2670 = vmatmul.mubr.bf16.gmra.mrb[0].mxu0 %v2565
        %v2671 = vpop.f32.mrb[0].mxu0
        %v2672 = vadd.f32 %v2588, %v2671
        %v2673 = vpop.f32.mrb[0].mxu0
        %v2674 = vpop.f32.mrb[0].mxu0
        %v2675 = vadd.f32 %v2588, %v2674
        %v2676 = vpop.f32.mrb[0].mxu0
        %2677 = vmatprep.mubr.bf16.mxu0 0
        %2678 = vmatmul.mubr.bf16.gmra.mrb[0].mxu0 %v2566
        %v2679 = vpop.f32.mrb[0].mxu0
        %v2680 = vadd.f32 %v2588, %v2679
        %v2681 = vpop.f32.mrb[0].mxu0
        %v2682 = vpop.f32.mrb[0].mxu0
        %v2683 = vadd.f32 %v2588, %v2682
        %v2684 = vpop.f32.mrb[0].mxu0
        %2685 = vmatprep.mubr.bf16.mxu0 0
        %2686 = vmatmul.mubr.bf16.gmra.mrb[0].mxu0 %v2567
        %v2687 = vpop.f32.mrb[0].mxu0
        %v2688 = vadd.f32 %v2588, %v2687
        %v2689 = vpop.f32.mrb[0].mxu0
        %v2690 = vpop.f32.mrb[0].mxu0
        %v2691 = vadd.f32 %v2588, %v2690
        %v2692 = vpop.f32.mrb[0].mxu0
        %2693 = vmatprep.mubr.bf16.mxu0 0
        %2694 = vmatmul.mubr.bf16.gmra.mrb[0].mxu0 %v2568
        %v2695 = vpop.f32.mrb[0].mxu0
        %v2696 = vadd.f32 %v2588, %v2695
        %v2697 = vpop.f32.mrb[0].mxu0
        %v2698 = vpop.f32.mrb[0].mxu0
        %v2699 = vadd.f32 %v2588, %v2698
        %v2700 = vpop.f32.mrb[0].mxu0
        %2701 = vdwg.mxu0
        %v2702 = vmax.f32 %v2672, 0.0
        %v2703 = vmax.f32 %v2675, 0.0
        %v2704 = vmax.f32 %v2680, 0.0
        %v2705 = vmax.f32 %v2683, 0.0
        %v2706 = vmax.f32 %v2688, 0.0
        %v2707 = vmax.f32 %v2691, 0.0
        %v2708 = vmax.f32 %v2696, 0.0
        %v2709 = vmax.f32 %v2699, 0.0
        %s2710 = scalar_lea.vmem [#allocation3], 16
        %2711 = vst [vmem:[%s2710 + $0x1] sm:$0xff] %v2702
        %2712 = vst [vmem:[%s2710 + $0x11] sm:$0xff] %v2703
        %2713 = vst [vmem:[%s2710 + $0x21] sm:$0xff] %v2704
        %2714 = vst [vmem:[%s2710 + $0x31] sm:$0xff] %v2705
        %2715 = vst [vmem:[%s2710 + $0x41] sm:$0xff] %v2706
        %2716 = vst [vmem:[%s2710 + $0x51] sm:$0xff] %v2707
        %2717 = vst [vmem:[%s2710 + $0x61] sm:$0xff] %v2708
        %2718 = vst [vmem:[%s2710 + $0x71] sm:$0xff] %v2709
        %v2719 = vld [vmem:[#allocation3] sm:$0xff]
        %v2720 = vld [vmem:[#allocation3 + $0x10] sm:$0xff]
        %v2721 = vld [vmem:[#allocation3 + $0x20] sm:$0xff]
        %v2722 = vld [vmem:[#allocation3 + $0x30] sm:$0xff]
        %v2723 = vld [vmem:[#allocation3 + $0x40] sm:$0xff]
        %v2724 = vld [vmem:[#allocation3 + $0x50] sm:$0xff]
        %v2725 = vld [vmem:[#allocation3 + $0x60] sm:$0xff]
        %v2726 = vld [vmem:[#allocation3 + $0x70] sm:$0xff]
        %v2727 = vld [vmem:[%s5] sm:$0xf]
        %v2728 = vld [vmem:[%s5 + $0x4] sm:$0xf]
        %v2729 = vld [vmem:[%s5 + $0x8] sm:$0xf]
        %v2730 = vld [vmem:[%s5 + $0xc] sm:$0xf]
        %v2731 = vld [vmem:[%s5 + $0x10] sm:$0xf]
        %v2732 = vld [vmem:[%s5 + $0x14] sm:$0xf]
        %v2733 = vld [vmem:[%s5 + $0x18] sm:$0xf]
        %v2734 = vld [vmem:[%s5 + $0x1c] sm:$0xf]
        %v2735 = vld [vmem:[%s5 + $0x20] sm:$0xf]
        %v2736 = vld [vmem:[%s5 + $0x24] sm:$0xf]
        %v2737 = vld [vmem:[%s5 + $0x28] sm:$0xf]
        %v2738 = vld [vmem:[%s5 + $0x2c] sm:$0xf]
        %v2739 = vld [vmem:[%s5 + $0x30] sm:$0xf]
        %v2740 = vld [vmem:[%s5 + $0x34] sm:$0xf]
        %v2741 = vld [vmem:[%s5 + $0x38] sm:$0xf]
        %v2742 = vld [vmem:[%s5 + $0x3c] sm:$0xf]
        %v2743 = vpack.c.bf16 %v2720, %v2719
        %v2744 = vpack.c.bf16 %v2722, %v2721
        %v2745 = vpack.c.bf16 %v2724, %v2723
        %v2746 = vpack.c.bf16 %v2726, %v2725
        %v2747 = vld [vmem:[#allocation3 + $0x1] sm:$0xff]
        %v2748 = vld [vmem:[#allocation3 + $0x11] sm:$0xff]
        %v2749 = vld [vmem:[#allocation3 + $0x21] sm:$0xff]
        %v2750 = vld [vmem:[#allocation3 + $0x31] sm:$0xff]
        %v2751 = vld [vmem:[#allocation3 + $0x41] sm:$0xff]
        %v2752 = vld [vmem:[#allocation3 + $0x51] sm:$0xff]
        %v2753 = vld [vmem:[#allocation3 + $0x61] sm:$0xff]
        %v2754 = vld [vmem:[#allocation3 + $0x71] sm:$0xff]
        %v2755 = vld [vmem:[%s5 + $0x40] sm:$0xf]
        %v2756 = vld [vmem:[%s5 + $0x44] sm:$0xf]
        %v2757 = vld [vmem:[%s5 + $0x48] sm:$0xf]
        %v2758 = vld [vmem:[%s5 + $0x4c] sm:$0xf]
        %v2759 = vld [vmem:[%s5 + $0x50] sm:$0xf]
        %v2760 = vld [vmem:[%s5 + $0x54] sm:$0xf]
        %v2761 = vld [vmem:[%s5 + $0x58] sm:$0xf]
        %v2762 = vld [vmem:[%s5 + $0x5c] sm:$0xf]
        %v2763 = vld [vmem:[%s5 + $0x60] sm:$0xf]
        %v2764 = vld [vmem:[%s5 + $0x64] sm:$0xf]
        %v2765 = vld [vmem:[%s5 + $0x68] sm:$0xf]
        %v2766 = vld [vmem:[%s5 + $0x6c] sm:$0xf]
        %v2767 = vld [vmem:[%s5 + $0x70] sm:$0xf]
        %v2768 = vld [vmem:[%s5 + $0x74] sm:$0xf]
        %v2769 = vld [vmem:[%s5 + $0x78] sm:$0xf]
        %v2770 = vld [vmem:[%s5 + $0x7c] sm:$0xf]
        %v2771 = vpack.c.bf16 %v2748, %v2747
        %v2772 = vpack.c.bf16 %v2750, %v2749
        %v2773 = vpack.c.bf16 %v2752, %v2751
        %v2774 = vpack.c.bf16 %v2754, %v2753
        %v2791 = vunpack.c.l.b16 %v2755
        %v2792 = vunpack.c.l.b16 %v2756
        %v2793 = vunpack.c.l.b16 %v2757
        %v2794 = vunpack.c.l.b16 %v2758
        %v2795 = vunpack.c.l.b16 %v2759
        %v2796 = vunpack.c.l.b16 %v2760
        %v2797 = vunpack.c.l.b16 %v2761
        %v2798 = vunpack.c.l.b16 %v2762
        %v2799 = vunpack.c.l.b16 %v2763
        %v2800 = vunpack.c.l.b16 %v2764
        %v2801 = vunpack.c.l.b16 %v2765
        %v2802 = vunpack.c.l.b16 %v2766
        %v2803 = vunpack.c.l.b16 %v2767
        %v2804 = vunpack.c.l.b16 %v2768
        %v2805 = vunpack.c.l.b16 %v2769
        %v2806 = vunpack.c.l.b16 %v2770
        %v2807 = vpack.c.b16 %v2792, %v2791
        %v2808 = vpack.c.b16 %v2794, %v2793
        %v2809 = vpack.c.b16 %v2796, %v2795
        %v2810 = vpack.c.b16 %v2798, %v2797
        %v2811 = vpack.c.b16 %v2800, %v2799
        %v2812 = vpack.c.b16 %v2802, %v2801
        %v2813 = vpack.c.b16 %v2804, %v2803
        %v2814 = vpack.c.b16 %v2806, %v2805
        %2823 = vmatprep.subr.bf16.mxu0 0
        %2824 = vmatpush1.bf16.msra.mxu0 %v2807
        %2825 = vmatprep.subr.bf16.mxu0 0
        %2826 = vmatpush1.bf16.msra.mxu0 %v2808
        %2827 = vmatprep.subr.bf16.mxu0 0
        %2828 = vmatpush1.bf16.msra.mxu0 %v2809
        %2829 = vmatprep.subr.bf16.mxu0 0
        %2830 = vmatpush1.bf16.msra.mxu0 %v2810
        %2831 = vmatprep.subr.bf16.mxu0 0
        %2832 = vmatpush1.bf16.msra.mxu0 %v2811
        %2833 = vmatprep.subr.bf16.mxu0 0
        %2834 = vmatpush1.bf16.msra.mxu0 %v2812
        %2835 = vmatprep.subr.bf16.mxu0 0
        %2836 = vmatpush1.bf16.msra.mxu0 %v2813
        %2837 = vmatprep.subr.bf16.mxu0 0
        %2838 = vmatpush1.bf16.msra.mxu0 %v2814
        %2839 = vmatprep.subr.bf16.mxu0 0
        %2840 = vmatpush1.bf16.msra.mxu0 0
        %2841 = vmatprep.subr.bf16.mxu0 0
        %2842 = vmatpush1.bf16.msra.mxu0 0
        %2843 = vmatprep.subr.bf16.mxu0 0
        %2844 = vmatpush1.bf16.msra.mxu0 0
        %2845 = vmatprep.subr.bf16.mxu0 0
        %2846 = vmatpush1.bf16.msra.mxu0 0
        %2847 = vmatprep.subr.bf16.mxu0 0
        %2848 = vmatpush1.bf16.msra.mxu0 0
        %2849 = vmatprep.subr.bf16.mxu0 0
        %2850 = vmatpush1.bf16.msra.mxu0 0
        %2851 = vmatprep.subr.bf16.mxu0 0
        %2852 = vmatpush1.bf16.msra.mxu0 0
        %2853 = vmatprep.subr.bf16.mxu0 0
        %2854 = vmatpush1.bf16.msra.mxu0 0
        %2855 = vmatprep.mubr.bf16.mxu0 0
        %2856 = vmatmul.mubr.bf16.gmra.mrb[0].mxu0 %v2771
        %v2857 = vpop.f32.mrb[0].mxu0
        %v2858 = vadd.f32 0.0, %v2857
        %v2859 = vpop.f32.mrb[0].mxu0
        %v2860 = vpop.f32.mrb[0].mxu0
        %v2861 = vadd.f32 0.0, %v2860
        %v2862 = vpop.f32.mrb[0].mxu0
        %2863 = vmatprep.mubr.bf16.mxu0 0
        %2864 = vmatmul.mubr.bf16.gmra.mrb[0].mxu0 %v2772
        %v2865 = vpop.f32.mrb[0].mxu0
        %v2866 = vadd.f32 0.0, %v2865
        %v2867 = vpop.f32.mrb[0].mxu0
        %v2868 = vpop.f32.mrb[0].mxu0
        %v2869 = vadd.f32 0.0, %v2868
        %v2870 = vpop.f32.mrb[0].mxu0
        %2871 = vmatprep.mubr.bf16.mxu0 0
        %2872 = vmatmul.mubr.bf16.gmra.mrb[0].mxu0 %v2773
        %v2873 = vpop.f32.mrb[0].mxu0
        %v2874 = vadd.f32 0.0, %v2873
        %v2875 = vpop.f32.mrb[0].mxu0
        %v2876 = vpop.f32.mrb[0].mxu0
        %v2877 = vadd.f32 0.0, %v2876
        %v2878 = vpop.f32.mrb[0].mxu0
        %2879 = vmatprep.mubr.bf16.mxu0 0
        %2880 = vmatmul.mubr.bf16.gmra.mrb[0].mxu0 %v2774
        %v2881 = vpop.f32.mrb[0].mxu0
        %v2882 = vadd.f32 0.0, %v2881
        %v2883 = vpop.f32.mrb[0].mxu0
        %v2884 = vpop.f32.mrb[0].mxu0
        %v2885 = vadd.f32 0.0, %v2884
        %v2886 = vpop.f32.mrb[0].mxu0
        %2887 = vdwg.mxu0
        %v2904 = vunpack.c.l.b16 %v2727
        %v2905 = vunpack.c.l.b16 %v2728
        %v2906 = vunpack.c.l.b16 %v2729
        %v2907 = vunpack.c.l.b16 %v2730
        %v2908 = vunpack.c.l.b16 %v2731
        %v2909 = vunpack.c.l.b16 %v2732
        %v2910 = vunpack.c.l.b16 %v2733
        %v2911 = vunpack.c.l.b16 %v2734
        %v2912 = vunpack.c.l.b16 %v2735
        %v2913 = vunpack.c.l.b16 %v2736
        %v2914 = vunpack.c.l.b16 %v2737
        %v2915 = vunpack.c.l.b16 %v2738
        %v2916 = vunpack.c.l.b16 %v2739
        %v2917 = vunpack.c.l.b16 %v2740
        %v2918 = vunpack.c.l.b16 %v2741
        %v2919 = vunpack.c.l.b16 %v2742
        %v2920 = vpack.c.b16 %v2905, %v2904
        %v2921 = vpack.c.b16 %v2907, %v2906
        %v2922 = vpack.c.b16 %v2909, %v2908
        %v2923 = vpack.c.b16 %v2911, %v2910
        %v2924 = vpack.c.b16 %v2913, %v2912
        %v2925 = vpack.c.b16 %v2915, %v2914
        %v2926 = vpack.c.b16 %v2917, %v2916
        %v2927 = vpack.c.b16 %v2919, %v2918
        %2936 = vmatprep.subr.bf16.mxu0 0
        %2937 = vmatpush1.bf16.msra.mxu0 %v2920
        %2938 = vmatprep.subr.bf16.mxu0 0
        %2939 = vmatpush1.bf16.msra.mxu0 %v2921
        %2940 = vmatprep.subr.bf16.mxu0 0
        %2941 = vmatpush1.bf16.msra.mxu0 %v2922
        %2942 = vmatprep.subr.bf16.mxu0 0
        %2943 = vmatpush1.bf16.msra.mxu0 %v2923
        %2944 = vmatprep.subr.bf16.mxu0 0
        %2945 = vmatpush1.bf16.msra.mxu0 %v2924
        %2946 = vmatprep.subr.bf16.mxu0 0
        %2947 = vmatpush1.bf16.msra.mxu0 %v2925
        %2948 = vmatprep.subr.bf16.mxu0 0
        %2949 = vmatpush1.bf16.msra.mxu0 %v2926
        %2950 = vmatprep.subr.bf16.mxu0 0
        %2951 = vmatpush1.bf16.msra.mxu0 %v2927
        %2952 = vmatprep.subr.bf16.mxu0 0
        %2953 = vmatpush1.bf16.msra.mxu0 0
        %2954 = vmatprep.subr.bf16.mxu0 0
        %2955 = vmatpush1.bf16.msra.mxu0 0
        %2956 = vmatprep.subr.bf16.mxu0 0
        %2957 = vmatpush1.bf16.msra.mxu0 0
        %2958 = vmatprep.subr.bf16.mxu0 0
        %2959 = vmatpush1.bf16.msra.mxu0 0
        %2960 = vmatprep.subr.bf16.mxu0 0
        %2961 = vmatpush1.bf16.msra.mxu0 0
        %2962 = vmatprep.subr.bf16.mxu0 0
        %2963 = vmatpush1.bf16.msra.mxu0 0
        %2964 = vmatprep.subr.bf16.mxu0 0
        %2965 = vmatpush1.bf16.msra.mxu0 0
        %2966 = vmatprep.subr.bf16.mxu0 0
        %2967 = vmatpush1.bf16.msra.mxu0 0
        %2968 = vmatprep.mubr.bf16.mxu0 0
        %2969 = vmatmul.mubr.bf16.gmra.mrb[0].mxu0 %v2743
        %v2970 = vpop.f32.mrb[0].mxu0
        %v2971 = vadd.f32 %v2858, %v2970
        %v2972 = vpop.f32.mrb[0].mxu0
        %v2973 = vpop.f32.mrb[0].mxu0
        %v2974 = vadd.f32 %v2861, %v2973
        %v2975 = vpop.f32.mrb[0].mxu0
        %2976 = vmatprep.mubr.bf16.mxu0 0
        %2977 = vmatmul.mubr.bf16.gmra.mrb[0].mxu0 %v2744
        %v2978 = vpop.f32.mrb[0].mxu0
        %v2979 = vadd.f32 %v2866, %v2978
        %v2980 = vpop.f32.mrb[0].mxu0
        %v2981 = vpop.f32.mrb[0].mxu0
        %v2982 = vadd.f32 %v2869, %v2981
        %v2983 = vpop.f32.mrb[0].mxu0
        %2984 = vmatprep.mubr.bf16.mxu0 0
        %2985 = vmatmul.mubr.bf16.gmra.mrb[0].mxu0 %v2745
        %v2986 = vpop.f32.mrb[0].mxu0
        %v2987 = vadd.f32 %v2874, %v2986
        %v2988 = vpop.f32.mrb[0].mxu0
        %v2989 = vpop.f32.mrb[0].mxu0
        %v2990 = vadd.f32 %v2877, %v2989
        %v2991 = vpop.f32.mrb[0].mxu0
        %2992 = vmatprep.mubr.bf16.mxu0 0
        %2993 = vmatmul.mubr.bf16.gmra.mrb[0].mxu0 %v2746
        %v2994 = vpop.f32.mrb[0].mxu0
        %v2995 = vadd.f32 %v2882, %v2994
        %v2996 = vpop.f32.mrb[0].mxu0
        %v2997 = vpop.f32.mrb[0].mxu0
        %v2998 = vadd.f32 %v2885, %v2997
        %v2999 = vpop.f32.mrb[0].mxu0
        %3000 = vdwg.mxu0
        %v3001 = vld [vmem:[#allocation3 + $0x2] sm:$0xff]
        %v3002 = vld [vmem:[#allocation3 + $0x12] sm:$0xff]
        %v3003 = vld [vmem:[#allocation3 + $0x22] sm:$0xff]
        %v3004 = vld [vmem:[#allocation3 + $0x32] sm:$0xff]
        %v3005 = vld [vmem:[#allocation3 + $0x42] sm:$0xff]
        %v3006 = vld [vmem:[#allocation3 + $0x52] sm:$0xff]
        %v3007 = vld [vmem:[#allocation3 + $0x62] sm:$0xff]
        %v3008 = vld [vmem:[#allocation3 + $0x72] sm:$0xff]
        %v3009 = vld [vmem:[%s5 + $0x80] sm:$0xf]
        %v3010 = vld [vmem:[%s5 + $0x84] sm:$0xf]
        %v3011 = vld [vmem:[%s5 + $0x88] sm:$0xf]
        %v3012 = vld [vmem:[%s5 + $0x8c] sm:$0xf]
        %v3013 = vld [vmem:[%s5 + $0x90] sm:$0xf]
        %v3014 = vld [vmem:[%s5 + $0x94] sm:$0xf]
        %v3015 = vld [vmem:[%s5 + $0x98] sm:$0xf]
        %v3016 = vld [vmem:[%s5 + $0x9c] sm:$0xf]
        %v3017 = vld [vmem:[%s5 + $0xa0] sm:$0xf]
        %v3018 = vld [vmem:[%s5 + $0xa4] sm:$0xf]
        %v3019 = vld [vmem:[%s5 + $0xa8] sm:$0xf]
        %v3020 = vld [vmem:[%s5 + $0xac] sm:$0xf]
        %v3021 = vld [vmem:[%s5 + $0xb0] sm:$0xf]
        %v3022 = vld [vmem:[%s5 + $0xb4] sm:$0xf]
        %v3023 = vld [vmem:[%s5 + $0xb8] sm:$0xf]
        %v3024 = vld [vmem:[%s5 + $0xbc] sm:$0xf]
        %v3025 = vpack.c.bf16 %v3002, %v3001
        %v3026 = vpack.c.bf16 %v3004, %v3003
        %v3027 = vpack.c.bf16 %v3006, %v3005
        %v3028 = vpack.c.bf16 %v3008, %v3007
        %v3045 = vunpack.c.l.b16 %v3009
        %v3046 = vunpack.c.l.b16 %v3010
        %v3047 = vunpack.c.l.b16 %v3011
        %v3048 = vunpack.c.l.b16 %v3012
        %v3049 = vunpack.c.l.b16 %v3013
        %v3050 = vunpack.c.l.b16 %v3014
        %v3051 = vunpack.c.l.b16 %v3015
        %v3052 = vunpack.c.l.b16 %v3016
        %v3053 = vunpack.c.l.b16 %v3017
        %v3054 = vunpack.c.l.b16 %v3018
        %v3055 = vunpack.c.l.b16 %v3019
        %v3056 = vunpack.c.l.b16 %v3020
        %v3057 = vunpack.c.l.b16 %v3021
        %v3058 = vunpack.c.l.b16 %v3022
        %v3059 = vunpack.c.l.b16 %v3023
        %v3060 = vunpack.c.l.b16 %v3024
        %v3061 = vpack.c.b16 %v3046, %v3045
        %v3062 = vpack.c.b16 %v3048, %v3047
        %v3063 = vpack.c.b16 %v3050, %v3049
        %v3064 = vpack.c.b16 %v3052, %v3051
        %v3065 = vpack.c.b16 %v3054, %v3053
        %v3066 = vpack.c.b16 %v3056, %v3055
        %v3067 = vpack.c.b16 %v3058, %v3057
        %v3068 = vpack.c.b16 %v3060, %v3059
        %3077 = vmatprep.subr.bf16.mxu0 0
        %3078 = vmatpush1.bf16.msra.mxu0 %v3061
        %3079 = vmatprep.subr.bf16.mxu0 0
        %3080 = vmatpush1.bf16.msra.mxu0 %v3062
        %3081 = vmatprep.subr.bf16.mxu0 0
        %3082 = vmatpush1.bf16.msra.mxu0 %v3063
        %3083 = vmatprep.subr.bf16.mxu0 0
        %3084 = vmatpush1.bf16.msra.mxu0 %v3064
        %3085 = vmatprep.subr.bf16.mxu0 0
        %3086 = vmatpush1.bf16.msra.mxu0 %v3065
        %3087 = vmatprep.subr.bf16.mxu0 0
        %3088 = vmatpush1.bf16.msra.mxu0 %v3066
        %3089 = vmatprep.subr.bf16.mxu0 0
        %3090 = vmatpush1.bf16.msra.mxu0 %v3067
        %3091 = vmatprep.subr.bf16.mxu0 0
        %3092 = vmatpush1.bf16.msra.mxu0 %v3068
        %3093 = vmatprep.subr.bf16.mxu0 0
        %3094 = vmatpush1.bf16.msra.mxu0 0
        %3095 = vmatprep.subr.bf16.mxu0 0
        %3096 = vmatpush1.bf16.msra.mxu0 0
        %3097 = vmatprep.subr.bf16.mxu0 0
        %3098 = vmatpush1.bf16.msra.mxu0 0
        %3099 = vmatprep.subr.bf16.mxu0 0
        %3100 = vmatpush1.bf16.msra.mxu0 0
        %3101 = vmatprep.subr.bf16.mxu0 0
        %3102 = vmatpush1.bf16.msra.mxu0 0
        %3103 = vmatprep.subr.bf16.mxu0 0
        %3104 = vmatpush1.bf16.msra.mxu0 0
        %3105 = vmatprep.subr.bf16.mxu0 0
        %3106 = vmatpush1.bf16.msra.mxu0 0
        %3107 = vmatprep.subr.bf16.mxu0 0
        %3108 = vmatpush1.bf16.msra.mxu0 0
        %3109 = vmatprep.mubr.bf16.mxu0 0
        %3110 = vmatmul.mubr.bf16.gmra.mrb[0].mxu0 %v3025
        %v3111 = vpop.f32.mrb[0].mxu0
        %v3112 = vadd.f32 0.0, %v3111
        %v3113 = vpop.f32.mrb[0].mxu0
        %v3114 = vpop.f32.mrb[0].mxu0
        %v3115 = vadd.f32 0.0, %v3114
        %v3116 = vpop.f32.mrb[0].mxu0
        %3117 = vmatprep.mubr.bf16.mxu0 0
        %3118 = vmatmul.mubr.bf16.gmra.mrb[0].mxu0 %v3026
        %v3119 = vpop.f32.mrb[0].mxu0
        %v3120 = vadd.f32 0.0, %v3119
        %v3121 = vpop.f32.mrb[0].mxu0
        %v3122 = vpop.f32.mrb[0].mxu0
        %v3123 = vadd.f32 0.0, %v3122
        %v3124 = vpop.f32.mrb[0].mxu0
        %3125 = vmatprep.mubr.bf16.mxu0 0
        %3126 = vmatmul.mubr.bf16.gmra.mrb[0].mxu0 %v3027
        %v3127 = vpop.f32.mrb[0].mxu0
        %v3128 = vadd.f32 0.0, %v3127
        %v3129 = vpop.f32.mrb[0].mxu0
        %v3130 = vpop.f32.mrb[0].mxu0
        %v3131 = vadd.f32 0.0, %v3130
        %v3132 = vpop.f32.mrb[0].mxu0
        %3133 = vmatprep.mubr.bf16.mxu0 0
        %3134 = vmatmul.mubr.bf16.gmra.mrb[0].mxu0 %v3028
        %v3135 = vpop.f32.mrb[0].mxu0
        %v3136 = vadd.f32 0.0, %v3135
        %v3137 = vpop.f32.mrb[0].mxu0
        %v3138 = vpop.f32.mrb[0].mxu0
        %v3139 = vadd.f32 0.0, %v3138
        %v3140 = vpop.f32.mrb[0].mxu0
        %3141 = vdwg.mxu0
        %v3142 = vadd.f32 %v2971, %v3112
        %v3143 = vadd.f32 %v2974, %v3115
        %v3144 = vadd.f32 %v2979, %v3120
        %v3145 = vadd.f32 %v2982, %v3123
        %v3146 = vadd.f32 %v2987, %v3128
        %v3147 = vadd.f32 %v2990, %v3131
        %v3148 = vadd.f32 %v2995, %v3136
        %v3149 = vadd.f32 %v2998, %v3139
        %v3150 = vld [vmem:[%s2710] sm:$0xff]
        %v3151 = vld [vmem:[%s2710 + $0x10] sm:$0xff]
        %v3152 = vld [vmem:[%s2710 + $0x20] sm:$0xff]
        %v3153 = vld [vmem:[%s2710 + $0x30] sm:$0xff]
        %v3154 = vld [vmem:[%s2710 + $0x40] sm:$0xff]
        %v3155 = vld [vmem:[%s2710 + $0x50] sm:$0xff]
        %v3156 = vld [vmem:[%s2710 + $0x60] sm:$0xff]
        %v3157 = vld [vmem:[%s2710 + $0x70] sm:$0xff]
        %v3158 = vld [vmem:[%s5 + $0xc0] sm:$0xf]
        %v3159 = vld [vmem:[%s5 + $0xc4] sm:$0xf]
        %v3160 = vld [vmem:[%s5 + $0xc8] sm:$0xf]
        %v3161 = vld [vmem:[%s5 + $0xcc] sm:$0xf]
        %v3162 = vld [vmem:[%s5 + $0xd0] sm:$0xf]
        %v3163 = vld [vmem:[%s5 + $0xd4] sm:$0xf]
        %v3164 = vld [vmem:[%s5 + $0xd8] sm:$0xf]
        %v3165 = vld [vmem:[%s5 + $0xdc] sm:$0xf]
        %v3166 = vld [vmem:[%s5 + $0xe0] sm:$0xf]
        %v3167 = vld [vmem:[%s5 + $0xe4] sm:$0xf]
        %v3168 = vld [vmem:[%s5 + $0xe8] sm:$0xf]
        %v3169 = vld [vmem:[%s5 + $0xec] sm:$0xf]
        %v3170 = vld [vmem:[%s5 + $0xf0] sm:$0xf]
        %v3171 = vld [vmem:[%s5 + $0xf4] sm:$0xf]
        %v3172 = vld [vmem:[%s5 + $0xf8] sm:$0xf]
        %v3173 = vld [vmem:[%s5 + $0xfc] sm:$0xf]
        %v3174 = vpack.c.bf16 %v3151, %v3150
        %v3175 = vpack.c.bf16 %v3153, %v3152
        %v3176 = vpack.c.bf16 %v3155, %v3154
        %v3177 = vpack.c.bf16 %v3157, %v3156
        %v3194 = vunpack.c.l.b16 %v3158
        %v3195 = vunpack.c.l.b16 %v3159
        %v3196 = vunpack.c.l.b16 %v3160
        %v3197 = vunpack.c.l.b16 %v3161
        %v3198 = vunpack.c.l.b16 %v3162
        %v3199 = vunpack.c.l.b16 %v3163
        %v3200 = vunpack.c.l.b16 %v3164
        %v3201 = vunpack.c.l.b16 %v3165
        %v3202 = vunpack.c.l.b16 %v3166
        %v3203 = vunpack.c.l.b16 %v3167
        %v3204 = vunpack.c.l.b16 %v3168
        %v3205 = vunpack.c.l.b16 %v3169
        %v3206 = vunpack.c.l.b16 %v3170
        %v3207 = vunpack.c.l.b16 %v3171
        %v3208 = vunpack.c.l.b16 %v3172
        %v3209 = vunpack.c.l.b16 %v3173
        %v3210 = vpack.c.b16 %v3195, %v3194
        %v3211 = vpack.c.b16 %v3197, %v3196
        %v3212 = vpack.c.b16 %v3199, %v3198
        %v3213 = vpack.c.b16 %v3201, %v3200
        %v3214 = vpack.c.b16 %v3203, %v3202
        %v3215 = vpack.c.b16 %v3205, %v3204
        %v3216 = vpack.c.b16 %v3207, %v3206
        %v3217 = vpack.c.b16 %v3209, %v3208
        %3226 = vmatprep.subr.bf16.mxu0 0
        %3227 = vmatpush1.bf16.msra.mxu0 %v3210
        %3228 = vmatprep.subr.bf16.mxu0 0
        %3229 = vmatpush1.bf16.msra.mxu0 %v3211
        %3230 = vmatprep.subr.bf16.mxu0 0
        %3231 = vmatpush1.bf16.msra.mxu0 %v3212
        %3232 = vmatprep.subr.bf16.mxu0 0
        %3233 = vmatpush1.bf16.msra.mxu0 %v3213
        %3234 = vmatprep.subr.bf16.mxu0 0
        %3235 = vmatpush1.bf16.msra.mxu0 %v3214
        %3236 = vmatprep.subr.bf16.mxu0 0
        %3237 = vmatpush1.bf16.msra.mxu0 %v3215
        %3238 = vmatprep.subr.bf16.mxu0 0
        %3239 = vmatpush1.bf16.msra.mxu0 %v3216
        %3240 = vmatprep.subr.bf16.mxu0 0
        %3241 = vmatpush1.bf16.msra.mxu0 %v3217
        %3242 = vmatprep.subr.bf16.mxu0 0
        %3243 = vmatpush1.bf16.msra.mxu0 0
        %3244 = vmatprep.subr.bf16.mxu0 0
        %3245 = vmatpush1.bf16.msra.mxu0 0
        %3246 = vmatprep.subr.bf16.mxu0 0
        %3247 = vmatpush1.bf16.msra.mxu0 0
        %3248 = vmatprep.subr.bf16.mxu0 0
        %3249 = vmatpush1.bf16.msra.mxu0 0
        %3250 = vmatprep.subr.bf16.mxu0 0
        %3251 = vmatpush1.bf16.msra.mxu0 0
        %3252 = vmatprep.subr.bf16.mxu0 0
        %3253 = vmatpush1.bf16.msra.mxu0 0
        %3254 = vmatprep.subr.bf16.mxu0 0
        %3255 = vmatpush1.bf16.msra.mxu0 0
        %3256 = vmatprep.subr.bf16.mxu0 0
        %3257 = vmatpush1.bf16.msra.mxu0 0
        %3258 = vmatprep.mubr.bf16.mxu0 0
        %3259 = vmatmul.mubr.bf16.gmra.mrb[0].mxu0 %v3174
        %v3260 = vpop.f32.mrb[0].mxu0
        %v3261 = vadd.f32 0.0, %v3260
        %v3262 = vpop.f32.mrb[0].mxu0
        %v3263 = vpop.f32.mrb[0].mxu0
        %v3264 = vadd.f32 0.0, %v3263
        %v3265 = vpop.f32.mrb[0].mxu0
        %3266 = vmatprep.mubr.bf16.mxu0 0
        %3267 = vmatmul.mubr.bf16.gmra.mrb[0].mxu0 %v3175
        %v3268 = vpop.f32.mrb[0].mxu0
        %v3269 = vadd.f32 0.0, %v3268
        %v3270 = vpop.f32.mrb[0].mxu0
        %v3271 = vpop.f32.mrb[0].mxu0
        %v3272 = vadd.f32 0.0, %v3271
        %v3273 = vpop.f32.mrb[0].mxu0
        %3274 = vmatprep.mubr.bf16.mxu0 0
        %3275 = vmatmul.mubr.bf16.gmra.mrb[0].mxu0 %v3176
        %v3276 = vpop.f32.mrb[0].mxu0
        %v3277 = vadd.f32 0.0, %v3276
        %v3278 = vpop.f32.mrb[0].mxu0
        %v3279 = vpop.f32.mrb[0].mxu0
        %v3280 = vadd.f32 0.0, %v3279
        %v3281 = vpop.f32.mrb[0].mxu0
        %3282 = vmatprep.mubr.bf16.mxu0 0
        %3283 = vmatmul.mubr.bf16.gmra.mrb[0].mxu0 %v3177
        %v3284 = vpop.f32.mrb[0].mxu0
        %v3285 = vadd.f32 0.0, %v3284
        %v3286 = vpop.f32.mrb[0].mxu0
        %v3287 = vpop.f32.mrb[0].mxu0
        %v3288 = vadd.f32 0.0, %v3287
        %v3289 = vpop.f32.mrb[0].mxu0
        %3290 = vdwg.mxu0
        %v3291 = vadd.f32 %v3142, %v3261
        %v3292 = vadd.f32 %v3143, %v3264
        %v3293 = vadd.f32 %v3144, %v3269
        %v3294 = vadd.f32 %v3145, %v3272
        %v3295 = vadd.f32 %v3146, %v3277
        %v3296 = vadd.f32 %v3147, %v3280
        %v3297 = vadd.f32 %v3148, %v3285
        %v3298 = vadd.f32 %v3149, %v3288
        %v3299 = vld [vmem:[%s2710 + $0x1] sm:$0xff]
        %v3300 = vld [vmem:[%s2710 + $0x11] sm:$0xff]
        %v3301 = vld [vmem:[%s2710 + $0x21] sm:$0xff]
        %v3302 = vld [vmem:[%s2710 + $0x31] sm:$0xff]
        %v3303 = vld [vmem:[%s2710 + $0x41] sm:$0xff]
        %v3304 = vld [vmem:[%s2710 + $0x51] sm:$0xff]
        %v3305 = vld [vmem:[%s2710 + $0x61] sm:$0xff]
        %v3306 = vld [vmem:[%s2710 + $0x71] sm:$0xff]
        %v3307 = vld [vmem:[%s5 + $0x100] sm:$0xf]
        %v3308 = vld [vmem:[%s5 + $0x104] sm:$0xf]
        %v3309 = vld [vmem:[%s5 + $0x108] sm:$0xf]
        %v3310 = vld [vmem:[%s5 + $0x10c] sm:$0xf]
        %v3311 = vld [vmem:[%s5 + $0x110] sm:$0xf]
        %v3312 = vld [vmem:[%s5 + $0x114] sm:$0xf]
        %v3313 = vld [vmem:[%s5 + $0x118] sm:$0xf]
        %v3314 = vld [vmem:[%s5 + $0x11c] sm:$0xf]
        %v3315 = vld [vmem:[%s5 + $0x120] sm:$0xf]
        %v3316 = vld [vmem:[%s5 + $0x124] sm:$0xf]
        %v3317 = vld [vmem:[%s5 + $0x128] sm:$0xf]
        %v3318 = vld [vmem:[%s5 + $0x12c] sm:$0xf]
        %v3319 = vld [vmem:[%s5 + $0x130] sm:$0xf]
        %v3320 = vld [vmem:[%s5 + $0x134] sm:$0xf]
        %v3321 = vld [vmem:[%s5 + $0x138] sm:$0xf]
        %v3322 = vld [vmem:[%s5 + $0x13c] sm:$0xf]
        %v3323 = vpack.c.bf16 %v3300, %v3299
        %v3324 = vpack.c.bf16 %v3302, %v3301
        %v3325 = vpack.c.bf16 %v3304, %v3303
        %v3326 = vpack.c.bf16 %v3306, %v3305
        %v3343 = vunpack.c.l.b16 %v3307
        %v3344 = vunpack.c.l.b16 %v3308
        %v3345 = vunpack.c.l.b16 %v3309
        %v3346 = vunpack.c.l.b16 %v3310
        %v3347 = vunpack.c.l.b16 %v3311
        %v3348 = vunpack.c.l.b16 %v3312
        %v3349 = vunpack.c.l.b16 %v3313
        %v3350 = vunpack.c.l.b16 %v3314
        %v3351 = vunpack.c.l.b16 %v3315
        %v3352 = vunpack.c.l.b16 %v3316
        %v3353 = vunpack.c.l.b16 %v3317
        %v3354 = vunpack.c.l.b16 %v3318
        %v3355 = vunpack.c.l.b16 %v3319
        %v3356 = vunpack.c.l.b16 %v3320
        %v3357 = vunpack.c.l.b16 %v3321
        %v3358 = vunpack.c.l.b16 %v3322
        %v3359 = vpack.c.b16 %v3344, %v3343
        %v3360 = vpack.c.b16 %v3346, %v3345
        %v3361 = vpack.c.b16 %v3348, %v3347
        %v3362 = vpack.c.b16 %v3350, %v3349
        %v3363 = vpack.c.b16 %v3352, %v3351
        %v3364 = vpack.c.b16 %v3354, %v3353
        %v3365 = vpack.c.b16 %v3356, %v3355
        %v3366 = vpack.c.b16 %v3358, %v3357
        %3375 = vmatprep.subr.bf16.mxu0 0
        %3376 = vmatpush1.bf16.msra.mxu0 %v3359
        %3377 = vmatprep.subr.bf16.mxu0 0
        %3378 = vmatpush1.bf16.msra.mxu0 %v3360
        %3379 = vmatprep.subr.bf16.mxu0 0
        %3380 = vmatpush1.bf16.msra.mxu0 %v3361
        %3381 = vmatprep.subr.bf16.mxu0 0
        %3382 = vmatpush1.bf16.msra.mxu0 %v3362
        %3383 = vmatprep.subr.bf16.mxu0 0
        %3384 = vmatpush1.bf16.msra.mxu0 %v3363
        %3385 = vmatprep.subr.bf16.mxu0 0
        %3386 = vmatpush1.bf16.msra.mxu0 %v3364
        %3387 = vmatprep.subr.bf16.mxu0 0
        %3388 = vmatpush1.bf16.msra.mxu0 %v3365
        %3389 = vmatprep.subr.bf16.mxu0 0
        %3390 = vmatpush1.bf16.msra.mxu0 %v3366
        %3391 = vmatprep.subr.bf16.mxu0 0
        %3392 = vmatpush1.bf16.msra.mxu0 0
        %3393 = vmatprep.subr.bf16.mxu0 0
        %3394 = vmatpush1.bf16.msra.mxu0 0
        %3395 = vmatprep.subr.bf16.mxu0 0
        %3396 = vmatpush1.bf16.msra.mxu0 0
        %3397 = vmatprep.subr.bf16.mxu0 0
        %3398 = vmatpush1.bf16.msra.mxu0 0
        %3399 = vmatprep.subr.bf16.mxu0 0
        %3400 = vmatpush1.bf16.msra.mxu0 0
        %3401 = vmatprep.subr.bf16.mxu0 0
        %3402 = vmatpush1.bf16.msra.mxu0 0
        %3403 = vmatprep.subr.bf16.mxu0 0
        %3404 = vmatpush1.bf16.msra.mxu0 0
        %3405 = vmatprep.subr.bf16.mxu0 0
        %3406 = vmatpush1.bf16.msra.mxu0 0
        %3407 = vmatprep.mubr.bf16.mxu0 0
        %3408 = vmatmul.mubr.bf16.gmra.mrb[0].mxu0 %v3323
        %v3409 = vpop.f32.mrb[0].mxu0
        %v3410 = vadd.f32 0.0, %v3409
        %v3411 = vpop.f32.mrb[0].mxu0
        %v3412 = vpop.f32.mrb[0].mxu0
        %v3413 = vadd.f32 0.0, %v3412
        %v3414 = vpop.f32.mrb[0].mxu0
        %3415 = vmatprep.mubr.bf16.mxu0 0
        %3416 = vmatmul.mubr.bf16.gmra.mrb[0].mxu0 %v3324
        %v3417 = vpop.f32.mrb[0].mxu0
        %v3418 = vadd.f32 0.0, %v3417
        %v3419 = vpop.f32.mrb[0].mxu0
        %v3420 = vpop.f32.mrb[0].mxu0
        %v3421 = vadd.f32 0.0, %v3420
        %v3422 = vpop.f32.mrb[0].mxu0
        %3423 = vmatprep.mubr.bf16.mxu0 0
        %3424 = vmatmul.mubr.bf16.gmra.mrb[0].mxu0 %v3325
        %v3425 = vpop.f32.mrb[0].mxu0
        %v3426 = vadd.f32 0.0, %v3425
        %v3427 = vpop.f32.mrb[0].mxu0
        %v3428 = vpop.f32.mrb[0].mxu0
        %v3429 = vadd.f32 0.0, %v3428
        %v3430 = vpop.f32.mrb[0].mxu0
        %3431 = vmatprep.mubr.bf16.mxu0 0
        %3432 = vmatmul.mubr.bf16.gmra.mrb[0].mxu0 %v3326
        %v3433 = vpop.f32.mrb[0].mxu0
        %v3434 = vadd.f32 0.0, %v3433
        %v3435 = vpop.f32.mrb[0].mxu0
        %v3436 = vpop.f32.mrb[0].mxu0
        %v3437 = vadd.f32 0.0, %v3436
        %v3438 = vpop.f32.mrb[0].mxu0
        %3439 = vdwg.mxu0
        %v3440 = vadd.f32 %v3291, %v3410
        %v3441 = vadd.f32 %v3292, %v3413
        %v3442 = vadd.f32 %v3293, %v3418
        %v3443 = vadd.f32 %v3294, %v3421
        %v3444 = vadd.f32 %v3295, %v3426
        %v3445 = vadd.f32 %v3296, %v3429
        %v3446 = vadd.f32 %v3297, %v3434
        %v3447 = vadd.f32 %v3298, %v3437
        %v3448 = vld [vmem:[%s2710 + $0x2] sm:$0xff]
        %v3449 = vld [vmem:[%s2710 + $0x12] sm:$0xff]
        %v3450 = vld [vmem:[%s2710 + $0x22] sm:$0xff]
        %v3451 = vld [vmem:[%s2710 + $0x32] sm:$0xff]
        %v3452 = vld [vmem:[%s2710 + $0x42] sm:$0xff]
        %v3453 = vld [vmem:[%s2710 + $0x52] sm:$0xff]
        %v3454 = vld [vmem:[%s2710 + $0x62] sm:$0xff]
        %v3455 = vld [vmem:[%s2710 + $0x72] sm:$0xff]
        %v3456 = vld [vmem:[%s5 + $0x140] sm:$0xf]
        %v3457 = vld [vmem:[%s5 + $0x144] sm:$0xf]
        %v3458 = vld [vmem:[%s5 + $0x148] sm:$0xf]
        %v3459 = vld [vmem:[%s5 + $0x14c] sm:$0xf]
        %v3460 = vld [vmem:[%s5 + $0x150] sm:$0xf]
        %v3461 = vld [vmem:[%s5 + $0x154] sm:$0xf]
        %v3462 = vld [vmem:[%s5 + $0x158] sm:$0xf]
        %v3463 = vld [vmem:[%s5 + $0x15c] sm:$0xf]
        %v3464 = vld [vmem:[%s5 + $0x160] sm:$0xf]
        %v3465 = vld [vmem:[%s5 + $0x164] sm:$0xf]
        %v3466 = vld [vmem:[%s5 + $0x168] sm:$0xf]
        %v3467 = vld [vmem:[%s5 + $0x16c] sm:$0xf]
        %v3468 = vld [vmem:[%s5 + $0x170] sm:$0xf]
        %v3469 = vld [vmem:[%s5 + $0x174] sm:$0xf]
        %v3470 = vld [vmem:[%s5 + $0x178] sm:$0xf]
        %v3471 = vld [vmem:[%s5 + $0x17c] sm:$0xf]
        %v3472 = vpack.c.bf16 %v3449, %v3448
        %v3473 = vpack.c.bf16 %v3451, %v3450
        %v3474 = vpack.c.bf16 %v3453, %v3452
        %v3475 = vpack.c.bf16 %v3455, %v3454
        %v3492 = vunpack.c.l.b16 %v3456
        %v3493 = vunpack.c.l.b16 %v3457
        %v3494 = vunpack.c.l.b16 %v3458
        %v3495 = vunpack.c.l.b16 %v3459
        %v3496 = vunpack.c.l.b16 %v3460
        %v3497 = vunpack.c.l.b16 %v3461
        %v3498 = vunpack.c.l.b16 %v3462
        %v3499 = vunpack.c.l.b16 %v3463
        %v3500 = vunpack.c.l.b16 %v3464
        %v3501 = vunpack.c.l.b16 %v3465
        %v3502 = vunpack.c.l.b16 %v3466
        %v3503 = vunpack.c.l.b16 %v3467
        %v3504 = vunpack.c.l.b16 %v3468
        %v3505 = vunpack.c.l.b16 %v3469
        %v3506 = vunpack.c.l.b16 %v3470
        %v3507 = vunpack.c.l.b16 %v3471
        %v3508 = vpack.c.b16 %v3493, %v3492
        %v3509 = vpack.c.b16 %v3495, %v3494
        %v3510 = vpack.c.b16 %v3497, %v3496
        %v3511 = vpack.c.b16 %v3499, %v3498
        %v3512 = vpack.c.b16 %v3501, %v3500
        %v3513 = vpack.c.b16 %v3503, %v3502
        %v3514 = vpack.c.b16 %v3505, %v3504
        %v3515 = vpack.c.b16 %v3507, %v3506
        %3524 = vmatprep.subr.bf16.mxu0 0
        %3525 = vmatpush1.bf16.msra.mxu0 %v3508
        %3526 = vmatprep.subr.bf16.mxu0 0
        %3527 = vmatpush1.bf16.msra.mxu0 %v3509
        %3528 = vmatprep.subr.bf16.mxu0 0
        %3529 = vmatpush1.bf16.msra.mxu0 %v3510
        %3530 = vmatprep.subr.bf16.mxu0 0
        %3531 = vmatpush1.bf16.msra.mxu0 %v3511
        %3532 = vmatprep.subr.bf16.mxu0 0
        %3533 = vmatpush1.bf16.msra.mxu0 %v3512
        %3534 = vmatprep.subr.bf16.mxu0 0
        %3535 = vmatpush1.bf16.msra.mxu0 %v3513
        %3536 = vmatprep.subr.bf16.mxu0 0
        %3537 = vmatpush1.bf16.msra.mxu0 %v3514
        %3538 = vmatprep.subr.bf16.mxu0 0
        %3539 = vmatpush1.bf16.msra.mxu0 %v3515
        %3540 = vmatprep.subr.bf16.mxu0 0
        %3541 = vmatpush1.bf16.msra.mxu0 0
        %3542 = vmatprep.subr.bf16.mxu0 0
        %3543 = vmatpush1.bf16.msra.mxu0 0
        %3544 = vmatprep.subr.bf16.mxu0 0
        %3545 = vmatpush1.bf16.msra.mxu0 0
        %3546 = vmatprep.subr.bf16.mxu0 0
        %3547 = vmatpush1.bf16.msra.mxu0 0
        %3548 = vmatprep.subr.bf16.mxu0 0
        %3549 = vmatpush1.bf16.msra.mxu0 0
        %3550 = vmatprep.subr.bf16.mxu0 0
        %3551 = vmatpush1.bf16.msra.mxu0 0
        %3552 = vmatprep.subr.bf16.mxu0 0
        %3553 = vmatpush1.bf16.msra.mxu0 0
        %3554 = vmatprep.subr.bf16.mxu0 0
        %3555 = vmatpush1.bf16.msra.mxu0 0
        %3556 = vmatprep.mubr.bf16.mxu0 0
        %3557 = vmatmul.mubr.bf16.gmra.mrb[0].mxu0 %v3472
        %v3558 = vpop.f32.mrb[0].mxu0
        %v3559 = vadd.f32 0.0, %v3558
        %v3560 = vpop.f32.mrb[0].mxu0
        %v3561 = vpop.f32.mrb[0].mxu0
        %v3562 = vadd.f32 0.0, %v3561
        %v3563 = vpop.f32.mrb[0].mxu0
        %3564 = vmatprep.mubr.bf16.mxu0 0
        %3565 = vmatmul.mubr.bf16.gmra.mrb[0].mxu0 %v3473
        %v3566 = vpop.f32.mrb[0].mxu0
        %v3567 = vadd.f32 0.0, %v3566
        %v3568 = vpop.f32.mrb[0].mxu0
        %v3569 = vpop.f32.mrb[0].mxu0
        %v3570 = vadd.f32 0.0, %v3569
        %v3571 = vpop.f32.mrb[0].mxu0
        %3572 = vmatprep.mubr.bf16.mxu0 0
        %3573 = vmatmul.mubr.bf16.gmra.mrb[0].mxu0 %v3474
        %v3574 = vpop.f32.mrb[0].mxu0
        %v3575 = vadd.f32 0.0, %v3574
        %v3576 = vpop.f32.mrb[0].mxu0
        %v3577 = vpop.f32.mrb[0].mxu0
        %v3578 = vadd.f32 0.0, %v3577
        %v3579 = vpop.f32.mrb[0].mxu0
        %3580 = vmatprep.mubr.bf16.mxu0 0
        %3581 = vmatmul.mubr.bf16.gmra.mrb[0].mxu0 %v3475
        %v3582 = vpop.f32.mrb[0].mxu0
        %v3583 = vadd.f32 0.0, %v3582
        %v3584 = vpop.f32.mrb[0].mxu0
        %v3585 = vpop.f32.mrb[0].mxu0
        %v3586 = vadd.f32 0.0, %v3585
        %v3587 = vpop.f32.mrb[0].mxu0
        %3588 = vdwg.mxu0
        %v3589 = vadd.f32 %v3440, %v3559
        %v3590 = vadd.f32 %v3441, %v3562
        %v3591 = vadd.f32 %v3442, %v3567
        %v3592 = vadd.f32 %v3443, %v3570
        %v3593 = vadd.f32 %v3444, %v3575
        %v3594 = vadd.f32 %v3445, %v3578
        %v3595 = vadd.f32 %v3446, %v3583
        %v3596 = vadd.f32 %v3447, %v3586
        %s3597 = scalar_lea.vmem [#allocation3], 32
        %v3598 = vld [vmem:[%s3597] sm:$0xff]
        %v3599 = vld [vmem:[%s3597 + $0x10] sm:$0xff]
        %v3600 = vld [vmem:[%s3597 + $0x20] sm:$0xff]
        %v3601 = vld [vmem:[%s3597 + $0x30] sm:$0xff]
        %v3602 = vld [vmem:[%s3597 + $0x40] sm:$0xff]
        %v3603 = vld [vmem:[%s3597 + $0x50] sm:$0xff]
        %v3604 = vld [vmem:[%s3597 + $0x60] sm:$0xff]
        %v3605 = vld [vmem:[%s3597 + $0x70] sm:$0xff]
        %v3606 = vld [vmem:[%s5 + $0x180] sm:$0xf]
        %v3607 = vld [vmem:[%s5 + $0x184] sm:$0xf]
        %v3608 = vld [vmem:[%s5 + $0x188] sm:$0xf]
        %v3609 = vld [vmem:[%s5 + $0x18c] sm:$0xf]
        %v3610 = vld [vmem:[%s5 + $0x190] sm:$0xf]
        %v3611 = vld [vmem:[%s5 + $0x194] sm:$0xf]
        %v3612 = vld [vmem:[%s5 + $0x198] sm:$0xf]
        %v3613 = vld [vmem:[%s5 + $0x19c] sm:$0xf]
        %v3614 = vld [vmem:[%s5 + $0x1a0] sm:$0xf]
        %v3615 = vld [vmem:[%s5 + $0x1a4] sm:$0xf]
        %v3616 = vld [vmem:[%s5 + $0x1a8] sm:$0xf]
        %v3617 = vld [vmem:[%s5 + $0x1ac] sm:$0xf]
        %v3618 = vld [vmem:[%s5 + $0x1b0] sm:$0xf]
        %v3619 = vld [vmem:[%s5 + $0x1b4] sm:$0xf]
        %v3620 = vld [vmem:[%s5 + $0x1b8] sm:$0xf]
        %v3621 = vld [vmem:[%s5 + $0x1bc] sm:$0xf]
        %v3622 = vpack.c.bf16 %v3599, %v3598
        %v3623 = vpack.c.bf16 %v3601, %v3600
        %v3624 = vpack.c.bf16 %v3603, %v3602
        %v3625 = vpack.c.bf16 %v3605, %v3604
        %v3642 = vunpack.c.l.b16 %v3606
        %v3643 = vunpack.c.l.b16 %v3607
        %v3644 = vunpack.c.l.b16 %v3608
        %v3645 = vunpack.c.l.b16 %v3609
        %v3646 = vunpack.c.l.b16 %v3610
        %v3647 = vunpack.c.l.b16 %v3611
        %v3648 = vunpack.c.l.b16 %v3612
        %v3649 = vunpack.c.l.b16 %v3613
        %v3650 = vunpack.c.l.b16 %v3614
        %v3651 = vunpack.c.l.b16 %v3615
        %v3652 = vunpack.c.l.b16 %v3616
        %v3653 = vunpack.c.l.b16 %v3617
        %v3654 = vunpack.c.l.b16 %v3618
        %v3655 = vunpack.c.l.b16 %v3619
        %v3656 = vunpack.c.l.b16 %v3620
        %v3657 = vunpack.c.l.b16 %v3621
        %v3658 = vpack.c.b16 %v3643, %v3642
        %v3659 = vpack.c.b16 %v3645, %v3644
        %v3660 = vpack.c.b16 %v3647, %v3646
        %v3661 = vpack.c.b16 %v3649, %v3648
        %v3662 = vpack.c.b16 %v3651, %v3650
        %v3663 = vpack.c.b16 %v3653, %v3652
        %v3664 = vpack.c.b16 %v3655, %v3654
        %v3665 = vpack.c.b16 %v3657, %v3656
        %3674 = vmatprep.subr.bf16.mxu0 0
        %3675 = vmatpush1.bf16.msra.mxu0 %v3658
        %3676 = vmatprep.subr.bf16.mxu0 0
        %3677 = vmatpush1.bf16.msra.mxu0 %v3659
        %3678 = vmatprep.subr.bf16.mxu0 0
        %3679 = vmatpush1.bf16.msra.mxu0 %v3660
        %3680 = vmatprep.subr.bf16.mxu0 0
        %3681 = vmatpush1.bf16.msra.mxu0 %v3661
        %3682 = vmatprep.subr.bf16.mxu0 0
        %3683 = vmatpush1.bf16.msra.mxu0 %v3662
        %3684 = vmatprep.subr.bf16.mxu0 0
        %3685 = vmatpush1.bf16.msra.mxu0 %v3663
        %3686 = vmatprep.subr.bf16.mxu0 0
        %3687 = vmatpush1.bf16.msra.mxu0 %v3664
        %3688 = vmatprep.subr.bf16.mxu0 0
        %3689 = vmatpush1.bf16.msra.mxu0 %v3665
        %3690 = vmatprep.subr.bf16.mxu0 0
        %3691 = vmatpush1.bf16.msra.mxu0 0
        %3692 = vmatprep.subr.bf16.mxu0 0
        %3693 = vmatpush1.bf16.msra.mxu0 0
        %3694 = vmatprep.subr.bf16.mxu0 0
        %3695 = vmatpush1.bf16.msra.mxu0 0
        %3696 = vmatprep.subr.bf16.mxu0 0
        %3697 = vmatpush1.bf16.msra.mxu0 0
        %3698 = vmatprep.subr.bf16.mxu0 0
        %3699 = vmatpush1.bf16.msra.mxu0 0
        %3700 = vmatprep.subr.bf16.mxu0 0
        %3701 = vmatpush1.bf16.msra.mxu0 0
        %3702 = vmatprep.subr.bf16.mxu0 0
        %3703 = vmatpush1.bf16.msra.mxu0 0
        %3704 = vmatprep.subr.bf16.mxu0 0
        %3705 = vmatpush1.bf16.msra.mxu0 0
        %3706 = vmatprep.mubr.bf16.mxu0 0
        %3707 = vmatmul.mubr.bf16.gmra.mrb[0].mxu0 %v3622
        %v3708 = vpop.f32.mrb[0].mxu0
        %v3709 = vadd.f32 0.0, %v3708
        %v3710 = vpop.f32.mrb[0].mxu0
        %v3711 = vpop.f32.mrb[0].mxu0
        %v3712 = vadd.f32 0.0, %v3711
        %v3713 = vpop.f32.mrb[0].mxu0
        %3714 = vmatprep.mubr.bf16.mxu0 0
        %3715 = vmatmul.mubr.bf16.gmra.mrb[0].mxu0 %v3623
        %v3716 = vpop.f32.mrb[0].mxu0
        %v3717 = vadd.f32 0.0, %v3716
        %v3718 = vpop.f32.mrb[0].mxu0
        %v3719 = vpop.f32.mrb[0].mxu0
        %v3720 = vadd.f32 0.0, %v3719
        %v3721 = vpop.f32.mrb[0].mxu0
        %3722 = vmatprep.mubr.bf16.mxu0 0
        %3723 = vmatmul.mubr.bf16.gmra.mrb[0].mxu0 %v3624
        %v3724 = vpop.f32.mrb[0].mxu0
        %v3725 = vadd.f32 0.0, %v3724
        %v3726 = vpop.f32.mrb[0].mxu0
        %v3727 = vpop.f32.mrb[0].mxu0
        %v3728 = vadd.f32 0.0, %v3727
        %v3729 = vpop.f32.mrb[0].mxu0
        %3730 = vmatprep.mubr.bf16.mxu0 0
        %3731 = vmatmul.mubr.bf16.gmra.mrb[0].mxu0 %v3625
        %v3732 = vpop.f32.mrb[0].mxu0
        %v3733 = vadd.f32 0.0, %v3732
        %v3734 = vpop.f32.mrb[0].mxu0
        %v3735 = vpop.f32.mrb[0].mxu0
        %v3736 = vadd.f32 0.0, %v3735
        %v3737 = vpop.f32.mrb[0].mxu0
        %3738 = vdwg.mxu0
        %v3739 = vadd.f32 %v3589, %v3709
        %v3740 = vadd.f32 %v3590, %v3712
        %v3741 = vadd.f32 %v3591, %v3717
        %v3742 = vadd.f32 %v3592, %v3720
        %v3743 = vadd.f32 %v3593, %v3725
        %v3744 = vadd.f32 %v3594, %v3728
        %v3745 = vadd.f32 %v3595, %v3733
        %v3746 = vadd.f32 %v3596, %v3736
        %v3747 = vld [vmem:[%s3597 + $0x1] sm:$0xff]
        %v3748 = vld [vmem:[%s3597 + $0x11] sm:$0xff]
        %v3749 = vld [vmem:[%s3597 + $0x21] sm:$0xff]
        %v3750 = vld [vmem:[%s3597 + $0x31] sm:$0xff]
        %v3751 = vld [vmem:[%s3597 + $0x41] sm:$0xff]
        %v3752 = vld [vmem:[%s3597 + $0x51] sm:$0xff]
        %v3753 = vld [vmem:[%s3597 + $0x61] sm:$0xff]
        %v3754 = vld [vmem:[%s3597 + $0x71] sm:$0xff]
        %v3755 = vld [vmem:[%s5 + $0x1c0] sm:$0xf]
        %v3756 = vld [vmem:[%s5 + $0x1c4] sm:$0xf]
        %v3757 = vld [vmem:[%s5 + $0x1c8] sm:$0xf]
        %v3758 = vld [vmem:[%s5 + $0x1cc] sm:$0xf]
        %v3759 = vld [vmem:[%s5 + $0x1d0] sm:$0xf]
        %v3760 = vld [vmem:[%s5 + $0x1d4] sm:$0xf]
        %v3761 = vld [vmem:[%s5 + $0x1d8] sm:$0xf]
        %v3762 = vld [vmem:[%s5 + $0x1dc] sm:$0xf]
        %v3763 = vld [vmem:[%s5 + $0x1e0] sm:$0xf]
        %v3764 = vld [vmem:[%s5 + $0x1e4] sm:$0xf]
        %v3765 = vld [vmem:[%s5 + $0x1e8] sm:$0xf]
        %v3766 = vld [vmem:[%s5 + $0x1ec] sm:$0xf]
        %v3767 = vld [vmem:[%s5 + $0x1f0] sm:$0xf]
        %v3768 = vld [vmem:[%s5 + $0x1f4] sm:$0xf]
        %v3769 = vld [vmem:[%s5 + $0x1f8] sm:$0xf]
        %v3770 = vld [vmem:[%s5 + $0x1fc] sm:$0xf]
        %v3771 = vpack.c.bf16 %v3748, %v3747
        %v3772 = vpack.c.bf16 %v3750, %v3749
        %v3773 = vpack.c.bf16 %v3752, %v3751
        %v3774 = vpack.c.bf16 %v3754, %v3753
        %v3791 = vunpack.c.l.b16 %v3755
        %v3792 = vunpack.c.l.b16 %v3756
        %v3793 = vunpack.c.l.b16 %v3757
        %v3794 = vunpack.c.l.b16 %v3758
        %v3795 = vunpack.c.l.b16 %v3759
        %v3796 = vunpack.c.l.b16 %v3760
        %v3797 = vunpack.c.l.b16 %v3761
        %v3798 = vunpack.c.l.b16 %v3762
        %v3799 = vunpack.c.l.b16 %v3763
        %v3800 = vunpack.c.l.b16 %v3764
        %v3801 = vunpack.c.l.b16 %v3765
        %v3802 = vunpack.c.l.b16 %v3766
        %v3803 = vunpack.c.l.b16 %v3767
        %v3804 = vunpack.c.l.b16 %v3768
        %v3805 = vunpack.c.l.b16 %v3769
        %v3806 = vunpack.c.l.b16 %v3770
        %v3807 = vpack.c.b16 %v3792, %v3791
        %v3808 = vpack.c.b16 %v3794, %v3793
        %v3809 = vpack.c.b16 %v3796, %v3795
        %v3810 = vpack.c.b16 %v3798, %v3797
        %v3811 = vpack.c.b16 %v3800, %v3799
        %v3812 = vpack.c.b16 %v3802, %v3801
        %v3813 = vpack.c.b16 %v3804, %v3803
        %v3814 = vpack.c.b16 %v3806, %v3805
        %3823 = vmatprep.subr.bf16.mxu0 0
        %3824 = vmatpush1.bf16.msra.mxu0 %v3807
        %3825 = vmatprep.subr.bf16.mxu0 0
        %3826 = vmatpush1.bf16.msra.mxu0 %v3808
        %3827 = vmatprep.subr.bf16.mxu0 0
        %3828 = vmatpush1.bf16.msra.mxu0 %v3809
        %3829 = vmatprep.subr.bf16.mxu0 0
        %3830 = vmatpush1.bf16.msra.mxu0 %v3810
        %3831 = vmatprep.subr.bf16.mxu0 0
        %3832 = vmatpush1.bf16.msra.mxu0 %v3811
        %3833 = vmatprep.subr.bf16.mxu0 0
        %3834 = vmatpush1.bf16.msra.mxu0 %v3812
        %3835 = vmatprep.subr.bf16.mxu0 0
        %3836 = vmatpush1.bf16.msra.mxu0 %v3813
        %3837 = vmatprep.subr.bf16.mxu0 0
        %3838 = vmatpush1.bf16.msra.mxu0 %v3814
        %3839 = vmatprep.subr.bf16.mxu0 0
        %3840 = vmatpush1.bf16.msra.mxu0 0
        %3841 = vmatprep.subr.bf16.mxu0 0
        %3842 = vmatpush1.bf16.msra.mxu0 0
        %3843 = vmatprep.subr.bf16.mxu0 0
        %3844 = vmatpush1.bf16.msra.mxu0 0
        %3845 = vmatprep.subr.bf16.mxu0 0
        %3846 = vmatpush1.bf16.msra.mxu0 0
        %3847 = vmatprep.subr.bf16.mxu0 0
        %3848 = vmatpush1.bf16.msra.mxu0 0
        %3849 = vmatprep.subr.bf16.mxu0 0
        %3850 = vmatpush1.bf16.msra.mxu0 0
        %3851 = vmatprep.subr.bf16.mxu0 0
        %3852 = vmatpush1.bf16.msra.mxu0 0
        %3853 = vmatprep.subr.bf16.mxu0 0
        %3854 = vmatpush1.bf16.msra.mxu0 0
        %3855 = vmatprep.mubr.bf16.mxu0 0
        %3856 = vmatmul.mubr.bf16.gmra.mrb[0].mxu0 %v3771
        %v3857 = vpop.f32.mrb[0].mxu0
        %v3858 = vadd.f32 0.0, %v3857
        %v3859 = vpop.f32.mrb[0].mxu0
        %v3860 = vpop.f32.mrb[0].mxu0
        %v3861 = vadd.f32 0.0, %v3860
        %v3862 = vpop.f32.mrb[0].mxu0
        %3863 = vmatprep.mubr.bf16.mxu0 0
        %3864 = vmatmul.mubr.bf16.gmra.mrb[0].mxu0 %v3772
        %v3865 = vpop.f32.mrb[0].mxu0
        %v3866 = vadd.f32 0.0, %v3865
        %v3867 = vpop.f32.mrb[0].mxu0
        %v3868 = vpop.f32.mrb[0].mxu0
        %v3869 = vadd.f32 0.0, %v3868
        %v3870 = vpop.f32.mrb[0].mxu0
        %3871 = vmatprep.mubr.bf16.mxu0 0
        %3872 = vmatmul.mubr.bf16.gmra.mrb[0].mxu0 %v3773
        %v3873 = vpop.f32.mrb[0].mxu0
        %v3874 = vadd.f32 0.0, %v3873
        %v3875 = vpop.f32.mrb[0].mxu0
        %v3876 = vpop.f32.mrb[0].mxu0
        %v3877 = vadd.f32 0.0, %v3876
        %v3878 = vpop.f32.mrb[0].mxu0
        %3879 = vmatprep.mubr.bf16.mxu0 0
        %3880 = vmatmul.mubr.bf16.gmra.mrb[0].mxu0 %v3774
        %v3881 = vpop.f32.mrb[0].mxu0
        %v3882 = vadd.f32 0.0, %v3881
        %v3883 = vpop.f32.mrb[0].mxu0
        %v3884 = vpop.f32.mrb[0].mxu0
        %v3885 = vadd.f32 0.0, %v3884
        %v3886 = vpop.f32.mrb[0].mxu0
        %3887 = vdwg.mxu0
        %v3888 = vadd.f32 %v3739, %v3858
        %v3889 = vadd.f32 %v3740, %v3861
        %v3890 = vadd.f32 %v3741, %v3866
        %v3891 = vadd.f32 %v3742, %v3869
        %v3892 = vadd.f32 %v3743, %v3874
        %v3893 = vadd.f32 %v3744, %v3877
        %v3894 = vadd.f32 %v3745, %v3882
        %v3895 = vadd.f32 %v3746, %v3885
        %v3896 = vld [vmem:[%s3597 + $0x2] sm:$0xff]
        %v3897 = vld [vmem:[%s3597 + $0x12] sm:$0xff]
        %v3898 = vld [vmem:[%s3597 + $0x22] sm:$0xff]
        %v3899 = vld [vmem:[%s3597 + $0x32] sm:$0xff]
        %v3900 = vld [vmem:[%s3597 + $0x42] sm:$0xff]
        %v3901 = vld [vmem:[%s3597 + $0x52] sm:$0xff]
        %v3902 = vld [vmem:[%s3597 + $0x62] sm:$0xff]
        %v3903 = vld [vmem:[%s3597 + $0x72] sm:$0xff]
        %v3904 = vld [vmem:[%s5 + $0x200] sm:$0xf]
        %v3905 = vld [vmem:[%s5 + $0x204] sm:$0xf]
        %v3906 = vld [vmem:[%s5 + $0x208] sm:$0xf]
        %v3907 = vld [vmem:[%s5 + $0x20c] sm:$0xf]
        %v3908 = vld [vmem:[%s5 + $0x210] sm:$0xf]
        %v3909 = vld [vmem:[%s5 + $0x214] sm:$0xf]
        %v3910 = vld [vmem:[%s5 + $0x218] sm:$0xf]
        %v3911 = vld [vmem:[%s5 + $0x21c] sm:$0xf]
        %v3912 = vld [vmem:[%s5 + $0x220] sm:$0xf]
        %v3913 = vld [vmem:[%s5 + $0x224] sm:$0xf]
        %v3914 = vld [vmem:[%s5 + $0x228] sm:$0xf]
        %v3915 = vld [vmem:[%s5 + $0x22c] sm:$0xf]
        %v3916 = vld [vmem:[%s5 + $0x230] sm:$0xf]
        %v3917 = vld [vmem:[%s5 + $0x234] sm:$0xf]
        %v3918 = vld [vmem:[%s5 + $0x238] sm:$0xf]
        %v3919 = vld [vmem:[%s5 + $0x23c] sm:$0xf]
        %v3920 = vpack.c.bf16 %v3897, %v3896
        %v3921 = vpack.c.bf16 %v3899, %v3898
        %v3922 = vpack.c.bf16 %v3901, %v3900
        %v3923 = vpack.c.bf16 %v3903, %v3902
        %v3940 = vunpack.c.l.b16 %v3904
        %v3941 = vunpack.c.l.b16 %v3905
        %v3942 = vunpack.c.l.b16 %v3906
        %v3943 = vunpack.c.l.b16 %v3907
        %v3944 = vunpack.c.l.b16 %v3908
        %v3945 = vunpack.c.l.b16 %v3909
        %v3946 = vunpack.c.l.b16 %v3910
        %v3947 = vunpack.c.l.b16 %v3911
        %v3948 = vunpack.c.l.b16 %v3912
        %v3949 = vunpack.c.l.b16 %v3913
        %v3950 = vunpack.c.l.b16 %v3914
        %v3951 = vunpack.c.l.b16 %v3915
        %v3952 = vunpack.c.l.b16 %v3916
        %v3953 = vunpack.c.l.b16 %v3917
        %v3954 = vunpack.c.l.b16 %v3918
        %v3955 = vunpack.c.l.b16 %v3919
        %v3956 = vpack.c.b16 %v3941, %v3940
        %v3957 = vpack.c.b16 %v3943, %v3942
        %v3958 = vpack.c.b16 %v3945, %v3944
        %v3959 = vpack.c.b16 %v3947, %v3946
        %v3960 = vpack.c.b16 %v3949, %v3948
        %v3961 = vpack.c.b16 %v3951, %v3950
        %v3962 = vpack.c.b16 %v3953, %v3952
        %v3963 = vpack.c.b16 %v3955, %v3954
        %3972 = vmatprep.subr.bf16.mxu0 0
        %3973 = vmatpush1.bf16.msra.mxu0 %v3956
        %3974 = vmatprep.subr.bf16.mxu0 0
        %3975 = vmatpush1.bf16.msra.mxu0 %v3957
        %3976 = vmatprep.subr.bf16.mxu0 0
        %3977 = vmatpush1.bf16.msra.mxu0 %v3958
        %3978 = vmatprep.subr.bf16.mxu0 0
        %3979 = vmatpush1.bf16.msra.mxu0 %v3959
        %3980 = vmatprep.subr.bf16.mxu0 0
        %3981 = vmatpush1.bf16.msra.mxu0 %v3960
        %3982 = vmatprep.subr.bf16.mxu0 0
        %3983 = vmatpush1.bf16.msra.mxu0 %v3961
        %3984 = vmatprep.subr.bf16.mxu0 0
        %3985 = vmatpush1.bf16.msra.mxu0 %v3962
        %3986 = vmatprep.subr.bf16.mxu0 0
        %3987 = vmatpush1.bf16.msra.mxu0 %v3963
        %3988 = vmatprep.subr.bf16.mxu0 0
        %3989 = vmatpush1.bf16.msra.mxu0 0
        %3990 = vmatprep.subr.bf16.mxu0 0
        %3991 = vmatpush1.bf16.msra.mxu0 0
        %3992 = vmatprep.subr.bf16.mxu0 0
        %3993 = vmatpush1.bf16.msra.mxu0 0
        %3994 = vmatprep.subr.bf16.mxu0 0
        %3995 = vmatpush1.bf16.msra.mxu0 0
        %3996 = vmatprep.subr.bf16.mxu0 0
        %3997 = vmatpush1.bf16.msra.mxu0 0
        %3998 = vmatprep.subr.bf16.mxu0 0
        %3999 = vmatpush1.bf16.msra.mxu0 0
        %4000 = vmatprep.subr.bf16.mxu0 0
        %4001 = vmatpush1.bf16.msra.mxu0 0
        %4002 = vmatprep.subr.bf16.mxu0 0
        %4003 = vmatpush1.bf16.msra.mxu0 0
        %4004 = vmatprep.mubr.bf16.mxu0 0
        %4005 = vmatmul.mubr.bf16.gmra.mrb[0].mxu0 %v3920
        %v4006 = vpop.f32.mrb[0].mxu0
        %v4007 = vadd.f32 0.0, %v4006
        %v4008 = vpop.f32.mrb[0].mxu0
        %v4009 = vpop.f32.mrb[0].mxu0
        %v4010 = vadd.f32 0.0, %v4009
        %v4011 = vpop.f32.mrb[0].mxu0
        %4012 = vmatprep.mubr.bf16.mxu0 0
        %4013 = vmatmul.mubr.bf16.gmra.mrb[0].mxu0 %v3921
        %v4014 = vpop.f32.mrb[0].mxu0
        %v4015 = vadd.f32 0.0, %v4014
        %v4016 = vpop.f32.mrb[0].mxu0
        %v4017 = vpop.f32.mrb[0].mxu0
        %v4018 = vadd.f32 0.0, %v4017
        %v4019 = vpop.f32.mrb[0].mxu0
        %4020 = vmatprep.mubr.bf16.mxu0 0
        %4021 = vmatmul.mubr.bf16.gmra.mrb[0].mxu0 %v3922
        %v4022 = vpop.f32.mrb[0].mxu0
        %v4023 = vadd.f32 0.0, %v4022
        %v4024 = vpop.f32.mrb[0].mxu0
        %v4025 = vpop.f32.mrb[0].mxu0
        %v4026 = vadd.f32 0.0, %v4025
        %v4027 = vpop.f32.mrb[0].mxu0
        %4028 = vmatprep.mubr.bf16.mxu0 0
        %4029 = vmatmul.mubr.bf16.gmra.mrb[0].mxu0 %v3923
        %v4030 = vpop.f32.mrb[0].mxu0
        %v4031 = vadd.f32 0.0, %v4030
        %v4032 = vpop.f32.mrb[0].mxu0
        %v4033 = vpop.f32.mrb[0].mxu0
        %v4034 = vadd.f32 0.0, %v4033
        %v4035 = vpop.f32.mrb[0].mxu0
        %4036 = vdwg.mxu0
        %v4037 = vadd.f32 %v3888, %v4007
        %v4038 = vadd.f32 %v3889, %v4010
        %v4039 = vadd.f32 %v3890, %v4015
        %v4040 = vadd.f32 %v3891, %v4018
        %v4041 = vadd.f32 %v3892, %v4023
        %v4042 = vadd.f32 %v3893, %v4026
        %v4043 = vadd.f32 %v3894, %v4031
        %v4044 = vadd.f32 %v3895, %v4034
        %v4045 = vld [vmem:[#allocation2] sm:$0xff]
        %v4046 = vld [vmem:[#allocation2 + $0x8] sm:$0xff]
        %v4047 = vld [vmem:[#allocation2 + $0x10] sm:$0xff]
        %v4048 = vld [vmem:[#allocation2 + $0x18] sm:$0xff]
        %v4049 = vld [vmem:[#allocation2 + $0x20] sm:$0xff]
        %v4050 = vld [vmem:[#allocation2 + $0x28] sm:$0xff]
        %v4051 = vld [vmem:[#allocation2 + $0x30] sm:$0xff]
        %v4052 = vld [vmem:[#allocation2 + $0x38] sm:$0xff]
        %v4053 = vadd.f32 %v4045, %v4037
        %v4054 = vadd.f32 %v4046, %v4038
        %v4055 = vadd.f32 %v4047, %v4039
        %v4056 = vadd.f32 %v4048, %v4040
        %v4057 = vadd.f32 %v4049, %v4041
        %v4058 = vadd.f32 %v4050, %v4042
        %v4059 = vadd.f32 %v4051, %v4043
        %v4060 = vadd.f32 %v4052, %v4044
        %4061 = vst [vmem:[#allocation2] sm:$0xff] %v4053
        %4062 = vst [vmem:[#allocation2 + $0x8] sm:$0xff] %v4054
        %4063 = vst [vmem:[#allocation2 + $0x10] sm:$0xff] %v4055
        %4064 = vst [vmem:[#allocation2 + $0x18] sm:$0xff] %v4056
        %4065 = vst [vmem:[#allocation2 + $0x20] sm:$0xff] %v4057
        %4066 = vst [vmem:[#allocation2 + $0x28] sm:$0xff] %v4058
        %4067 = vst [vmem:[#allocation2 + $0x30] sm:$0xff] %v4059
        %4068 = vst [vmem:[#allocation2 + $0x38] sm:$0xff] %v4060
        %s4069 = scalar_lea.vmem %s3, 4
        %v4070 = vld [vmem:[%s4069] sm:$0x7]
        %v4071 = vld [vmem:[#allocation2] sm:$0xff]
        %v4072 = vld [vmem:[#allocation2 + $0x8] sm:$0xff]
        %v4073 = vld [vmem:[#allocation2 + $0x10] sm:$0xff]
        %v4074 = vld [vmem:[#allocation2 + $0x18] sm:$0xff]
        %v4075 = vld [vmem:[#allocation2 + $0x20] sm:$0xff]
        %v4076 = vld [vmem:[#allocation2 + $0x28] sm:$0xff]
        %v4077 = vld [vmem:[#allocation2 + $0x30] sm:$0xff]
        %v4078 = vld [vmem:[#allocation2 + $0x38] sm:$0xff]
        %v4079 = vlaneseq
        %v4080 = vshrl.u32 %v4079, 7
        %v4081 = vsub.s32 0, %v4080
        %v4082 = vrot.slane %v4070, %v4081
        %v4083 = vmul.f32 %v4071, %v4082
        %v4084 = vmul.f32 %v4072, %v4082
        %v4085 = vmul.f32 %v4073, %v4082
        %v4086 = vmul.f32 %v4074, %v4082
        %v4087 = vmul.f32 %v4075, %v4082
        %v4088 = vmul.f32 %v4076, %v4082
        %v4089 = vmul.f32 %v4077, %v4082
        %v4090 = vmul.f32 %v4078, %v4082
        %v4091 = vlaneseq
        %v4092 = vshrl.u32 %v4091, 7
        %v4093 = vsub.s32 1, %v4092
        %v4094 = vrot.slane %v4070, %v4093
        %v4095 = vadd.f32 %v4083, %v4094
        %v4096 = vadd.f32 %v4084, %v4094
        %v4097 = vadd.f32 %v4085, %v4094
        %v4098 = vadd.f32 %v4086, %v4094
        %v4099 = vadd.f32 %v4087, %v4094
        %v4100 = vadd.f32 %v4088, %v4094
        %v4101 = vadd.f32 %v4089, %v4094
        %v4102 = vadd.f32 %v4090, %v4094
        %v4103 = vmax.f32 %v4095, 0.0
        %v4104 = vmax.f32 %v4096, 0.0
        %v4105 = vmax.f32 %v4097, 0.0
        %v4106 = vmax.f32 %v4098, 0.0
        %v4107 = vmax.f32 %v4099, 0.0
        %v4108 = vmax.f32 %v4100, 0.0
        %v4109 = vmax.f32 %v4101, 0.0
        %v4110 = vmax.f32 %v4102, 0.0
        %v4111 = vpack.c.bf16 %v4104, %v4103
        %v4112 = vpack.c.bf16 %v4106, %v4105
        %v4113 = vpack.c.bf16 %v4108, %v4107
        %v4114 = vpack.c.bf16 %v4110, %v4109
        %s4115 = scalar_lea.vmem %s4, 64
        %v4116 = vld [vmem:[%s4115] sm:$0xf]
        %v4117 = vld [vmem:[%s4115 + $0x4] sm:$0xf]
        %v4118 = vld [vmem:[%s4115 + $0x8] sm:$0xf]
        %v4119 = vld [vmem:[%s4115 + $0xc] sm:$0xf]
        %v4120 = vld [vmem:[%s4115 + $0x10] sm:$0xf]
        %v4121 = vld [vmem:[%s4115 + $0x14] sm:$0xf]
        %v4122 = vld [vmem:[%s4115 + $0x18] sm:$0xf]
        %v4123 = vld [vmem:[%s4115 + $0x1c] sm:$0xf]
        %v4124 = vld [vmem:[%s4115 + $0x20] sm:$0xf]
        %v4125 = vld [vmem:[%s4115 + $0x24] sm:$0xf]
        %v4126 = vld [vmem:[%s4115 + $0x28] sm:$0xf]
        %v4127 = vld [vmem:[%s4115 + $0x2c] sm:$0xf]
        %v4128 = vld [vmem:[%s4115 + $0x30] sm:$0xf]
        %v4129 = vld [vmem:[%s4115 + $0x34] sm:$0xf]
        %v4130 = vld [vmem:[%s4115 + $0x38] sm:$0xf]
        %v4131 = vld [vmem:[%s4115 + $0x3c] sm:$0xf]
        %v4132 = vlaneseq
        %v4133 = vshrl.u32 %v4132, 7
        %v4134 = vsub.s32 2, %v4133
        %v4135 = vrot.slane %v4070, %v4134
        %v4152 = vunpack.c.l.b16 %v4116
        %v4153 = vunpack.c.l.b16 %v4117
        %v4154 = vunpack.c.l.b16 %v4118
        %v4155 = vunpack.c.l.b16 %v4119
        %v4156 = vunpack.c.l.b16 %v4120
        %v4157 = vunpack.c.l.b16 %v4121
        %v4158 = vunpack.c.l.b16 %v4122
        %v4159 = vunpack.c.l.b16 %v4123
        %v4160 = vunpack.c.l.b16 %v4124
        %v4161 = vunpack.c.l.b16 %v4125
        %v4162 = vunpack.c.l.b16 %v4126
        %v4163 = vunpack.c.l.b16 %v4127
        %v4164 = vunpack.c.l.b16 %v4128
        %v4165 = vunpack.c.l.b16 %v4129
        %v4166 = vunpack.c.l.b16 %v4130
        %v4167 = vunpack.c.l.b16 %v4131
        %v4168 = vpack.c.b16 %v4153, %v4152
        %v4169 = vpack.c.b16 %v4155, %v4154
        %v4170 = vpack.c.b16 %v4157, %v4156
        %v4171 = vpack.c.b16 %v4159, %v4158
        %v4172 = vpack.c.b16 %v4161, %v4160
        %v4173 = vpack.c.b16 %v4163, %v4162
        %v4174 = vpack.c.b16 %v4165, %v4164
        %v4175 = vpack.c.b16 %v4167, %v4166
        %4184 = vmatprep.subr.bf16.mxu0 0
        %4185 = vmatpush1.bf16.msra.mxu0 %v4168
        %4186 = vmatprep.subr.bf16.mxu0 0
        %4187 = vmatpush1.bf16.msra.mxu0 %v4169
        %4188 = vmatprep.subr.bf16.mxu0 0
        %4189 = vmatpush1.bf16.msra.mxu0 %v4170
        %4190 = vmatprep.subr.bf16.mxu0 0
        %4191 = vmatpush1.bf16.msra.mxu0 %v4171
        %4192 = vmatprep.subr.bf16.mxu0 0
        %4193 = vmatpush1.bf16.msra.mxu0 %v4172
        %4194 = vmatprep.subr.bf16.mxu0 0
        %4195 = vmatpush1.bf16.msra.mxu0 %v4173
        %4196 = vmatprep.subr.bf16.mxu0 0
        %4197 = vmatpush1.bf16.msra.mxu0 %v4174
        %4198 = vmatprep.subr.bf16.mxu0 0
        %4199 = vmatpush1.bf16.msra.mxu0 %v4175
        %4200 = vmatprep.subr.bf16.mxu0 0
        %4201 = vmatpush1.bf16.msra.mxu0 0
        %4202 = vmatprep.subr.bf16.mxu0 0
        %4203 = vmatpush1.bf16.msra.mxu0 0
        %4204 = vmatprep.subr.bf16.mxu0 0
        %4205 = vmatpush1.bf16.msra.mxu0 0
        %4206 = vmatprep.subr.bf16.mxu0 0
        %4207 = vmatpush1.bf16.msra.mxu0 0
        %4208 = vmatprep.subr.bf16.mxu0 0
        %4209 = vmatpush1.bf16.msra.mxu0 0
        %4210 = vmatprep.subr.bf16.mxu0 0
        %4211 = vmatpush1.bf16.msra.mxu0 0
        %4212 = vmatprep.subr.bf16.mxu0 0
        %4213 = vmatpush1.bf16.msra.mxu0 0
        %4214 = vmatprep.subr.bf16.mxu0 0
        %4215 = vmatpush1.bf16.msra.mxu0 0
        %4216 = vmatprep.mubr.bf16.mxu0 0
        %4217 = vmatmul.mubr.bf16.gmra.mrb[0].mxu0 %v4111
        %v4218 = vpop.f32.mrb[0].mxu0
        %v4219 = vadd.f32 %v4135, %v4218
        %v4220 = vpop.f32.mrb[0].mxu0
        %v4221 = vpop.f32.mrb[0].mxu0
        %v4222 = vadd.f32 %v4135, %v4221
        %v4223 = vpop.f32.mrb[0].mxu0
        %4224 = vmatprep.mubr.bf16.mxu0 0
        %4225 = vmatmul.mubr.bf16.gmra.mrb[0].mxu0 %v4112
        %v4226 = vpop.f32.mrb[0].mxu0
        %v4227 = vadd.f32 %v4135, %v4226
        %v4228 = vpop.f32.mrb[0].mxu0
        %v4229 = vpop.f32.mrb[0].mxu0
        %v4230 = vadd.f32 %v4135, %v4229
        %v4231 = vpop.f32.mrb[0].mxu0
        %4232 = vmatprep.mubr.bf16.mxu0 0
        %4233 = vmatmul.mubr.bf16.gmra.mrb[0].mxu0 %v4113
        %v4234 = vpop.f32.mrb[0].mxu0
        %v4235 = vadd.f32 %v4135, %v4234
        %v4236 = vpop.f32.mrb[0].mxu0
        %v4237 = vpop.f32.mrb[0].mxu0
        %v4238 = vadd.f32 %v4135, %v4237
        %v4239 = vpop.f32.mrb[0].mxu0
        %4240 = vmatprep.mubr.bf16.mxu0 0
        %4241 = vmatmul.mubr.bf16.gmra.mrb[0].mxu0 %v4114
        %v4242 = vpop.f32.mrb[0].mxu0
        %v4243 = vadd.f32 %v4135, %v4242
        %v4244 = vpop.f32.mrb[0].mxu0
        %v4245 = vpop.f32.mrb[0].mxu0
        %v4246 = vadd.f32 %v4135, %v4245
        %v4247 = vpop.f32.mrb[0].mxu0
        %4248 = vdwg.mxu0
        %v4249 = vmax.f32 %v4219, 0.0
        %v4250 = vmax.f32 %v4222, 0.0
        %v4251 = vmax.f32 %v4227, 0.0
        %v4252 = vmax.f32 %v4230, 0.0
        %v4253 = vmax.f32 %v4235, 0.0
        %v4254 = vmax.f32 %v4238, 0.0
        %v4255 = vmax.f32 %v4243, 0.0
        %v4256 = vmax.f32 %v4246, 0.0
        %4257 = vst [vmem:[%s2710 + $0x1] sm:$0xff] %v4249
        %4258 = vst [vmem:[%s2710 + $0x11] sm:$0xff] %v4250
        %4259 = vst [vmem:[%s2710 + $0x21] sm:$0xff] %v4251
        %4260 = vst [vmem:[%s2710 + $0x31] sm:$0xff] %v4252
        %4261 = vst [vmem:[%s2710 + $0x41] sm:$0xff] %v4253
        %4262 = vst [vmem:[%s2710 + $0x51] sm:$0xff] %v4254
        %4263 = vst [vmem:[%s2710 + $0x61] sm:$0xff] %v4255
        %4264 = vst [vmem:[%s2710 + $0x71] sm:$0xff] %v4256
        %v4265 = vld [vmem:[#allocation3] sm:$0xff]
        %v4266 = vld [vmem:[#allocation3 + $0x10] sm:$0xff]
        %v4267 = vld [vmem:[#allocation3 + $0x20] sm:$0xff]
        %v4268 = vld [vmem:[#allocation3 + $0x30] sm:$0xff]
        %v4269 = vld [vmem:[#allocation3 + $0x40] sm:$0xff]
        %v4270 = vld [vmem:[#allocation3 + $0x50] sm:$0xff]
        %v4271 = vld [vmem:[#allocation3 + $0x60] sm:$0xff]
        %v4272 = vld [vmem:[#allocation3 + $0x70] sm:$0xff]
        %s4273 = scalar_lea.vmem %s5, 576
        %v4274 = vld [vmem:[%s4273] sm:$0xf]
        %v4275 = vld [vmem:[%s4273 + $0x4] sm:$0xf]
        %v4276 = vld [vmem:[%s4273 + $0x8] sm:$0xf]
        %v4277 = vld [vmem:[%s4273 + $0xc] sm:$0xf]
        %v4278 = vld [vmem:[%s4273 + $0x10] sm:$0xf]
        %v4279 = vld [vmem:[%s4273 + $0x14] sm:$0xf]
        %v4280 = vld [vmem:[%s4273 + $0x18] sm:$0xf]
        %v4281 = vld [vmem:[%s4273 + $0x1c] sm:$0xf]
        %v4282 = vld [vmem:[%s4273 + $0x20] sm:$0xf]
        %v4283 = vld [vmem:[%s4273 + $0x24] sm:$0xf]
        %v4284 = vld [vmem:[%s4273 + $0x28] sm:$0xf]
        %v4285 = vld [vmem:[%s4273 + $0x2c] sm:$0xf]
        %v4286 = vld [vmem:[%s4273 + $0x30] sm:$0xf]
        %v4287 = vld [vmem:[%s4273 + $0x34] sm:$0xf]
        %v4288 = vld [vmem:[%s4273 + $0x38] sm:$0xf]
        %v4289 = vld [vmem:[%s4273 + $0x3c] sm:$0xf]
        %v4290 = vpack.c.bf16 %v4266, %v4265
        %v4291 = vpack.c.bf16 %v4268, %v4267
        %v4292 = vpack.c.bf16 %v4270, %v4269
        %v4293 = vpack.c.bf16 %v4272, %v4271
        %v4294 = vld [vmem:[#allocation3 + $0x1] sm:$0xff]
        %v4295 = vld [vmem:[#allocation3 + $0x11] sm:$0xff]
        %v4296 = vld [vmem:[#allocation3 + $0x21] sm:$0xff]
        %v4297 = vld [vmem:[#allocation3 + $0x31] sm:$0xff]
        %v4298 = vld [vmem:[#allocation3 + $0x41] sm:$0xff]
        %v4299 = vld [vmem:[#allocation3 + $0x51] sm:$0xff]
        %v4300 = vld [vmem:[#allocation3 + $0x61] sm:$0xff]
        %v4301 = vld [vmem:[#allocation3 + $0x71] sm:$0xff]
        %v4302 = vld [vmem:[%s4273 + $0x40] sm:$0xf]
        %v4303 = vld [vmem:[%s4273 + $0x44] sm:$0xf]
        %v4304 = vld [vmem:[%s4273 + $0x48] sm:$0xf]
        %v4305 = vld [vmem:[%s4273 + $0x4c] sm:$0xf]
        %v4306 = vld [vmem:[%s4273 + $0x50] sm:$0xf]
        %v4307 = vld [vmem:[%s4273 + $0x54] sm:$0xf]
        %v4308 = vld [vmem:[%s4273 + $0x58] sm:$0xf]
        %v4309 = vld [vmem:[%s4273 + $0x5c] sm:$0xf]
        %v4310 = vld [vmem:[%s4273 + $0x60] sm:$0xf]
        %v4311 = vld [vmem:[%s4273 + $0x64] sm:$0xf]
        %v4312 = vld [vmem:[%s4273 + $0x68] sm:$0xf]
        %v4313 = vld [vmem:[%s4273 + $0x6c] sm:$0xf]
        %v4314 = vld [vmem:[%s4273 + $0x70] sm:$0xf]
        %v4315 = vld [vmem:[%s4273 + $0x74] sm:$0xf]
        %v4316 = vld [vmem:[%s4273 + $0x78] sm:$0xf]
        %v4317 = vld [vmem:[%s4273 + $0x7c] sm:$0xf]
        %v4318 = vpack.c.bf16 %v4295, %v4294
        %v4319 = vpack.c.bf16 %v4297, %v4296
        %v4320 = vpack.c.bf16 %v4299, %v4298
        %v4321 = vpack.c.bf16 %v4301, %v4300
        %v4338 = vunpack.c.l.b16 %v4302
        %v4339 = vunpack.c.l.b16 %v4303
        %v4340 = vunpack.c.l.b16 %v4304
        %v4341 = vunpack.c.l.b16 %v4305
        %v4342 = vunpack.c.l.b16 %v4306
        %v4343 = vunpack.c.l.b16 %v4307
        %v4344 = vunpack.c.l.b16 %v4308
        %v4345 = vunpack.c.l.b16 %v4309
        %v4346 = vunpack.c.l.b16 %v4310
        %v4347 = vunpack.c.l.b16 %v4311
        %v4348 = vunpack.c.l.b16 %v4312
        %v4349 = vunpack.c.l.b16 %v4313
        %v4350 = vunpack.c.l.b16 %v4314
        %v4351 = vunpack.c.l.b16 %v4315
        %v4352 = vunpack.c.l.b16 %v4316
        %v4353 = vunpack.c.l.b16 %v4317
        %v4354 = vpack.c.b16 %v4339, %v4338
        %v4355 = vpack.c.b16 %v4341, %v4340
        %v4356 = vpack.c.b16 %v4343, %v4342
        %v4357 = vpack.c.b16 %v4345, %v4344
        %v4358 = vpack.c.b16 %v4347, %v4346
        %v4359 = vpack.c.b16 %v4349, %v4348
        %v4360 = vpack.c.b16 %v4351, %v4350
        %v4361 = vpack.c.b16 %v4353, %v4352
        %4370 = vmatprep.subr.bf16.mxu0 0
        %4371 = vmatpush1.bf16.msra.mxu0 %v4354
        %4372 = vmatprep.subr.bf16.mxu0 0
        %4373 = vmatpush1.bf16.msra.mxu0 %v4355
        %4374 = vmatprep.subr.bf16.mxu0 0
        %4375 = vmatpush1.bf16.msra.mxu0 %v4356
        %4376 = vmatprep.subr.bf16.mxu0 0
        %4377 = vmatpush1.bf16.msra.mxu0 %v4357
        %4378 = vmatprep.subr.bf16.mxu0 0
        %4379 = vmatpush1.bf16.msra.mxu0 %v4358
        %4380 = vmatprep.subr.bf16.mxu0 0
        %4381 = vmatpush1.bf16.msra.mxu0 %v4359
        %4382 = vmatprep.subr.bf16.mxu0 0
        %4383 = vmatpush1.bf16.msra.mxu0 %v4360
        %4384 = vmatprep.subr.bf16.mxu0 0
        %4385 = vmatpush1.bf16.msra.mxu0 %v4361
        %4386 = vmatprep.subr.bf16.mxu0 0
        %4387 = vmatpush1.bf16.msra.mxu0 0
        %4388 = vmatprep.subr.bf16.mxu0 0
        %4389 = vmatpush1.bf16.msra.mxu0 0
        %4390 = vmatprep.subr.bf16.mxu0 0
        %4391 = vmatpush1.bf16.msra.mxu0 0
        %4392 = vmatprep.subr.bf16.mxu0 0
        %4393 = vmatpush1.bf16.msra.mxu0 0
        %4394 = vmatprep.subr.bf16.mxu0 0
        %4395 = vmatpush1.bf16.msra.mxu0 0
        %4396 = vmatprep.subr.bf16.mxu0 0
        %4397 = vmatpush1.bf16.msra.mxu0 0
        %4398 = vmatprep.subr.bf16.mxu0 0
        %4399 = vmatpush1.bf16.msra.mxu0 0
        %4400 = vmatprep.subr.bf16.mxu0 0
        %4401 = vmatpush1.bf16.msra.mxu0 0
        %4402 = vmatprep.mubr.bf16.mxu0 0
        %4403 = vmatmul.mubr.bf16.gmra.mrb[0].mxu0 %v4318
        %v4404 = vpop.f32.mrb[0].mxu0
        %v4405 = vadd.f32 0.0, %v4404
        %v4406 = vpop.f32.mrb[0].mxu0
        %v4407 = vpop.f32.mrb[0].mxu0
        %v4408 = vadd.f32 0.0, %v4407
        %v4409 = vpop.f32.mrb[0].mxu0
        %4410 = vmatprep.mubr.bf16.mxu0 0
        %4411 = vmatmul.mubr.bf16.gmra.mrb[0].mxu0 %v4319
        %v4412 = vpop.f32.mrb[0].mxu0
        %v4413 = vadd.f32 0.0, %v4412
        %v4414 = vpop.f32.mrb[0].mxu0
        %v4415 = vpop.f32.mrb[0].mxu0
        %v4416 = vadd.f32 0.0, %v4415
        %v4417 = vpop.f32.mrb[0].mxu0
        %4418 = vmatprep.mubr.bf16.mxu0 0
        %4419 = vmatmul.mubr.bf16.gmra.mrb[0].mxu0 %v4320
        %v4420 = vpop.f32.mrb[0].mxu0
        %v4421 = vadd.f32 0.0, %v4420
        %v4422 = vpop.f32.mrb[0].mxu0
        %v4423 = vpop.f32.mrb[0].mxu0
        %v4424 = vadd.f32 0.0, %v4423
        %v4425 = vpop.f32.mrb[0].mxu0
        %4426 = vmatprep.mubr.bf16.mxu0 0
        %4427 = vmatmul.mubr.bf16.gmra.mrb[0].mxu0 %v4321
        %v4428 = vpop.f32.mrb[0].mxu0
        %v4429 = vadd.f32 0.0, %v4428
        %v4430 = vpop.f32.mrb[0].mxu0
        %v4431 = vpop.f32.mrb[0].mxu0
        %v4432 = vadd.f32 0.0, %v4431
        %v4433 = vpop.f32.mrb[0].mxu0
        %4434 = vdwg.mxu0
        %v4451 = vunpack.c.l.b16 %v4274
        %v4452 = vunpack.c.l.b16 %v4275
        %v4453 = vunpack.c.l.b16 %v4276
        %v4454 = vunpack.c.l.b16 %v4277
        %v4455 = vunpack.c.l.b16 %v4278
        %v4456 = vunpack.c.l.b16 %v4279
        %v4457 = vunpack.c.l.b16 %v4280
        %v4458 = vunpack.c.l.b16 %v4281
        %v4459 = vunpack.c.l.b16 %v4282
        %v4460 = vunpack.c.l.b16 %v4283
        %v4461 = vunpack.c.l.b16 %v4284
        %v4462 = vunpack.c.l.b16 %v4285
        %v4463 = vunpack.c.l.b16 %v4286
        %v4464 = vunpack.c.l.b16 %v4287
        %v4465 = vunpack.c.l.b16 %v4288
        %v4466 = vunpack.c.l.b16 %v4289
        %v4467 = vpack.c.b16 %v4452, %v4451
        %v4468 = vpack.c.b16 %v4454, %v4453
        %v4469 = vpack.c.b16 %v4456, %v4455
        %v4470 = vpack.c.b16 %v4458, %v4457
        %v4471 = vpack.c.b16 %v4460, %v4459
        %v4472 = vpack.c.b16 %v4462, %v4461
        %v4473 = vpack.c.b16 %v4464, %v4463
        %v4474 = vpack.c.b16 %v4466, %v4465
        %4483 = vmatprep.subr.bf16.mxu0 0
        %4484 = vmatpush1.bf16.msra.mxu0 %v4467
        %4485 = vmatprep.subr.bf16.mxu0 0
        %4486 = vmatpush1.bf16.msra.mxu0 %v4468
        %4487 = vmatprep.subr.bf16.mxu0 0
        %4488 = vmatpush1.bf16.msra.mxu0 %v4469
        %4489 = vmatprep.subr.bf16.mxu0 0
        %4490 = vmatpush1.bf16.msra.mxu0 %v4470
        %4491 = vmatprep.subr.bf16.mxu0 0
        %4492 = vmatpush1.bf16.msra.mxu0 %v4471
        %4493 = vmatprep.subr.bf16.mxu0 0
        %4494 = vmatpush1.bf16.msra.mxu0 %v4472
        %4495 = vmatprep.subr.bf16.mxu0 0
        %4496 = vmatpush1.bf16.msra.mxu0 %v4473
        %4497 = vmatprep.subr.bf16.mxu0 0
        %4498 = vmatpush1.bf16.msra.mxu0 %v4474
        %4499 = vmatprep.subr.bf16.mxu0 0
        %4500 = vmatpush1.bf16.msra.mxu0 0
        %4501 = vmatprep.subr.bf16.mxu0 0
        %4502 = vmatpush1.bf16.msra.mxu0 0
        %4503 = vmatprep.subr.bf16.mxu0 0
        %4504 = vmatpush1.bf16.msra.mxu0 0
        %4505 = vmatprep.subr.bf16.mxu0 0
        %4506 = vmatpush1.bf16.msra.mxu0 0
        %4507 = vmatprep.subr.bf16.mxu0 0
        %4508 = vmatpush1.bf16.msra.mxu0 0
        %4509 = vmatprep.subr.bf16.mxu0 0
        %4510 = vmatpush1.bf16.msra.mxu0 0
        %4511 = vmatprep.subr.bf16.mxu0 0
        %4512 = vmatpush1.bf16.msra.mxu0 0
        %4513 = vmatprep.subr.bf16.mxu0 0
        %4514 = vmatpush1.bf16.msra.mxu0 0
        %4515 = vmatprep.mubr.bf16.mxu0 0
        %4516 = vmatmul.mubr.bf16.gmra.mrb[0].mxu0 %v4290
        %v4517 = vpop.f32.mrb[0].mxu0
        %v4518 = vadd.f32 %v4405, %v4517
        %v4519 = vpop.f32.mrb[0].mxu0
        %v4520 = vpop.f32.mrb[0].mxu0
        %v4521 = vadd.f32 %v4408, %v4520
        %v4522 = vpop.f32.mrb[0].mxu0
        %4523 = vmatprep.mubr.bf16.mxu0 0
        %4524 = vmatmul.mubr.bf16.gmra.mrb[0].mxu0 %v4291
        %v4525 = vpop.f32.mrb[0].mxu0
        %v4526 = vadd.f32 %v4413, %v4525
        %v4527 = vpop.f32.mrb[0].mxu0
        %v4528 = vpop.f32.mrb[0].mxu0
        %v4529 = vadd.f32 %v4416, %v4528
        %v4530 = vpop.f32.mrb[0].mxu0
        %4531 = vmatprep.mubr.bf16.mxu0 0
        %4532 = vmatmul.mubr.bf16.gmra.mrb[0].mxu0 %v4292
        %v4533 = vpop.f32.mrb[0].mxu0
        %v4534 = vadd.f32 %v4421, %v4533
        %v4535 = vpop.f32.mrb[0].mxu0
        %v4536 = vpop.f32.mrb[0].mxu0
        %v4537 = vadd.f32 %v4424, %v4536
        %v4538 = vpop.f32.mrb[0].mxu0
        %4539 = vmatprep.mubr.bf16.mxu0 0
        %4540 = vmatmul.mubr.bf16.gmra.mrb[0].mxu0 %v4293
        %v4541 = vpop.f32.mrb[0].mxu0
        %v4542 = vadd.f32 %v4429, %v4541
        %v4543 = vpop.f32.mrb[0].mxu0
        %v4544 = vpop.f32.mrb[0].mxu0
        %v4545 = vadd.f32 %v4432, %v4544
        %v4546 = vpop.f32.mrb[0].mxu0
        %4547 = vdwg.mxu0
        %v4548 = vld [vmem:[#allocation3 + $0x2] sm:$0xff]
        %v4549 = vld [vmem:[#allocation3 + $0x12] sm:$0xff]
        %v4550 = vld [vmem:[#allocation3 + $0x22] sm:$0xff]
        %v4551 = vld [vmem:[#allocation3 + $0x32] sm:$0xff]
        %v4552 = vld [vmem:[#allocation3 + $0x42] sm:$0xff]
        %v4553 = vld [vmem:[#allocation3 + $0x52] sm:$0xff]
        %v4554 = vld [vmem:[#allocation3 + $0x62] sm:$0xff]
        %v4555 = vld [vmem:[#allocation3 + $0x72] sm:$0xff]
        %v4556 = vld [vmem:[%s4273 + $0x80] sm:$0xf]
        %v4557 = vld [vmem:[%s4273 + $0x84] sm:$0xf]
        %v4558 = vld [vmem:[%s4273 + $0x88] sm:$0xf]
        %v4559 = vld [vmem:[%s4273 + $0x8c] sm:$0xf]
        %v4560 = vld [vmem:[%s4273 + $0x90] sm:$0xf]
        %v4561 = vld [vmem:[%s4273 + $0x94] sm:$0xf]
        %v4562 = vld [vmem:[%s4273 + $0x98] sm:$0xf]
        %v4563 = vld [vmem:[%s4273 + $0x9c] sm:$0xf]
        %v4564 = vld [vmem:[%s4273 + $0xa0] sm:$0xf]
        %v4565 = vld [vmem:[%s4273 + $0xa4] sm:$0xf]
        %v4566 = vld [vmem:[%s4273 + $0xa8] sm:$0xf]
        %v4567 = vld [vmem:[%s4273 + $0xac] sm:$0xf]
        %v4568 = vld [vmem:[%s4273 + $0xb0] sm:$0xf]
        %v4569 = vld [vmem:[%s4273 + $0xb4] sm:$0xf]
        %v4570 = vld [vmem:[%s4273 + $0xb8] sm:$0xf]
        %v4571 = vld [vmem:[%s4273 + $0xbc] sm:$0xf]
        %v4572 = vpack.c.bf16 %v4549, %v4548
        %v4573 = vpack.c.bf16 %v4551, %v4550
        %v4574 = vpack.c.bf16 %v4553, %v4552
        %v4575 = vpack.c.bf16 %v4555, %v4554
        %v4592 = vunpack.c.l.b16 %v4556
        %v4593 = vunpack.c.l.b16 %v4557
        %v4594 = vunpack.c.l.b16 %v4558
        %v4595 = vunpack.c.l.b16 %v4559
        %v4596 = vunpack.c.l.b16 %v4560
        %v4597 = vunpack.c.l.b16 %v4561
        %v4598 = vunpack.c.l.b16 %v4562
        %v4599 = vunpack.c.l.b16 %v4563
        %v4600 = vunpack.c.l.b16 %v4564
        %v4601 = vunpack.c.l.b16 %v4565
        %v4602 = vunpack.c.l.b16 %v4566
        %v4603 = vunpack.c.l.b16 %v4567
        %v4604 = vunpack.c.l.b16 %v4568
        %v4605 = vunpack.c.l.b16 %v4569
        %v4606 = vunpack.c.l.b16 %v4570
        %v4607 = vunpack.c.l.b16 %v4571
        %v4608 = vpack.c.b16 %v4593, %v4592
        %v4609 = vpack.c.b16 %v4595, %v4594
        %v4610 = vpack.c.b16 %v4597, %v4596
        %v4611 = vpack.c.b16 %v4599, %v4598
        %v4612 = vpack.c.b16 %v4601, %v4600
        %v4613 = vpack.c.b16 %v4603, %v4602
        %v4614 = vpack.c.b16 %v4605, %v4604
        %v4615 = vpack.c.b16 %v4607, %v4606
        %4624 = vmatprep.subr.bf16.mxu0 0
        %4625 = vmatpush1.bf16.msra.mxu0 %v4608
        %4626 = vmatprep.subr.bf16.mxu0 0
        %4627 = vmatpush1.bf16.msra.mxu0 %v4609
        %4628 = vmatprep.subr.bf16.mxu0 0
        %4629 = vmatpush1.bf16.msra.mxu0 %v4610
        %4630 = vmatprep.subr.bf16.mxu0 0
        %4631 = vmatpush1.bf16.msra.mxu0 %v4611
        %4632 = vmatprep.subr.bf16.mxu0 0
        %4633 = vmatpush1.bf16.msra.mxu0 %v4612
        %4634 = vmatprep.subr.bf16.mxu0 0
        %4635 = vmatpush1.bf16.msra.mxu0 %v4613
        %4636 = vmatprep.subr.bf16.mxu0 0
        %4637 = vmatpush1.bf16.msra.mxu0 %v4614
        %4638 = vmatprep.subr.bf16.mxu0 0
        %4639 = vmatpush1.bf16.msra.mxu0 %v4615
        %4640 = vmatprep.subr.bf16.mxu0 0
        %4641 = vmatpush1.bf16.msra.mxu0 0
        %4642 = vmatprep.subr.bf16.mxu0 0
        %4643 = vmatpush1.bf16.msra.mxu0 0
        %4644 = vmatprep.subr.bf16.mxu0 0
        %4645 = vmatpush1.bf16.msra.mxu0 0
        %4646 = vmatprep.subr.bf16.mxu0 0
        %4647 = vmatpush1.bf16.msra.mxu0 0
        %4648 = vmatprep.subr.bf16.mxu0 0
        %4649 = vmatpush1.bf16.msra.mxu0 0
        %4650 = vmatprep.subr.bf16.mxu0 0
        %4651 = vmatpush1.bf16.msra.mxu0 0
        %4652 = vmatprep.subr.bf16.mxu0 0
        %4653 = vmatpush1.bf16.msra.mxu0 0
        %4654 = vmatprep.subr.bf16.mxu0 0
        %4655 = vmatpush1.bf16.msra.mxu0 0
        %4656 = vmatprep.mubr.bf16.mxu0 0
        %4657 = vmatmul.mubr.bf16.gmra.mrb[0].mxu0 %v4572
        %v4658 = vpop.f32.mrb[0].mxu0
        %v4659 = vadd.f32 0.0, %v4658
        %v4660 = vpop.f32.mrb[0].mxu0
        %v4661 = vpop.f32.mrb[0].mxu0
        %v4662 = vadd.f32 0.0, %v4661
        %v4663 = vpop.f32.mrb[0].mxu0
        %4664 = vmatprep.mubr.bf16.mxu0 0
        %4665 = vmatmul.mubr.bf16.gmra.mrb[0].mxu0 %v4573
        %v4666 = vpop.f32.mrb[0].mxu0
        %v4667 = vadd.f32 0.0, %v4666
        %v4668 = vpop.f32.mrb[0].mxu0
        %v4669 = vpop.f32.mrb[0].mxu0
        %v4670 = vadd.f32 0.0, %v4669
        %v4671 = vpop.f32.mrb[0].mxu0
        %4672 = vmatprep.mubr.bf16.mxu0 0
        %4673 = vmatmul.mubr.bf16.gmra.mrb[0].mxu0 %v4574
        %v4674 = vpop.f32.mrb[0].mxu0
        %v4675 = vadd.f32 0.0, %v4674
        %v4676 = vpop.f32.mrb[0].mxu0
        %v4677 = vpop.f32.mrb[0].mxu0
        %v4678 = vadd.f32 0.0, %v4677
        %v4679 = vpop.f32.mrb[0].mxu0
        %4680 = vmatprep.mubr.bf16.mxu0 0
        %4681 = vmatmul.mubr.bf16.gmra.mrb[0].mxu0 %v4575
        %v4682 = vpop.f32.mrb[0].mxu0
        %v4683 = vadd.f32 0.0, %v4682
        %v4684 = vpop.f32.mrb[0].mxu0
        %v4685 = vpop.f32.mrb[0].mxu0
        %v4686 = vadd.f32 0.0, %v4685
        %v4687 = vpop.f32.mrb[0].mxu0
        %4688 = vdwg.mxu0
        %v4689 = vadd.f32 %v4518, %v4659
        %v4690 = vadd.f32 %v4521, %v4662
        %v4691 = vadd.f32 %v4526, %v4667
        %v4692 = vadd.f32 %v4529, %v4670
        %v4693 = vadd.f32 %v4534, %v4675
        %v4694 = vadd.f32 %v4537, %v4678
        %v4695 = vadd.f32 %v4542, %v4683
        %v4696 = vadd.f32 %v4545, %v4686
        %v4697 = vld [vmem:[%s2710] sm:$0xff]
        %v4698 = vld [vmem:[%s2710 + $0x10] sm:$0xff]
        %v4699 = vld [vmem:[%s2710 + $0x20] sm:$0xff]
        %v4700 = vld [vmem:[%s2710 + $0x30] sm:$0xff]
        %v4701 = vld [vmem:[%s2710 + $0x40] sm:$0xff]
        %v4702 = vld [vmem:[%s2710 + $0x50] sm:$0xff]
        %v4703 = vld [vmem:[%s2710 + $0x60] sm:$0xff]
        %v4704 = vld [vmem:[%s2710 + $0x70] sm:$0xff]
        %v4705 = vld [vmem:[%s4273 + $0xc0] sm:$0xf]
        %v4706 = vld [vmem:[%s4273 + $0xc4] sm:$0xf]
        %v4707 = vld [vmem:[%s4273 + $0xc8] sm:$0xf]
        %v4708 = vld [vmem:[%s4273 + $0xcc] sm:$0xf]
        %v4709 = vld [vmem:[%s4273 + $0xd0] sm:$0xf]
        %v4710 = vld [vmem:[%s4273 + $0xd4] sm:$0xf]
        %v4711 = vld [vmem:[%s4273 + $0xd8] sm:$0xf]
        %v4712 = vld [vmem:[%s4273 + $0xdc] sm:$0xf]
        %v4713 = vld [vmem:[%s4273 + $0xe0] sm:$0xf]
        %v4714 = vld [vmem:[%s4273 + $0xe4] sm:$0xf]
        %v4715 = vld [vmem:[%s4273 + $0xe8] sm:$0xf]
        %v4716 = vld [vmem:[%s4273 + $0xec] sm:$0xf]
        %v4717 = vld [vmem:[%s4273 + $0xf0] sm:$0xf]
        %v4718 = vld [vmem:[%s4273 + $0xf4] sm:$0xf]
        %v4719 = vld [vmem:[%s4273 + $0xf8] sm:$0xf]
        %v4720 = vld [vmem:[%s4273 + $0xfc] sm:$0xf]
        %v4721 = vpack.c.bf16 %v4698, %v4697
        %v4722 = vpack.c.bf16 %v4700, %v4699
        %v4723 = vpack.c.bf16 %v4702, %v4701
        %v4724 = vpack.c.bf16 %v4704, %v4703
        %v4741 = vunpack.c.l.b16 %v4705
        %v4742 = vunpack.c.l.b16 %v4706
        %v4743 = vunpack.c.l.b16 %v4707
        %v4744 = vunpack.c.l.b16 %v4708
        %v4745 = vunpack.c.l.b16 %v4709
        %v4746 = vunpack.c.l.b16 %v4710
        %v4747 = vunpack.c.l.b16 %v4711
        %v4748 = vunpack.c.l.b16 %v4712
        %v4749 = vunpack.c.l.b16 %v4713
        %v4750 = vunpack.c.l.b16 %v4714
        %v4751 = vunpack.c.l.b16 %v4715
        %v4752 = vunpack.c.l.b16 %v4716
        %v4753 = vunpack.c.l.b16 %v4717
        %v4754 = vunpack.c.l.b16 %v4718
        %v4755 = vunpack.c.l.b16 %v4719
        %v4756 = vunpack.c.l.b16 %v4720
        %v4757 = vpack.c.b16 %v4742, %v4741
        %v4758 = vpack.c.b16 %v4744, %v4743
        %v4759 = vpack.c.b16 %v4746, %v4745
        %v4760 = vpack.c.b16 %v4748, %v4747
        %v4761 = vpack.c.b16 %v4750, %v4749
        %v4762 = vpack.c.b16 %v4752, %v4751
        %v4763 = vpack.c.b16 %v4754, %v4753
        %v4764 = vpack.c.b16 %v4756, %v4755
        %4773 = vmatprep.subr.bf16.mxu0 0
        %4774 = vmatpush1.bf16.msra.mxu0 %v4757
        %4775 = vmatprep.subr.bf16.mxu0 0
        %4776 = vmatpush1.bf16.msra.mxu0 %v4758
        %4777 = vmatprep.subr.bf16.mxu0 0
        %4778 = vmatpush1.bf16.msra.mxu0 %v4759
        %4779 = vmatprep.subr.bf16.mxu0 0
        %4780 = vmatpush1.bf16.msra.mxu0 %v4760
        %4781 = vmatprep.subr.bf16.mxu0 0
        %4782 = vmatpush1.bf16.msra.mxu0 %v4761
        %4783 = vmatprep.subr.bf16.mxu0 0
        %4784 = vmatpush1.bf16.msra.mxu0 %v4762
        %4785 = vmatprep.subr.bf16.mxu0 0
        %4786 = vmatpush1.bf16.msra.mxu0 %v4763
        %4787 = vmatprep.subr.bf16.mxu0 0
        %4788 = vmatpush1.bf16.msra.mxu0 %v4764
        %4789 = vmatprep.subr.bf16.mxu0 0
        %4790 = vmatpush1.bf16.msra.mxu0 0
        %4791 = vmatprep.subr.bf16.mxu0 0
        %4792 = vmatpush1.bf16.msra.mxu0 0
        %4793 = vmatprep.subr.bf16.mxu0 0
        %4794 = vmatpush1.bf16.msra.mxu0 0
        %4795 = vmatprep.subr.bf16.mxu0 0
        %4796 = vmatpush1.bf16.msra.mxu0 0
        %4797 = vmatprep.subr.bf16.mxu0 0
        %4798 = vmatpush1.bf16.msra.mxu0 0
        %4799 = vmatprep.subr.bf16.mxu0 0
        %4800 = vmatpush1.bf16.msra.mxu0 0
        %4801 = vmatprep.subr.bf16.mxu0 0
        %4802 = vmatpush1.bf16.msra.mxu0 0
        %4803 = vmatprep.subr.bf16.mxu0 0
        %4804 = vmatpush1.bf16.msra.mxu0 0
        %4805 = vmatprep.mubr.bf16.mxu0 0
        %4806 = vmatmul.mubr.bf16.gmra.mrb[0].mxu0 %v4721
        %v4807 = vpop.f32.mrb[0].mxu0
        %v4808 = vadd.f32 0.0, %v4807
        %v4809 = vpop.f32.mrb[0].mxu0
        %v4810 = vpop.f32.mrb[0].mxu0
        %v4811 = vadd.f32 0.0, %v4810
        %v4812 = vpop.f32.mrb[0].mxu0
        %4813 = vmatprep.mubr.bf16.mxu0 0
        %4814 = vmatmul.mubr.bf16.gmra.mrb[0].mxu0 %v4722
        %v4815 = vpop.f32.mrb[0].mxu0
        %v4816 = vadd.f32 0.0, %v4815
        %v4817 = vpop.f32.mrb[0].mxu0
        %v4818 = vpop.f32.mrb[0].mxu0
        %v4819 = vadd.f32 0.0, %v4818
        %v4820 = vpop.f32.mrb[0].mxu0
        %4821 = vmatprep.mubr.bf16.mxu0 0
        %4822 = vmatmul.mubr.bf16.gmra.mrb[0].mxu0 %v4723
        %v4823 = vpop.f32.mrb[0].mxu0
        %v4824 = vadd.f32 0.0, %v4823
        %v4825 = vpop.f32.mrb[0].mxu0
        %v4826 = vpop.f32.mrb[0].mxu0
        %v4827 = vadd.f32 0.0, %v4826
        %v4828 = vpop.f32.mrb[0].mxu0
        %4829 = vmatprep.mubr.bf16.mxu0 0
        %4830 = vmatmul.mubr.bf16.gmra.mrb[0].mxu0 %v4724
        %v4831 = vpop.f32.mrb[0].mxu0
        %v4832 = vadd.f32 0.0, %v4831
        %v4833 = vpop.f32.mrb[0].mxu0
        %v4834 = vpop.f32.mrb[0].mxu0
        %v4835 = vadd.f32 0.0, %v4834
        %v4836 = vpop.f32.mrb[0].mxu0
        %4837 = vdwg.mxu0
        %v4838 = vadd.f32 %v4689, %v4808
        %v4839 = vadd.f32 %v4690, %v4811
        %v4840 = vadd.f32 %v4691, %v4816
        %v4841 = vadd.f32 %v4692, %v4819
        %v4842 = vadd.f32 %v4693, %v4824
        %v4843 = vadd.f32 %v4694, %v4827
        %v4844 = vadd.f32 %v4695, %v4832
        %v4845 = vadd.f32 %v4696, %v4835
        %v4846 = vld [vmem:[%s2710 + $0x1] sm:$0xff]
        %v4847 = vld [vmem:[%s2710 + $0x11] sm:$0xff]
        %v4848 = vld [vmem:[%s2710 + $0x21] sm:$0xff]
        %v4849 = vld [vmem:[%s2710 + $0x31] sm:$0xff]
        %v4850 = vld [vmem:[%s2710 + $0x41] sm:$0xff]
        %v4851 = vld [vmem:[%s2710 + $0x51] sm:$0xff]
        %v4852 = vld [vmem:[%s2710 + $0x61] sm:$0xff]
        %v4853 = vld [vmem:[%s2710 + $0x71] sm:$0xff]
        %v4854 = vld [vmem:[%s4273 + $0x100] sm:$0xf]
        %v4855 = vld [vmem:[%s4273 + $0x104] sm:$0xf]
        %v4856 = vld [vmem:[%s4273 + $0x108] sm:$0xf]
        %v4857 = vld [vmem:[%s4273 + $0x10c] sm:$0xf]
        %v4858 = vld [vmem:[%s4273 + $0x110] sm:$0xf]
        %v4859 = vld [vmem:[%s4273 + $0x114] sm:$0xf]
        %v4860 = vld [vmem:[%s4273 + $0x118] sm:$0xf]
        %v4861 = vld [vmem:[%s4273 + $0x11c] sm:$0xf]
        %v4862 = vld [vmem:[%s4273 + $0x120] sm:$0xf]
        %v4863 = vld [vmem:[%s4273 + $0x124] sm:$0xf]
        %v4864 = vld [vmem:[%s4273 + $0x128] sm:$0xf]
        %v4865 = vld [vmem:[%s4273 + $0x12c] sm:$0xf]
        %v4866 = vld [vmem:[%s4273 + $0x130] sm:$0xf]
        %v4867 = vld [vmem:[%s4273 + $0x134] sm:$0xf]
        %v4868 = vld [vmem:[%s4273 + $0x138] sm:$0xf]
        %v4869 = vld [vmem:[%s4273 + $0x13c] sm:$0xf]
        %v4870 = vpack.c.bf16 %v4847, %v4846
        %v4871 = vpack.c.bf16 %v4849, %v4848
        %v4872 = vpack.c.bf16 %v4851, %v4850
        %v4873 = vpack.c.bf16 %v4853, %v4852
        %v4890 = vunpack.c.l.b16 %v4854
        %v4891 = vunpack.c.l.b16 %v4855
        %v4892 = vunpack.c.l.b16 %v4856
        %v4893 = vunpack.c.l.b16 %v4857
        %v4894 = vunpack.c.l.b16 %v4858
        %v4895 = vunpack.c.l.b16 %v4859
        %v4896 = vunpack.c.l.b16 %v4860
        %v4897 = vunpack.c.l.b16 %v4861
        %v4898 = vunpack.c.l.b16 %v4862
        %v4899 = vunpack.c.l.b16 %v4863
        %v4900 = vunpack.c.l.b16 %v4864
        %v4901 = vunpack.c.l.b16 %v4865
        %v4902 = vunpack.c.l.b16 %v4866
        %v4903 = vunpack.c.l.b16 %v4867
        %v4904 = vunpack.c.l.b16 %v4868
        %v4905 = vunpack.c.l.b16 %v4869
        %v4906 = vpack.c.b16 %v4891, %v4890
        %v4907 = vpack.c.b16 %v4893, %v4892
        %v4908 = vpack.c.b16 %v4895, %v4894
        %v4909 = vpack.c.b16 %v4897, %v4896
        %v4910 = vpack.c.b16 %v4899, %v4898
        %v4911 = vpack.c.b16 %v4901, %v4900
        %v4912 = vpack.c.b16 %v4903, %v4902
        %v4913 = vpack.c.b16 %v4905, %v4904
        %4922 = vmatprep.subr.bf16.mxu0 0
        %4923 = vmatpush1.bf16.msra.mxu0 %v4906
        %4924 = vmatprep.subr.bf16.mxu0 0
        %4925 = vmatpush1.bf16.msra.mxu0 %v4907
        %4926 = vmatprep.subr.bf16.mxu0 0
        %4927 = vmatpush1.bf16.msra.mxu0 %v4908
        %4928 = vmatprep.subr.bf16.mxu0 0
        %4929 = vmatpush1.bf16.msra.mxu0 %v4909
        %4930 = vmatprep.subr.bf16.mxu0 0
        %4931 = vmatpush1.bf16.msra.mxu0 %v4910
        %4932 = vmatprep.subr.bf16.mxu0 0
        %4933 = vmatpush1.bf16.msra.mxu0 %v4911
        %4934 = vmatprep.subr.bf16.mxu0 0
        %4935 = vmatpush1.bf16.msra.mxu0 %v4912
        %4936 = vmatprep.subr.bf16.mxu0 0
        %4937 = vmatpush1.bf16.msra.mxu0 %v4913
        %4938 = vmatprep.subr.bf16.mxu0 0
        %4939 = vmatpush1.bf16.msra.mxu0 0
        %4940 = vmatprep.subr.bf16.mxu0 0
        %4941 = vmatpush1.bf16.msra.mxu0 0
        %4942 = vmatprep.subr.bf16.mxu0 0
        %4943 = vmatpush1.bf16.msra.mxu0 0
        %4944 = vmatprep.subr.bf16.mxu0 0
        %4945 = vmatpush1.bf16.msra.mxu0 0
        %4946 = vmatprep.subr.bf16.mxu0 0
        %4947 = vmatpush1.bf16.msra.mxu0 0
        %4948 = vmatprep.subr.bf16.mxu0 0
        %4949 = vmatpush1.bf16.msra.mxu0 0
        %4950 = vmatprep.subr.bf16.mxu0 0
        %4951 = vmatpush1.bf16.msra.mxu0 0
        %4952 = vmatprep.subr.bf16.mxu0 0
        %4953 = vmatpush1.bf16.msra.mxu0 0
        %4954 = vmatprep.mubr.bf16.mxu0 0
        %4955 = vmatmul.mubr.bf16.gmra.mrb[0].mxu0 %v4870
        %v4956 = vpop.f32.mrb[0].mxu0
        %v4957 = vadd.f32 0.0, %v4956
        %v4958 = vpop.f32.mrb[0].mxu0
        %v4959 = vpop.f32.mrb[0].mxu0
        %v4960 = vadd.f32 0.0, %v4959
        %v4961 = vpop.f32.mrb[0].mxu0
        %4962 = vmatprep.mubr.bf16.mxu0 0
        %4963 = vmatmul.mubr.bf16.gmra.mrb[0].mxu0 %v4871
        %v4964 = vpop.f32.mrb[0].mxu0
        %v4965 = vadd.f32 0.0, %v4964
        %v4966 = vpop.f32.mrb[0].mxu0
        %v4967 = vpop.f32.mrb[0].mxu0
        %v4968 = vadd.f32 0.0, %v4967
        %v4969 = vpop.f32.mrb[0].mxu0
        %4970 = vmatprep.mubr.bf16.mxu0 0
        %4971 = vmatmul.mubr.bf16.gmra.mrb[0].mxu0 %v4872
        %v4972 = vpop.f32.mrb[0].mxu0
        %v4973 = vadd.f32 0.0, %v4972
        %v4974 = vpop.f32.mrb[0].mxu0
        %v4975 = vpop.f32.mrb[0].mxu0
        %v4976 = vadd.f32 0.0, %v4975
        %v4977 = vpop.f32.mrb[0].mxu0
        %4978 = vmatprep.mubr.bf16.mxu0 0
        %4979 = vmatmul.mubr.bf16.gmra.mrb[0].mxu0 %v4873
        %v4980 = vpop.f32.mrb[0].mxu0
        %v4981 = vadd.f32 0.0, %v4980
        %v4982 = vpop.f32.mrb[0].mxu0
        %v4983 = vpop.f32.mrb[0].mxu0
        %v4984 = vadd.f32 0.0, %v4983
        %v4985 = vpop.f32.mrb[0].mxu0
        %4986 = vdwg.mxu0
        %v4987 = vadd.f32 %v4838, %v4957
        %v4988 = vadd.f32 %v4839, %v4960
        %v4989 = vadd.f32 %v4840, %v4965
        %v4990 = vadd.f32 %v4841, %v4968
        %v4991 = vadd.f32 %v4842, %v4973
        %v4992 = vadd.f32 %v4843, %v4976
        %v4993 = vadd.f32 %v4844, %v4981
        %v4994 = vadd.f32 %v4845, %v4984
        %v4995 = vld [vmem:[%s2710 + $0x2] sm:$0xff]
        %v4996 = vld [vmem:[%s2710 + $0x12] sm:$0xff]
        %v4997 = vld [vmem:[%s2710 + $0x22] sm:$0xff]
        %v4998 = vld [vmem:[%s2710 + $0x32] sm:$0xff]
        %v4999 = vld [vmem:[%s2710 + $0x42] sm:$0xff]
        %v5000 = vld [vmem:[%s2710 + $0x52] sm:$0xff]
        %v5001 = vld [vmem:[%s2710 + $0x62] sm:$0xff]
        %v5002 = vld [vmem:[%s2710 + $0x72] sm:$0xff]
        %v5003 = vld [vmem:[%s4273 + $0x140] sm:$0xf]
        %v5004 = vld [vmem:[%s4273 + $0x144] sm:$0xf]
        %v5005 = vld [vmem:[%s4273 + $0x148] sm:$0xf]
        %v5006 = vld [vmem:[%s4273 + $0x14c] sm:$0xf]
        %v5007 = vld [vmem:[%s4273 + $0x150] sm:$0xf]
        %v5008 = vld [vmem:[%s4273 + $0x154] sm:$0xf]
        %v5009 = vld [vmem:[%s4273 + $0x158] sm:$0xf]
        %v5010 = vld [vmem:[%s4273 + $0x15c] sm:$0xf]
        %v5011 = vld [vmem:[%s4273 + $0x160] sm:$0xf]
        %v5012 = vld [vmem:[%s4273 + $0x164] sm:$0xf]
        %v5013 = vld [vmem:[%s4273 + $0x168] sm:$0xf]
        %v5014 = vld [vmem:[%s4273 + $0x16c] sm:$0xf]
        %v5015 = vld [vmem:[%s4273 + $0x170] sm:$0xf]
        %v5016 = vld [vmem:[%s4273 + $0x174] sm:$0xf]
        %v5017 = vld [vmem:[%s4273 + $0x178] sm:$0xf]
        %v5018 = vld [vmem:[%s4273 + $0x17c] sm:$0xf]
        %v5019 = vpack.c.bf16 %v4996, %v4995
        %v5020 = vpack.c.bf16 %v4998, %v4997
        %v5021 = vpack.c.bf16 %v5000, %v4999
        %v5022 = vpack.c.bf16 %v5002, %v5001
        %v5039 = vunpack.c.l.b16 %v5003
        %v5040 = vunpack.c.l.b16 %v5004
        %v5041 = vunpack.c.l.b16 %v5005
        %v5042 = vunpack.c.l.b16 %v5006
        %v5043 = vunpack.c.l.b16 %v5007
        %v5044 = vunpack.c.l.b16 %v5008
        %v5045 = vunpack.c.l.b16 %v5009
        %v5046 = vunpack.c.l.b16 %v5010
        %v5047 = vunpack.c.l.b16 %v5011
        %v5048 = vunpack.c.l.b16 %v5012
        %v5049 = vunpack.c.l.b16 %v5013
        %v5050 = vunpack.c.l.b16 %v5014
        %v5051 = vunpack.c.l.b16 %v5015
        %v5052 = vunpack.c.l.b16 %v5016
        %v5053 = vunpack.c.l.b16 %v5017
        %v5054 = vunpack.c.l.b16 %v5018
        %v5055 = vpack.c.b16 %v5040, %v5039
        %v5056 = vpack.c.b16 %v5042, %v5041
        %v5057 = vpack.c.b16 %v5044, %v5043
        %v5058 = vpack.c.b16 %v5046, %v5045
        %v5059 = vpack.c.b16 %v5048, %v5047
        %v5060 = vpack.c.b16 %v5050, %v5049
        %v5061 = vpack.c.b16 %v5052, %v5051
        %v5062 = vpack.c.b16 %v5054, %v5053
        %5071 = vmatprep.subr.bf16.mxu0 0
        %5072 = vmatpush1.bf16.msra.mxu0 %v5055
        %5073 = vmatprep.subr.bf16.mxu0 0
        %5074 = vmatpush1.bf16.msra.mxu0 %v5056
        %5075 = vmatprep.subr.bf16.mxu0 0
        %5076 = vmatpush1.bf16.msra.mxu0 %v5057
        %5077 = vmatprep.subr.bf16.mxu0 0
        %5078 = vmatpush1.bf16.msra.mxu0 %v5058
        %5079 = vmatprep.subr.bf16.mxu0 0
        %5080 = vmatpush1.bf16.msra.mxu0 %v5059
        %5081 = vmatprep.subr.bf16.mxu0 0
        %5082 = vmatpush1.bf16.msra.mxu0 %v5060
        %5083 = vmatprep.subr.bf16.mxu0 0
        %5084 = vmatpush1.bf16.msra.mxu0 %v5061
        %5085 = vmatprep.subr.bf16.mxu0 0
        %5086 = vmatpush1.bf16.msra.mxu0 %v5062
        %5087 = vmatprep.subr.bf16.mxu0 0
        %5088 = vmatpush1.bf16.msra.mxu0 0
        %5089 = vmatprep.subr.bf16.mxu0 0
        %5090 = vmatpush1.bf16.msra.mxu0 0
        %5091 = vmatprep.subr.bf16.mxu0 0
        %5092 = vmatpush1.bf16.msra.mxu0 0
        %5093 = vmatprep.subr.bf16.mxu0 0
        %5094 = vmatpush1.bf16.msra.mxu0 0
        %5095 = vmatprep.subr.bf16.mxu0 0
        %5096 = vmatpush1.bf16.msra.mxu0 0
        %5097 = vmatprep.subr.bf16.mxu0 0
        %5098 = vmatpush1.bf16.msra.mxu0 0
        %5099 = vmatprep.subr.bf16.mxu0 0
        %5100 = vmatpush1.bf16.msra.mxu0 0
        %5101 = vmatprep.subr.bf16.mxu0 0
        %5102 = vmatpush1.bf16.msra.mxu0 0
        %5103 = vmatprep.mubr.bf16.mxu0 0
        %5104 = vmatmul.mubr.bf16.gmra.mrb[0].mxu0 %v5019
        %v5105 = vpop.f32.mrb[0].mxu0
        %v5106 = vadd.f32 0.0, %v5105
        %v5107 = vpop.f32.mrb[0].mxu0
        %v5108 = vpop.f32.mrb[0].mxu0
        %v5109 = vadd.f32 0.0, %v5108
        %v5110 = vpop.f32.mrb[0].mxu0
        %5111 = vmatprep.mubr.bf16.mxu0 0
        %5112 = vmatmul.mubr.bf16.gmra.mrb[0].mxu0 %v5020
        %v5113 = vpop.f32.mrb[0].mxu0
        %v5114 = vadd.f32 0.0, %v5113
        %v5115 = vpop.f32.mrb[0].mxu0
        %v5116 = vpop.f32.mrb[0].mxu0
        %v5117 = vadd.f32 0.0, %v5116
        %v5118 = vpop.f32.mrb[0].mxu0
        %5119 = vmatprep.mubr.bf16.mxu0 0
        %5120 = vmatmul.mubr.bf16.gmra.mrb[0].mxu0 %v5021
        %v5121 = vpop.f32.mrb[0].mxu0
        %v5122 = vadd.f32 0.0, %v5121
        %v5123 = vpop.f32.mrb[0].mxu0
        %v5124 = vpop.f32.mrb[0].mxu0
        %v5125 = vadd.f32 0.0, %v5124
        %v5126 = vpop.f32.mrb[0].mxu0
        %5127 = vmatprep.mubr.bf16.mxu0 0
        %5128 = vmatmul.mubr.bf16.gmra.mrb[0].mxu0 %v5022
        %v5129 = vpop.f32.mrb[0].mxu0
        %v5130 = vadd.f32 0.0, %v5129
        %v5131 = vpop.f32.mrb[0].mxu0
        %v5132 = vpop.f32.mrb[0].mxu0
        %v5133 = vadd.f32 0.0, %v5132
        %v5134 = vpop.f32.mrb[0].mxu0
        %5135 = vdwg.mxu0
        %v5136 = vadd.f32 %v4987, %v5106
        %v5137 = vadd.f32 %v4988, %v5109
        %v5138 = vadd.f32 %v4989, %v5114
        %v5139 = vadd.f32 %v4990, %v5117
        %v5140 = vadd.f32 %v4991, %v5122
        %v5141 = vadd.f32 %v4992, %v5125
        %v5142 = vadd.f32 %v4993, %v5130
        %v5143 = vadd.f32 %v4994, %v5133
        %v5144 = vld [vmem:[%s3597] sm:$0xff]
        %v5145 = vld [vmem:[%s3597 + $0x10] sm:$0xff]
        %v5146 = vld [vmem:[%s3597 + $0x20] sm:$0xff]
        %v5147 = vld [vmem:[%s3597 + $0x30] sm:$0xff]
        %v5148 = vld [vmem:[%s3597 + $0x40] sm:$0xff]
        %v5149 = vld [vmem:[%s3597 + $0x50] sm:$0xff]
        %v5150 = vld [vmem:[%s3597 + $0x60] sm:$0xff]
        %v5151 = vld [vmem:[%s3597 + $0x70] sm:$0xff]
        %v5152 = vld [vmem:[%s4273 + $0x180] sm:$0xf]
        %v5153 = vld [vmem:[%s4273 + $0x184] sm:$0xf]
        %v5154 = vld [vmem:[%s4273 + $0x188] sm:$0xf]
        %v5155 = vld [vmem:[%s4273 + $0x18c] sm:$0xf]
        %v5156 = vld [vmem:[%s4273 + $0x190] sm:$0xf]
        %v5157 = vld [vmem:[%s4273 + $0x194] sm:$0xf]
        %v5158 = vld [vmem:[%s4273 + $0x198] sm:$0xf]
        %v5159 = vld [vmem:[%s4273 + $0x19c] sm:$0xf]
        %v5160 = vld [vmem:[%s4273 + $0x1a0] sm:$0xf]
        %v5161 = vld [vmem:[%s4273 + $0x1a4] sm:$0xf]
        %v5162 = vld [vmem:[%s4273 + $0x1a8] sm:$0xf]
        %v5163 = vld [vmem:[%s4273 + $0x1ac] sm:$0xf]
        %v5164 = vld [vmem:[%s4273 + $0x1b0] sm:$0xf]
        %v5165 = vld [vmem:[%s4273 + $0x1b4] sm:$0xf]
        %v5166 = vld [vmem:[%s4273 + $0x1b8] sm:$0xf]
        %v5167 = vld [vmem:[%s4273 + $0x1bc] sm:$0xf]
        %v5168 = vpack.c.bf16 %v5145, %v5144
        %v5169 = vpack.c.bf16 %v5147, %v5146
        %v5170 = vpack.c.bf16 %v5149, %v5148
        %v5171 = vpack.c.bf16 %v5151, %v5150
        %v5188 = vunpack.c.l.b16 %v5152
        %v5189 = vunpack.c.l.b16 %v5153
        %v5190 = vunpack.c.l.b16 %v5154
        %v5191 = vunpack.c.l.b16 %v5155
        %v5192 = vunpack.c.l.b16 %v5156
        %v5193 = vunpack.c.l.b16 %v5157
        %v5194 = vunpack.c.l.b16 %v5158
        %v5195 = vunpack.c.l.b16 %v5159
        %v5196 = vunpack.c.l.b16 %v5160
        %v5197 = vunpack.c.l.b16 %v5161
        %v5198 = vunpack.c.l.b16 %v5162
        %v5199 = vunpack.c.l.b16 %v5163
        %v5200 = vunpack.c.l.b16 %v5164
        %v5201 = vunpack.c.l.b16 %v5165
        %v5202 = vunpack.c.l.b16 %v5166
        %v5203 = vunpack.c.l.b16 %v5167
        %v5204 = vpack.c.b16 %v5189, %v5188
        %v5205 = vpack.c.b16 %v5191, %v5190
        %v5206 = vpack.c.b16 %v5193, %v5192
        %v5207 = vpack.c.b16 %v5195, %v5194
        %v5208 = vpack.c.b16 %v5197, %v5196
        %v5209 = vpack.c.b16 %v5199, %v5198
        %v5210 = vpack.c.b16 %v5201, %v5200
        %v5211 = vpack.c.b16 %v5203, %v5202
        %5220 = vmatprep.subr.bf16.mxu0 0
        %5221 = vmatpush1.bf16.msra.mxu0 %v5204
        %5222 = vmatprep.subr.bf16.mxu0 0
        %5223 = vmatpush1.bf16.msra.mxu0 %v5205
        %5224 = vmatprep.subr.bf16.mxu0 0
        %5225 = vmatpush1.bf16.msra.mxu0 %v5206
        %5226 = vmatprep.subr.bf16.mxu0 0
        %5227 = vmatpush1.bf16.msra.mxu0 %v5207
        %5228 = vmatprep.subr.bf16.mxu0 0
        %5229 = vmatpush1.bf16.msra.mxu0 %v5208
        %5230 = vmatprep.subr.bf16.mxu0 0
        %5231 = vmatpush1.bf16.msra.mxu0 %v5209
        %5232 = vmatprep.subr.bf16.mxu0 0
        %5233 = vmatpush1.bf16.msra.mxu0 %v5210
        %5234 = vmatprep.subr.bf16.mxu0 0
        %5235 = vmatpush1.bf16.msra.mxu0 %v5211
        %5236 = vmatprep.subr.bf16.mxu0 0
        %5237 = vmatpush1.bf16.msra.mxu0 0
        %5238 = vmatprep.subr.bf16.mxu0 0
        %5239 = vmatpush1.bf16.msra.mxu0 0
        %5240 = vmatprep.subr.bf16.mxu0 0
        %5241 = vmatpush1.bf16.msra.mxu0 0
        %5242 = vmatprep.subr.bf16.mxu0 0
        %5243 = vmatpush1.bf16.msra.mxu0 0
        %5244 = vmatprep.subr.bf16.mxu0 0
        %5245 = vmatpush1.bf16.msra.mxu0 0
        %5246 = vmatprep.subr.bf16.mxu0 0
        %5247 = vmatpush1.bf16.msra.mxu0 0
        %5248 = vmatprep.subr.bf16.mxu0 0
        %5249 = vmatpush1.bf16.msra.mxu0 0
        %5250 = vmatprep.subr.bf16.mxu0 0
        %5251 = vmatpush1.bf16.msra.mxu0 0
        %5252 = vmatprep.mubr.bf16.mxu0 0
        %5253 = vmatmul.mubr.bf16.gmra.mrb[0].mxu0 %v5168
        %v5254 = vpop.f32.mrb[0].mxu0
        %v5255 = vadd.f32 0.0, %v5254
        %v5256 = vpop.f32.mrb[0].mxu0
        %v5257 = vpop.f32.mrb[0].mxu0
        %v5258 = vadd.f32 0.0, %v5257
        %v5259 = vpop.f32.mrb[0].mxu0
        %5260 = vmatprep.mubr.bf16.mxu0 0
        %5261 = vmatmul.mubr.bf16.gmra.mrb[0].mxu0 %v5169
        %v5262 = vpop.f32.mrb[0].mxu0
        %v5263 = vadd.f32 0.0, %v5262
        %v5264 = vpop.f32.mrb[0].mxu0
        %v5265 = vpop.f32.mrb[0].mxu0
        %v5266 = vadd.f32 0.0, %v5265
        %v5267 = vpop.f32.mrb[0].mxu0
        %5268 = vmatprep.mubr.bf16.mxu0 0
        %5269 = vmatmul.mubr.bf16.gmra.mrb[0].mxu0 %v5170
        %v5270 = vpop.f32.mrb[0].mxu0
        %v5271 = vadd.f32 0.0, %v5270
        %v5272 = vpop.f32.mrb[0].mxu0
        %v5273 = vpop.f32.mrb[0].mxu0
        %v5274 = vadd.f32 0.0, %v5273
        %v5275 = vpop.f32.mrb[0].mxu0
        %5276 = vmatprep.mubr.bf16.mxu0 0
        %5277 = vmatmul.mubr.bf16.gmra.mrb[0].mxu0 %v5171
        %v5278 = vpop.f32.mrb[0].mxu0
        %v5279 = vadd.f32 0.0, %v5278
        %v5280 = vpop.f32.mrb[0].mxu0
        %v5281 = vpop.f32.mrb[0].mxu0
        %v5282 = vadd.f32 0.0, %v5281
        %v5283 = vpop.f32.mrb[0].mxu0
        %5284 = vdwg.mxu0
        %v5285 = vadd.f32 %v5136, %v5255
        %v5286 = vadd.f32 %v5137, %v5258
        %v5287 = vadd.f32 %v5138, %v5263
        %v5288 = vadd.f32 %v5139, %v5266
        %v5289 = vadd.f32 %v5140, %v5271
        %v5290 = vadd.f32 %v5141, %v5274
        %v5291 = vadd.f32 %v5142, %v5279
        %v5292 = vadd.f32 %v5143, %v5282
        %v5293 = vld [vmem:[%s3597 + $0x1] sm:$0xff]
        %v5294 = vld [vmem:[%s3597 + $0x11] sm:$0xff]
        %v5295 = vld [vmem:[%s3597 + $0x21] sm:$0xff]
        %v5296 = vld [vmem:[%s3597 + $0x31] sm:$0xff]
        %v5297 = vld [vmem:[%s3597 + $0x41] sm:$0xff]
        %v5298 = vld [vmem:[%s3597 + $0x51] sm:$0xff]
        %v5299 = vld [vmem:[%s3597 + $0x61] sm:$0xff]
        %v5300 = vld [vmem:[%s3597 + $0x71] sm:$0xff]
        %v5301 = vld [vmem:[%s4273 + $0x1c0] sm:$0xf]
        %v5302 = vld [vmem:[%s4273 + $0x1c4] sm:$0xf]
        %v5303 = vld [vmem:[%s4273 + $0x1c8] sm:$0xf]
        %v5304 = vld [vmem:[%s4273 + $0x1cc] sm:$0xf]
        %v5305 = vld [vmem:[%s4273 + $0x1d0] sm:$0xf]
        %v5306 = vld [vmem:[%s4273 + $0x1d4] sm:$0xf]
        %v5307 = vld [vmem:[%s4273 + $0x1d8] sm:$0xf]
        %v5308 = vld [vmem:[%s4273 + $0x1dc] sm:$0xf]
        %v5309 = vld [vmem:[%s4273 + $0x1e0] sm:$0xf]
        %v5310 = vld [vmem:[%s4273 + $0x1e4] sm:$0xf]
        %v5311 = vld [vmem:[%s4273 + $0x1e8] sm:$0xf]
        %v5312 = vld [vmem:[%s4273 + $0x1ec] sm:$0xf]
        %v5313 = vld [vmem:[%s4273 + $0x1f0] sm:$0xf]
        %v5314 = vld [vmem:[%s4273 + $0x1f4] sm:$0xf]
        %v5315 = vld [vmem:[%s4273 + $0x1f8] sm:$0xf]
        %v5316 = vld [vmem:[%s4273 + $0x1fc] sm:$0xf]
        %v5317 = vpack.c.bf16 %v5294, %v5293
        %v5318 = vpack.c.bf16 %v5296, %v5295
        %v5319 = vpack.c.bf16 %v5298, %v5297
        %v5320 = vpack.c.bf16 %v5300, %v5299
        %v5337 = vunpack.c.l.b16 %v5301
        %v5338 = vunpack.c.l.b16 %v5302
        %v5339 = vunpack.c.l.b16 %v5303
        %v5340 = vunpack.c.l.b16 %v5304
        %v5341 = vunpack.c.l.b16 %v5305
        %v5342 = vunpack.c.l.b16 %v5306
        %v5343 = vunpack.c.l.b16 %v5307
        %v5344 = vunpack.c.l.b16 %v5308
        %v5345 = vunpack.c.l.b16 %v5309
        %v5346 = vunpack.c.l.b16 %v5310
        %v5347 = vunpack.c.l.b16 %v5311
        %v5348 = vunpack.c.l.b16 %v5312
        %v5349 = vunpack.c.l.b16 %v5313
        %v5350 = vunpack.c.l.b16 %v5314
        %v5351 = vunpack.c.l.b16 %v5315
        %v5352 = vunpack.c.l.b16 %v5316
        %v5353 = vpack.c.b16 %v5338, %v5337
        %v5354 = vpack.c.b16 %v5340, %v5339
        %v5355 = vpack.c.b16 %v5342, %v5341
        %v5356 = vpack.c.b16 %v5344, %v5343
        %v5357 = vpack.c.b16 %v5346, %v5345
        %v5358 = vpack.c.b16 %v5348, %v5347
        %v5359 = vpack.c.b16 %v5350, %v5349
        %v5360 = vpack.c.b16 %v5352, %v5351
        %5369 = vmatprep.subr.bf16.mxu0 0
        %5370 = vmatpush1.bf16.msra.mxu0 %v5353
        %5371 = vmatprep.subr.bf16.mxu0 0
        %5372 = vmatpush1.bf16.msra.mxu0 %v5354
        %5373 = vmatprep.subr.bf16.mxu0 0
        %5374 = vmatpush1.bf16.msra.mxu0 %v5355
        %5375 = vmatprep.subr.bf16.mxu0 0
        %5376 = vmatpush1.bf16.msra.mxu0 %v5356
        %5377 = vmatprep.subr.bf16.mxu0 0
        %5378 = vmatpush1.bf16.msra.mxu0 %v5357
        %5379 = vmatprep.subr.bf16.mxu0 0
        %5380 = vmatpush1.bf16.msra.mxu0 %v5358
        %5381 = vmatprep.subr.bf16.mxu0 0
        %5382 = vmatpush1.bf16.msra.mxu0 %v5359
        %5383 = vmatprep.subr.bf16.mxu0 0
        %5384 = vmatpush1.bf16.msra.mxu0 %v5360
        %5385 = vmatprep.subr.bf16.mxu0 0
        %5386 = vmatpush1.bf16.msra.mxu0 0
        %5387 = vmatprep.subr.bf16.mxu0 0
        %5388 = vmatpush1.bf16.msra.mxu0 0
        %5389 = vmatprep.subr.bf16.mxu0 0
        %5390 = vmatpush1.bf16.msra.mxu0 0
        %5391 = vmatprep.subr.bf16.mxu0 0
        %5392 = vmatpush1.bf16.msra.mxu0 0
        %5393 = vmatprep.subr.bf16.mxu0 0
        %5394 = vmatpush1.bf16.msra.mxu0 0
        %5395 = vmatprep.subr.bf16.mxu0 0
        %5396 = vmatpush1.bf16.msra.mxu0 0
        %5397 = vmatprep.subr.bf16.mxu0 0
        %5398 = vmatpush1.bf16.msra.mxu0 0
        %5399 = vmatprep.subr.bf16.mxu0 0
        %5400 = vmatpush1.bf16.msra.mxu0 0
        %5401 = vmatprep.mubr.bf16.mxu0 0
        %5402 = vmatmul.mubr.bf16.gmra.mrb[0].mxu0 %v5317
        %v5403 = vpop.f32.mrb[0].mxu0
        %v5404 = vadd.f32 0.0, %v5403
        %v5405 = vpop.f32.mrb[0].mxu0
        %v5406 = vpop.f32.mrb[0].mxu0
        %v5407 = vadd.f32 0.0, %v5406
        %v5408 = vpop.f32.mrb[0].mxu0
        %5409 = vmatprep.mubr.bf16.mxu0 0
        %5410 = vmatmul.mubr.bf16.gmra.mrb[0].mxu0 %v5318
        %v5411 = vpop.f32.mrb[0].mxu0
        %v5412 = vadd.f32 0.0, %v5411
        %v5413 = vpop.f32.mrb[0].mxu0
        %v5414 = vpop.f32.mrb[0].mxu0
        %v5415 = vadd.f32 0.0, %v5414
        %v5416 = vpop.f32.mrb[0].mxu0
        %5417 = vmatprep.mubr.bf16.mxu0 0
        %5418 = vmatmul.mubr.bf16.gmra.mrb[0].mxu0 %v5319
        %v5419 = vpop.f32.mrb[0].mxu0
        %v5420 = vadd.f32 0.0, %v5419
        %v5421 = vpop.f32.mrb[0].mxu0
        %v5422 = vpop.f32.mrb[0].mxu0
        %v5423 = vadd.f32 0.0, %v5422
        %v5424 = vpop.f32.mrb[0].mxu0
        %5425 = vmatprep.mubr.bf16.mxu0 0
        %5426 = vmatmul.mubr.bf16.gmra.mrb[0].mxu0 %v5320
        %v5427 = vpop.f32.mrb[0].mxu0
        %v5428 = vadd.f32 0.0, %v5427
        %v5429 = vpop.f32.mrb[0].mxu0
        %v5430 = vpop.f32.mrb[0].mxu0
        %v5431 = vadd.f32 0.0, %v5430
        %v5432 = vpop.f32.mrb[0].mxu0
        %5433 = vdwg.mxu0
        %v5434 = vadd.f32 %v5285, %v5404
        %v5435 = vadd.f32 %v5286, %v5407
        %v5436 = vadd.f32 %v5287, %v5412
        %v5437 = vadd.f32 %v5288, %v5415
        %v5438 = vadd.f32 %v5289, %v5420
        %v5439 = vadd.f32 %v5290, %v5423
        %v5440 = vadd.f32 %v5291, %v5428
        %v5441 = vadd.f32 %v5292, %v5431
        %v5442 = vld [vmem:[%s3597 + $0x2] sm:$0xff]
        %v5443 = vld [vmem:[%s3597 + $0x12] sm:$0xff]
        %v5444 = vld [vmem:[%s3597 + $0x22] sm:$0xff]
        %v5445 = vld [vmem:[%s3597 + $0x32] sm:$0xff]
        %v5446 = vld [vmem:[%s3597 + $0x42] sm:$0xff]
        %v5447 = vld [vmem:[%s3597 + $0x52] sm:$0xff]
        %v5448 = vld [vmem:[%s3597 + $0x62] sm:$0xff]
        %v5449 = vld [vmem:[%s3597 + $0x72] sm:$0xff]
        %v5450 = vld [vmem:[%s4273 + $0x200] sm:$0xf]
        %v5451 = vld [vmem:[%s4273 + $0x204] sm:$0xf]
        %v5452 = vld [vmem:[%s4273 + $0x208] sm:$0xf]
        %v5453 = vld [vmem:[%s4273 + $0x20c] sm:$0xf]
        %v5454 = vld [vmem:[%s4273 + $0x210] sm:$0xf]
        %v5455 = vld [vmem:[%s4273 + $0x214] sm:$0xf]
        %v5456 = vld [vmem:[%s4273 + $0x218] sm:$0xf]
        %v5457 = vld [vmem:[%s4273 + $0x21c] sm:$0xf]
        %v5458 = vld [vmem:[%s4273 + $0x220] sm:$0xf]
        %v5459 = vld [vmem:[%s4273 + $0x224] sm:$0xf]
        %v5460 = vld [vmem:[%s4273 + $0x228] sm:$0xf]
        %v5461 = vld [vmem:[%s4273 + $0x22c] sm:$0xf]
        %v5462 = vld [vmem:[%s4273 + $0x230] sm:$0xf]
        %v5463 = vld [vmem:[%s4273 + $0x234] sm:$0xf]
        %v5464 = vld [vmem:[%s4273 + $0x238] sm:$0xf]
        %v5465 = vld [vmem:[%s4273 + $0x23c] sm:$0xf]
        %v5466 = vpack.c.bf16 %v5443, %v5442
        %v5467 = vpack.c.bf16 %v5445, %v5444
        %v5468 = vpack.c.bf16 %v5447, %v5446
        %v5469 = vpack.c.bf16 %v5449, %v5448
        %v5486 = vunpack.c.l.b16 %v5450
        %v5487 = vunpack.c.l.b16 %v5451
        %v5488 = vunpack.c.l.b16 %v5452
        %v5489 = vunpack.c.l.b16 %v5453
        %v5490 = vunpack.c.l.b16 %v5454
        %v5491 = vunpack.c.l.b16 %v5455
        %v5492 = vunpack.c.l.b16 %v5456
        %v5493 = vunpack.c.l.b16 %v5457
        %v5494 = vunpack.c.l.b16 %v5458
        %v5495 = vunpack.c.l.b16 %v5459
        %v5496 = vunpack.c.l.b16 %v5460
        %v5497 = vunpack.c.l.b16 %v5461
        %v5498 = vunpack.c.l.b16 %v5462
        %v5499 = vunpack.c.l.b16 %v5463
        %v5500 = vunpack.c.l.b16 %v5464
        %v5501 = vunpack.c.l.b16 %v5465
        %v5502 = vpack.c.b16 %v5487, %v5486
        %v5503 = vpack.c.b16 %v5489, %v5488
        %v5504 = vpack.c.b16 %v5491, %v5490
        %v5505 = vpack.c.b16 %v5493, %v5492
        %v5506 = vpack.c.b16 %v5495, %v5494
        %v5507 = vpack.c.b16 %v5497, %v5496
        %v5508 = vpack.c.b16 %v5499, %v5498
        %v5509 = vpack.c.b16 %v5501, %v5500
        %5518 = vmatprep.subr.bf16.mxu0 0
        %5519 = vmatpush1.bf16.msra.mxu0 %v5502
        %5520 = vmatprep.subr.bf16.mxu0 0
        %5521 = vmatpush1.bf16.msra.mxu0 %v5503
        %5522 = vmatprep.subr.bf16.mxu0 0
        %5523 = vmatpush1.bf16.msra.mxu0 %v5504
        %5524 = vmatprep.subr.bf16.mxu0 0
        %5525 = vmatpush1.bf16.msra.mxu0 %v5505
        %5526 = vmatprep.subr.bf16.mxu0 0
        %5527 = vmatpush1.bf16.msra.mxu0 %v5506
        %5528 = vmatprep.subr.bf16.mxu0 0
        %5529 = vmatpush1.bf16.msra.mxu0 %v5507
        %5530 = vmatprep.subr.bf16.mxu0 0
        %5531 = vmatpush1.bf16.msra.mxu0 %v5508
        %5532 = vmatprep.subr.bf16.mxu0 0
        %5533 = vmatpush1.bf16.msra.mxu0 %v5509
        %5534 = vmatprep.subr.bf16.mxu0 0
        %5535 = vmatpush1.bf16.msra.mxu0 0
        %5536 = vmatprep.subr.bf16.mxu0 0
        %5537 = vmatpush1.bf16.msra.mxu0 0
        %5538 = vmatprep.subr.bf16.mxu0 0
        %5539 = vmatpush1.bf16.msra.mxu0 0
        %5540 = vmatprep.subr.bf16.mxu0 0
        %5541 = vmatpush1.bf16.msra.mxu0 0
        %5542 = vmatprep.subr.bf16.mxu0 0
        %5543 = vmatpush1.bf16.msra.mxu0 0
        %5544 = vmatprep.subr.bf16.mxu0 0
        %5545 = vmatpush1.bf16.msra.mxu0 0
        %5546 = vmatprep.subr.bf16.mxu0 0
        %5547 = vmatpush1.bf16.msra.mxu0 0
        %5548 = vmatprep.subr.bf16.mxu0 0
        %5549 = vmatpush1.bf16.msra.mxu0 0
        %5550 = vmatprep.mubr.bf16.mxu0 0
        %5551 = vmatmul.mubr.bf16.gmra.mrb[0].mxu0 %v5466
        %v5552 = vpop.f32.mrb[0].mxu0
        %v5553 = vadd.f32 0.0, %v5552
        %v5554 = vpop.f32.mrb[0].mxu0
        %v5555 = vpop.f32.mrb[0].mxu0
        %v5556 = vadd.f32 0.0, %v5555
        %v5557 = vpop.f32.mrb[0].mxu0
        %5558 = vmatprep.mubr.bf16.mxu0 0
        %5559 = vmatmul.mubr.bf16.gmra.mrb[0].mxu0 %v5467
        %v5560 = vpop.f32.mrb[0].mxu0
        %v5561 = vadd.f32 0.0, %v5560
        %v5562 = vpop.f32.mrb[0].mxu0
        %v5563 = vpop.f32.mrb[0].mxu0
        %v5564 = vadd.f32 0.0, %v5563
        %v5565 = vpop.f32.mrb[0].mxu0
        %5566 = vmatprep.mubr.bf16.mxu0 0
        %5567 = vmatmul.mubr.bf16.gmra.mrb[0].mxu0 %v5468
        %v5568 = vpop.f32.mrb[0].mxu0
        %v5569 = vadd.f32 0.0, %v5568
        %v5570 = vpop.f32.mrb[0].mxu0
        %v5571 = vpop.f32.mrb[0].mxu0
        %v5572 = vadd.f32 0.0, %v5571
        %v5573 = vpop.f32.mrb[0].mxu0
        %5574 = vmatprep.mubr.bf16.mxu0 0
        %5575 = vmatmul.mubr.bf16.gmra.mrb[0].mxu0 %v5469
        %v5576 = vpop.f32.mrb[0].mxu0
        %v5577 = vadd.f32 0.0, %v5576
        %v5578 = vpop.f32.mrb[0].mxu0
        %v5579 = vpop.f32.mrb[0].mxu0
        %v5580 = vadd.f32 0.0, %v5579
        %v5581 = vpop.f32.mrb[0].mxu0
        %5582 = vdwg.mxu0
        %v5583 = vadd.f32 %v5434, %v5553
        %v5584 = vadd.f32 %v5435, %v5556
        %v5585 = vadd.f32 %v5436, %v5561
        %v5586 = vadd.f32 %v5437, %v5564
        %v5587 = vadd.f32 %v5438, %v5569
        %v5588 = vadd.f32 %v5439, %v5572
        %v5589 = vadd.f32 %v5440, %v5577
        %v5590 = vadd.f32 %v5441, %v5580
        %v5591 = vld [vmem:[#allocation2] sm:$0xff]
        %v5592 = vld [vmem:[#allocation2 + $0x8] sm:$0xff]
        %v5593 = vld [vmem:[#allocation2 + $0x10] sm:$0xff]
        %v5594 = vld [vmem:[#allocation2 + $0x18] sm:$0xff]
        %v5595 = vld [vmem:[#allocation2 + $0x20] sm:$0xff]
        %v5596 = vld [vmem:[#allocation2 + $0x28] sm:$0xff]
        %v5597 = vld [vmem:[#allocation2 + $0x30] sm:$0xff]
        %v5598 = vld [vmem:[#allocation2 + $0x38] sm:$0xff]
        %v5599 = vadd.f32 %v5591, %v5583
        %v5600 = vadd.f32 %v5592, %v5584
        %v5601 = vadd.f32 %v5593, %v5585
        %v5602 = vadd.f32 %v5594, %v5586
        %v5603 = vadd.f32 %v5595, %v5587
        %v5604 = vadd.f32 %v5596, %v5588
        %v5605 = vadd.f32 %v5597, %v5589
        %v5606 = vadd.f32 %v5598, %v5590
        %5607 = vst [vmem:[#allocation2] sm:$0xff] %v5599
        %5608 = vst [vmem:[#allocation2 + $0x8] sm:$0xff] %v5600
        %5609 = vst [vmem:[#allocation2 + $0x10] sm:$0xff] %v5601
        %5610 = vst [vmem:[#allocation2 + $0x18] sm:$0xff] %v5602
        %5611 = vst [vmem:[#allocation2 + $0x20] sm:$0xff] %v5603
        %5612 = vst [vmem:[#allocation2 + $0x28] sm:$0xff] %v5604
        %5613 = vst [vmem:[#allocation2 + $0x30] sm:$0xff] %v5605
        %5614 = vst [vmem:[#allocation2 + $0x38] sm:$0xff] %v5606
        %v5615 = vld [vmem:[%s6] sm:$0x7]
        %v5616 = vld [vmem:[#allocation2] sm:$0xff]
        %v5617 = vld [vmem:[#allocation2 + $0x8] sm:$0xff]
        %v5618 = vld [vmem:[#allocation2 + $0x10] sm:$0xff]
        %v5619 = vld [vmem:[#allocation2 + $0x18] sm:$0xff]
        %v5620 = vld [vmem:[#allocation2 + $0x20] sm:$0xff]
        %v5621 = vld [vmem:[#allocation2 + $0x28] sm:$0xff]
        %v5622 = vld [vmem:[#allocation2 + $0x30] sm:$0xff]
        %v5623 = vld [vmem:[#allocation2 + $0x38] sm:$0xff]
        %v5624 = vlaneseq
        %v5625 = vshrl.u32 %v5624, 7
        %v5626 = vsub.s32 0, %v5625
        %v5627 = vrot.slane %v5615, %v5626
        %v5628 = vmul.f32 %v5616, %v5627
        %v5629 = vmul.f32 %v5617, %v5627
        %v5630 = vmul.f32 %v5618, %v5627
        %v5631 = vmul.f32 %v5619, %v5627
        %v5632 = vmul.f32 %v5620, %v5627
        %v5633 = vmul.f32 %v5621, %v5627
        %v5634 = vmul.f32 %v5622, %v5627
        %v5635 = vmul.f32 %v5623, %v5627
        %v5636 = vlaneseq
        %v5637 = vshrl.u32 %v5636, 7
        %v5638 = vsub.s32 1, %v5637
        %v5639 = vrot.slane %v5615, %v5638
        %v5640 = vadd.f32 %v5628, %v5639
        %v5641 = vadd.f32 %v5629, %v5639
        %v5642 = vadd.f32 %v5630, %v5639
        %v5643 = vadd.f32 %v5631, %v5639
        %v5644 = vadd.f32 %v5632, %v5639
        %v5645 = vadd.f32 %v5633, %v5639
        %v5646 = vadd.f32 %v5634, %v5639
        %v5647 = vadd.f32 %v5635, %v5639
        %v5648 = vmax.f32 %v5640, 0.0
        %v5649 = vmax.f32 %v5641, 0.0
        %v5650 = vmax.f32 %v5642, 0.0
        %v5651 = vmax.f32 %v5643, 0.0
        %v5652 = vmax.f32 %v5644, 0.0
        %v5653 = vmax.f32 %v5645, 0.0
        %v5654 = vmax.f32 %v5646, 0.0
        %v5655 = vmax.f32 %v5647, 0.0
        %v5656 = vadd.f32 %v5648, %v5649
        %v5657 = vadd.f32 %v5656, %v5650
        %v5658 = vadd.f32 %v5657, %v5651
        %v5659 = vadd.f32 %v5658, %v5652
        %v5660 = vadd.f32 %v5659, %v5653
        %v5661 = vadd.f32 %v5660, %v5654
        %v5662 = vadd.f32 %v5661, %v5655
        %v5663 = vrot.slane %v5662, 4
        %v5664 = vadd.f32 %v5662, %v5663
        %v5665 = vrot.slane %v5664, 2
        %v5666 = vadd.f32 %v5664, %v5665
        %v5667 = vrot.slane %v5666, 1
        %v5668 = vadd.f32 %v5666, %v5667
        %v5669 = vmul.f32 %v5668, 0.015625
        %v5670 = vpack.c.bf16 %v5669, %v5669
        %v5671 = vld [vmem:[%s7] sm:$0xf]
        %v5672 = vld [vmem:[%s7 + $0x4] sm:$0xf]
        %v5673 = vld [vmem:[%s7 + $0x8] sm:$0xf]
        %v5674 = vld [vmem:[%s7 + $0xc] sm:$0xf]
        %v5675 = vld [vmem:[%s7 + $0x10] sm:$0xf]
        %v5676 = vld [vmem:[%s7 + $0x14] sm:$0xf]
        %v5677 = vld [vmem:[%s7 + $0x18] sm:$0xf]
        %v5678 = vld [vmem:[%s7 + $0x1c] sm:$0xf]
        %v5679 = vld [vmem:[%s7 + $0x20] sm:$0xf]
        %v5680 = vld [vmem:[%s7 + $0x24] sm:$0xf]
        %v5681 = vld [vmem:[%s7 + $0x28] sm:$0xf]
        %v5682 = vld [vmem:[%s7 + $0x2c] sm:$0xf]
        %v5683 = vld [vmem:[%s7 + $0x30] sm:$0xf]
        %v5684 = vld [vmem:[%s7 + $0x34] sm:$0xf]
        %v5685 = vld [vmem:[%s7 + $0x38] sm:$0xf]
        %v5686 = vld [vmem:[%s7 + $0x3c] sm:$0xf]
        %v5703 = vunpack.c.l.b16 %v5671
        %v5704 = vunpack.c.l.b16 %v5672
        %v5705 = vunpack.c.l.b16 %v5673
        %v5706 = vunpack.c.l.b16 %v5674
        %v5707 = vunpack.c.l.b16 %v5675
        %v5708 = vunpack.c.l.b16 %v5676
        %v5709 = vunpack.c.l.b16 %v5677
        %v5710 = vunpack.c.l.b16 %v5678
        %v5711 = vunpack.c.l.b16 %v5679
        %v5712 = vunpack.c.l.b16 %v5680
        %v5713 = vunpack.c.l.b16 %v5681
        %v5714 = vunpack.c.l.b16 %v5682
        %v5715 = vunpack.c.l.b16 %v5683
        %v5716 = vunpack.c.l.b16 %v5684
        %v5717 = vunpack.c.l.b16 %v5685
        %v5718 = vunpack.c.l.b16 %v5686
        %v5719 = vpack.c.b16 %v5704, %v5703
        %v5720 = vpack.c.b16 %v5706, %v5705
        %v5721 = vpack.c.b16 %v5708, %v5707
        %v5722 = vpack.c.b16 %v5710, %v5709
        %v5723 = vpack.c.b16 %v5712, %v5711
        %v5724 = vpack.c.b16 %v5714, %v5713
        %v5725 = vpack.c.b16 %v5716, %v5715
        %v5726 = vpack.c.b16 %v5718, %v5717
        %v5736 = vrot.slane %v5615, 2
        %5738 = vmatprep.subr.bf16.mxu0 0
        %5739 = vmatpush1.bf16.msra.mxu0 %v5719
        %5740 = vmatprep.subr.bf16.mxu0 0
        %5741 = vmatpush1.bf16.msra.mxu0 %v5720
        %5742 = vmatprep.subr.bf16.mxu0 0
        %5743 = vmatpush1.bf16.msra.mxu0 %v5721
        %5744 = vmatprep.subr.bf16.mxu0 0
        %5745 = vmatpush1.bf16.msra.mxu0 %v5722
        %5746 = vmatprep.subr.bf16.mxu0 0
        %5747 = vmatpush1.bf16.msra.mxu0 %v5723
        %5748 = vmatprep.subr.bf16.mxu0 0
        %5749 = vmatpush1.bf16.msra.mxu0 %v5724
        %5750 = vmatprep.subr.bf16.mxu0 0
        %5751 = vmatpush1.bf16.msra.mxu0 %v5725
        %5752 = vmatprep.subr.bf16.mxu0 0
        %5753 = vmatpush1.bf16.msra.mxu0 %v5726
        %5754 = vmatprep.subr.bf16.mxu0 0
        %5755 = vmatpush1.bf16.msra.mxu0 0
        %5756 = vmatprep.subr.bf16.mxu0 0
        %5757 = vmatpush1.bf16.msra.mxu0 0
        %5758 = vmatprep.subr.bf16.mxu0 0
        %5759 = vmatpush1.bf16.msra.mxu0 0
        %5760 = vmatprep.subr.bf16.mxu0 0
        %5761 = vmatpush1.bf16.msra.mxu0 0
        %5762 = vmatprep.subr.bf16.mxu0 0
        %5763 = vmatpush1.bf16.msra.mxu0 0
        %5764 = vmatprep.subr.bf16.mxu0 0
        %5765 = vmatpush1.bf16.msra.mxu0 0
        %5766 = vmatprep.subr.bf16.mxu0 0
        %5767 = vmatpush1.bf16.msra.mxu0 0
        %5768 = vmatprep.subr.bf16.mxu0 0
        %5769 = vmatpush1.bf16.msra.mxu0 0
        %5770 = vmatprep.mubr.bf16.mxu0 0
        %5771 = vmatmul.mubr.bf16.gmra.mrb[0].mxu0 %v5670
        %v5772 = vpop.f32.mrb[0].mxu0
        %v5773 = vadd.f32 %v5736, %v5772
        %v5774 = vpop.f32.mrb[0].mxu0
        %v5775 = vpop.f32.mrb[0].mxu0
        %v5776 = vpop.f32.mrb[0].mxu0
        %5777 = vdwg.mxu0
        %5778 = vst [vmem:[%s297] sm:$0x1] %v5773
        %s5779 = sand.u32 %s203, 1
        %s5780 = scalar_lea.sflag [#allocation5], %s5779
        %s5781 = sand.u32 %s203, 1
        %s5782 = scalar_lea.vmem [#allocation4], %s5781
        // Predicated region
        $region53: #{custom_densenet_forward.1} parent=51 // pred_check
          %p5783 = pneg %p213
        $region54: #{custom_densenet_forward.1} parent=51 // pred_check_branch
          %5785 = sbr.rel (%p5783) target = $region56
        $region55: #{custom_densenet_forward.1} parent=51 // pred_region
          %s5787 = ssub.s32 16, 16
          %5788 = vsyncadd %s5780, %s5787
          %s5789 = smul.addr %s22, 16
          %s5790 = scalar_lea.hbm %s8, %s5789
          %s5792 = sshll.u32 %s5782, 4
          %s5793 = int_to_ptr.vmem [resolvable:$true] %s5792
          %5795 = dma.vmem_to_hbm [thread:$0]  %s5793, 16, %s5790, %s5780
        $region56: #{custom_densenet_forward.1} parent=51 // pred_fallthru
          _
      $region52: #{custom_densenet_forward.1} parent=5 // pred_fallthru
        _
      %p5796 = scmp.le.s32.totalorder 2, %s17
      // Predicated region
      $region57: #{custom_densenet_forward.1} parent=5 // pred_check
        %p5797 = pneg %p5796
      $region58: #{custom_densenet_forward.1} parent=5 // pred_check_branch
        %5799 = sbr.rel (%p5797) target = $region60
      $region59: #{custom_densenet_forward.1} parent=5 // pred_region
        %s5800 = ssub.s32 %s17, 2
        // Predicated region
        $region61: #{custom_densenet_forward.1} parent=59 // pred_check
          %p5801 = pneg %p219
        $region62: #{custom_densenet_forward.1} parent=59 // pred_check_branch
          %5803 = sbr.rel (%p5801) target = $region64
        $region63: #{custom_densenet_forward.1} parent=59 // pred_region
          %s5804 = sand.u32 %s204, 1
          %s5805 = scalar_lea.sflag [#allocation5], %s5804
          %s5806 = sand.u32 %s204, 1
          %s5807 = scalar_lea.vmem [#allocation4], %s5806
          %5808 = dma.done %s5805, 16
        $region64: #{custom_densenet_forward.1} parent=59 // pred_fallthru
          _
      $region60: #{custom_densenet_forward.1} parent=5 // pred_fallthru
        _
    $region6: #{custom_densenet_forward.1} parent=1 // loop_footer
      %s21 = sadd.s32 1, %s17
    $region7: #{custom_densenet_forward.1} parent=1 // loop_footer_branch
      %16 = sbr.rel target = $region3
    $region8: #{custom_densenet_forward.1} parent=1 // loop_exit
      _
    %5809 = vsyncpa [#allocation5], 1
    %s5810 = scalar_lea.sflag [#allocation5], 1
    %5811 = vsyncpa %s5810, 1

</llo_original>
